<compile_context>
chip_gen: v6e
topology: v6e:2x2x1
jax: 0.10.0
libtpu: 0.0.40
codegen_flags: <defaults>
</compile_context>

<pallas_src>
import jax
import jax.numpy as jnp
from jax.experimental import pallas as pl
from jax.experimental.pallas import tpu as pltpu


def decoder_kernel(x_ref, w1_ref, b1_ref, w2_ref, b2_ref, o_ref):
    # x_ref:  (B, L)        resident
    # w1_ref: (L, H)        resident (f32)
    # b1_ref: (1, H)        resident (f32)
    # w2_ref: (H, TN)       N-tile of fc2 weight (bf16 by default, or f32)
    # b2_ref: (1, TN)       N-tile of fc2 bias (f32)
    # o_ref:  (B, TN)       N-tile of output

    # fc1 + ReLU in f32.  Tiny; recomputing per grid step keeps the kernel
    # megacore-safe under "parallel"/core-parallel grid semantics.
    h = jnp.dot(x_ref[...], w1_ref[...], preferred_element_type=jnp.float32)
    h = jnp.maximum(h + b1_ref[...], 0.0)

    # fc2 on the current N-tile.  The weight tile is upcast to f32 on read
    # (no-op if already f32): HBM bytes stay halved with bf16 storage while
    # activations and accumulation remain full f32.  The upcast + f32 MXU
    # pass hide completely under the next tile's DMA (kernel is HBM-bound).
    w2 = w2_ref[...].astype(jnp.float32)
    o = jnp.dot(h, w2, preferred_element_type=jnp.float32)
    o_ref[...] = (o + b2_ref[...]).astype(o_ref.dtype)


def decoder_forward(x, w1, b1, w2, b2, *, tile_n=12288,
                    w2_buffers=None, core_parallel=False):
    """x: (B, latent). w1: (latent, hidden). w2: (hidden, output).

    Weights are stored transposed relative to nn.Linear ((in, out)).
    w2 should be stored bf16 (default path) to halve the binding HBM stream;
    accumulation and activations are always f32.
    Returns the module output reshaped to (-1, 16384, 3).
    """
    B, L = x.shape
    H = w1.shape[1]
    O = w2.shape[1]
    if O % tile_n != 0:
        raise ValueError(
            f"output_size={O} must be divisible by tile_n={tile_n}; "
            f"pick a tile_n that divides it (e.g. 12288 or 24576 for 49152).")
    num_steps = O // tile_n
    # NOTE: keep num_steps even (and >= 2) so a v7x dual-TC grid split stays
    # balanced; num_steps == 1 silently serializes onto one core.

    b1_2d = b1.reshape(1, H).astype(jnp.float32)
    b2_2d = b2.reshape(1, O).astype(jnp.float32)

    # Explicit scoped-VMEM budget derived from the actual tile sizes (w2 and
    # the output tile are double-/multi-buffered).  Keeps larger tile_n
    # sweeps safe on v5e's 16 MiB default without relying on headroom.
    n_buf = 2 if w2_buffers is None else max(2, int(w2_buffers))
    w2_tile_bytes = H * tile_n * jnp.dtype(w2.dtype).itemsize
    out_tile_bytes = B * tile_n * jnp.dtype(x.dtype).itemsize
    b2_tile_bytes = tile_n * 4
    resident_bytes = (B * L + L * H + H) * 4
    vmem_needed = (n_buf * w2_tile_bytes + 2 * (out_tile_bytes + b2_tile_bytes)
                   + resident_bytes)
    vmem_limit = min(max(int(1.5 * vmem_needed) + (2 << 20), 16 << 20), 48 << 20)

    # Advisory cost hint: ~1 flop/byte HBM stream dominated by w2 + the output.
    flops = 2 * B * L * H * num_steps + 2 * B * H * O
    bytes_accessed = (
        x.size * x.dtype.itemsize
        + w1.size * w1.dtype.itemsize + b1_2d.size * b1_2d.dtype.itemsize
        + w2.size * w2.dtype.itemsize + b2_2d.size * b2_2d.dtype.itemsize
        + B * O * x.dtype.itemsize)

    # Optional deeper buffering of the w2 stream (useful on v7x where the
    # per-core stream time is ~1-2 us and DMA-issue latency matters).
    w2_spec_kwargs = {}
    if w2_buffers is not None and w2_buffers != 2:
        w2_spec_kwargs["pipeline_mode"] = pl.Buffered(int(w2_buffers))

    dim_sems = ((pltpu.CORE_PARALLEL,) if core_parallel else ("parallel",))

    out = pl.pallas_call(
        decoder_kernel,
        out_shape=jax.ShapeDtypeStruct((B, O), x.dtype),
        grid_spec=pltpu.PrefetchScalarGridSpec(
            num_scalar_prefetch=0,
            grid=(num_steps,),                                   # 4 steps at default
            in_specs=[
                pl.BlockSpec((B, L), lambda n: (0, 0)),          # x (resident)
                pl.BlockSpec((L, H), lambda n: (0, 0)),          # w1 (resident)
                pl.BlockSpec((1, H), lambda n: (0, 0)),          # b1 (resident)
                pl.BlockSpec((H, tile_n), lambda n: (0, n),      # w2 tile (streamed)
                             **w2_spec_kwargs),
                pl.BlockSpec((1, tile_n), lambda n: (0, n)),     # b2 tile
            ],
            out_specs=pl.BlockSpec((B, tile_n), lambda n: (0, n)),  # lane-dense
        ),
        compiler_params=pltpu.CompilerParams(
            dimension_semantics=dim_sems,
            vmem_limit_bytes=vmem_limit,
        ),
        cost_estimate=pl.CostEstimate(
            flops=flops, transcendentals=0, bytes_accessed=bytes_accessed),
    )(x, w1, b1_2d, w2, b2_2d)

    # torch: x.view(-1, 16384, 3) — contiguous reshape, kept outside the kernel
    # so the kernel's output lane dimension stays wide (no narrow-lane stores).
    return out.reshape(-1, 16384, 3)


def _init_linear(key, fan_in, fan_out, dtype=jnp.float32):
    # Deterministic init mimicking nn.Linear's U(-1/sqrt(fan_in), 1/sqrt(fan_in)).
    kw, kb = jax.random.split(key)
    bound = 1.0 / jnp.sqrt(fan_in)
    w = jax.random.uniform(kw, (fan_in, fan_out), dtype, -bound, bound)  # stored transposed
    b = jax.random.uniform(kb, (fan_out,), dtype, -bound, bound)
    return w, b


if __name__ == "__main__":
    # Shapes implied by forward(): batch * output_size must equal N * 16384 * 3.
    # batch=2, latent=32, hidden=64, output_size=16384*3=49152.
    B, LATENT, HIDDEN, OUTPUT = 2, 32, 64, 16384 * 3

    key = jax.random.PRNGKey(0)
    kx, k1, k2 = jax.random.split(key, 3)
    x = jax.random.normal(kx, (B, LATENT), jnp.float32)
    w1, b1 = _init_linear(k1, LATENT, HIDDEN)
    w2, b2 = _init_linear(k2, HIDDEN, OUTPUT)

    # Pure-JAX references.
    h_ref = jnp.maximum(x @ w1 + b1, 0.0)
    ref_f32 = (h_ref @ w2 + b2).reshape(-1, 16384, 3)

    # --- default path: bf16-streamed fc2 weights, f32 activations/accum -----
    w2_bf16 = w2.astype(jnp.bfloat16)
    y = decoder_forward(x, w1, b1, w2_bf16, b2)          # tile_n=12288, 4 steps
    y = jax.block_until_ready(y)
    assert y.shape == (B, 16384, 3), y.shape

    # Same-math reference (bf16 weights upcast to f32, f32 activations).
    ref_bf = (h_ref @ w2_bf16.astype(jnp.float32) + b2).reshape(-1, 16384, 3)
    assert jnp.allclose(y, ref_bf, atol=1e-4, rtol=1e-4)
    # Weight-quantization error vs. the full-f32 module stays small.
    assert jnp.allclose(y, ref_f32, atol=3e-2, rtol=3e-2)

    # --- f32 weights: bit-for-bit the nn.Linear semantics (coverage) --------
    y_f32 = decoder_forward(x, w1, b1, w2, b2)
    y_f32 = jax.block_until_ready(y_f32)
    assert y_f32.shape == (B, 16384, 3), y_f32.shape
    assert jnp.allclose(y_f32, ref_f32, atol=1e-4, rtol=1e-4)

    print("KERNEL_OK")
</pallas_src>

<mosaic_0001>
module attributes {stable_mosaic.version = 11 : i64} {
  func.func @decoder_kernel(%arg0: i32, %arg1: memref<2x32xf32, #tpu.memory_space<vmem>>, %arg2: memref<32x64xf32, #tpu.memory_space<vmem>>, %arg3: memref<1x64xf32, #tpu.memory_space<vmem>>, %arg4: memref<64x12288xbf16, #tpu.memory_space<vmem>>, %arg5: memref<1x12288xf32, #tpu.memory_space<vmem>>, %arg6: memref<2x12288xf32, #tpu.memory_space<vmem>>) attributes {dimension_semantics = [#tpu.dimension_semantics<parallel>], iteration_bounds = array<i64: 4>, scalar_prefetch = 0 : i64, scratch_operands = 0 : i64, tpu.core_type = #tpu.core_type<tc>, window_params = [{pipeline_mode = #tpu.pipeline_mode<synchronous>, transform_indices = @transform_0, window_bounds = array<i64: 2, 32>}, {pipeline_mode = #tpu.pipeline_mode<synchronous>, transform_indices = @transform_1, window_bounds = array<i64: 32, 64>}, {pipeline_mode = #tpu.pipeline_mode<synchronous>, transform_indices = @transform_2, window_bounds = array<i64: 1, 64>}, {transform_indices = @transform_3, window_bounds = array<i64: 64, 12288>}, {transform_indices = @transform_4, window_bounds = array<i64: 1, 12288>}, {transform_indices = @transform_5, window_bounds = array<i64: 2, 12288>}]} {
    %c0 = arith.constant 0 : index
    %c0_0 = arith.constant 0 : index
    %0 = vector.load %arg1[%c0, %c0_0] : memref<2x32xf32, #tpu.memory_space<vmem>>, vector<2x32xf32>
    %c0_1 = arith.constant 0 : index
    %c0_2 = arith.constant 0 : index
    %1 = vector.load %arg2[%c0_1, %c0_2] : memref<32x64xf32, #tpu.memory_space<vmem>>, vector<32x64xf32>
    %cst = arith.constant dense<0.000000e+00> : vector<2x64xf32>
    %2 = tpu.matmul %0, %1, %cst {dimension_numbers = #tpu.dot_dimension_numbers<[1], [0], [0], [1], [0, 0, 1, 1], [], []>} : vector<2x32xf32>, vector<32x64xf32>, vector<2x64xf32> -> vector<2x64xf32>
    %c0_3 = arith.constant 0 : index
    %c0_4 = arith.constant 0 : index
    %3 = vector.load %arg3[%c0_3, %c0_4] : memref<1x64xf32, #tpu.memory_space<vmem>>, vector<1x64xf32>
    %4 = vector.broadcast %3 : vector<1x64xf32> to vector<2x64xf32>
    %5 = arith.addf %2, %4 : vector<2x64xf32>
    %cst_5 = arith.constant 0.000000e+00 : f32
    %6 = vector.broadcast %cst_5 : f32 to vector<2x64xf32>
    %7 = arith.maximumf %5, %6 : vector<2x64xf32>
    %c0_6 = arith.constant 0 : index
    %c0_7 = arith.constant 0 : index
    %8 = vector.load %arg4[%c0_6, %c0_7] : memref<64x12288xbf16, #tpu.memory_space<vmem>>, vector<64x12288xbf16>
    %9 = arith.extf %8 : vector<64x12288xbf16> to vector<64x12288xf32>
    %cst_8 = arith.constant dense<0.000000e+00> : vector<2x12288xf32>
    %10 = tpu.matmul %7, %9, %cst_8 {dimension_numbers = #tpu.dot_dimension_numbers<[1], [0], [0], [1], [0, 0, 1, 1], [], []>} : vector<2x64xf32>, vector<64x12288xf32>, vector<2x12288xf32> -> vector<2x12288xf32>
    %c0_9 = arith.constant 0 : index
    %c0_10 = arith.constant 0 : index
    %11 = vector.load %arg5[%c0_9, %c0_10] : memref<1x12288xf32, #tpu.memory_space<vmem>>, vector<1x12288xf32>
    %12 = vector.broadcast %11 : vector<1x12288xf32> to vector<2x12288xf32>
    %13 = arith.addf %10, %12 : vector<2x12288xf32>
    %c0_11 = arith.constant 0 : index
    %c0_12 = arith.constant 0 : index
    %14 = vector.load %arg6[%c0_11, %c0_12] : memref<2x12288xf32, #tpu.memory_space<vmem>>, vector<2x12288xf32>
    tpu.vector_store %arg6[%c0_11, %c0_12], %13 {strides = array<i32>} : memref<2x12288xf32, #tpu.memory_space<vmem>>, vector<2x12288xf32>,
    return
  }
  func.func @transform_0(%arg0: i32) -> (i32, i32) {
    %c0_i32 = arith.constant 0 : i32
    %c0_i32_0 = arith.constant 0 : i32
    %c0_i32_1 = arith.constant 0 : i32
    return %c0_i32, %c0_i32_0 : i32, i32
  }
  func.func @transform_1(%arg0: i32) -> (i32, i32) {
    %c0_i32 = arith.constant 0 : i32
    %c0_i32_0 = arith.constant 0 : i32
    %c0_i32_1 = arith.constant 0 : i32
    return %c0_i32, %c0_i32_0 : i32, i32
  }
  func.func @transform_2(%arg0: i32) -> (i32, i32) {
    %c0_i32 = arith.constant 0 : i32
    %c0_i32_0 = arith.constant 0 : i32
    %c0_i32_1 = arith.constant 0 : i32
    return %c0_i32, %c0_i32_0 : i32, i32
  }
  func.func @transform_3(%arg0: i32) -> (i32, i32) {
    %c0_i32 = arith.constant 0 : i32
    %c0_i32_0 = arith.constant 0 : i32
    return %c0_i32, %arg0 : i32, i32
  }
  func.func @transform_4(%arg0: i32) -> (i32, i32) {
    %c0_i32 = arith.constant 0 : i32
    %c0_i32_0 = arith.constant 0 : i32
    return %c0_i32, %arg0 : i32, i32
  }
  func.func @transform_5(%arg0: i32) -> (i32, i32) {
    %c0_i32 = arith.constant 0 : i32
    %c0_i32_0 = arith.constant 0 : i32
    return %c0_i32, %arg0 : i32, i32
  }
}

</mosaic_0001>

<llo_original>
// kernel: tpu_custom_call.1
$region0: #{tpu_custom_call.1}
  #allocation0 [shape = 'u32[]', space=smem, size = 0x4, offset = 0x4, fixed_abs, tag = 'smem constant byte address 0x4 - core index']
  #allocation1 [shape = 'u32[144,128]{1,0:T(1,128)}', space=vmem, size = 0x12000, scoped, tag = 'internal scratch']
  %s0 = inlined_call_operand.hbm [shape: f32[2,32], index: 0, kind: input, shape index: {}]
  %s1 = inlined_call_operand.hbm [shape: f32[32,64], index: 1, kind: input, shape index: {}]
  %s2 = inlined_call_operand.hbm [shape: f32[1,64], index: 2, kind: input, shape index: {}]
  %s3 = inlined_call_operand.hbm [shape: bf16[64,49152], index: 3, kind: input, shape index: {}]
  %s4 = inlined_call_operand.hbm [shape: f32[1,49152], index: 4, kind: input, shape index: {}]
  %s5 = inlined_call_operand.hbm [shape: f32[2,49152], index: 5, kind: output, shape index: {}]
  %s6 = sld [smem:[#allocation0]]
  $region73: #{tpu_custom_call.1} parent=0
    _
  %s8 = ssub.s32 1, %s6
  %s9 = scalar_select 0, %s8, %s6
  $region1: #{tpu_custom_call.1} parent=0
    #allocation2 [shape = 'u8[1024]{0}', space=vmem, size = 0x400, scoped, tag = 'input window, operand 0, single buffered']
    #allocation3 [shape = 's32[2]{0}', space=sflag, size = 0x8, scoped, tag = 'scoped memory for tpu_custom_call.1']
    #allocation4 [shape = 's32[2]{0}', space=sflag, size = 0x8, scoped, tag = 'scoped memory for tpu_custom_call.1']
    #allocation5 [shape = 'u8[16384]{0}', space=vmem, size = 0x4000, scoped, tag = 'input window, operand 1, single buffered']
    #allocation6 [shape = 's32[1]{0}', space=sflag, size = 0x4, scoped, tag = 'scoped memory for tpu_custom_call.1']
    #allocation7 [shape = 'u8[512]{0}', space=vmem, size = 0x400, scoped, tag = 'input window, operand 2, single buffered']
    #allocation8 [shape = 'u8[3145728]{0}', space=vmem, size = 0x300000, scoped, tag = 'input window, operand 3']
    #allocation9 [shape = 's32[2]{0}', space=sflag, size = 0x8, scoped, tag = 'scoped memory for tpu_custom_call.1']
    #allocation10 [shape = 'u8[98304]{0}', space=vmem, size = 0x18000, scoped, tag = 'input window, operand 4']
    #allocation11 [shape = 'u8[196608]{0}', space=vmem, size = 0x30000, scoped, tag = 'output window, operand 0']
    %10 = vsyncpa [#allocation3], 0
    %11 = vsyncpa [#allocation6], 0
    %12 = vsyncpa [#allocation9], 0
    %s13 = scalar_lea.sflag [#allocation9], 1
    %14 = vsyncpa %s13, 0
    %15 = vsyncpa [#allocation4], 0
    %s16 = scalar_lea.sflag [#allocation4], 1
    %17 = vsyncpa %s16, 0
    loop: start=0, step=1, limit=6
    $region2: #{tpu_custom_call.1} parent=1 // loop_pre_header
      _
    $region3: #{tpu_custom_call.1} parent=1 // loop_header
      %s19 = sphi 0, %s23
      %p20 = scmp.ge.s32.totalorder %s19, 6
      %s27 = sphi 0, %s27
      %s29 = sphi 0, %s27
      %s30 = sphi 0, %s29
      %s44 = sphi 0, %s30
      %s48 = sphi 0, %s48
      %s50 = sphi 0, %s48
      %s51 = sphi 0, %s50
      %s65 = sphi 0, %s51
      %s69 = sphi 0, %s69
      %s71 = sphi 0, %s69
      %s72 = sphi 0, %s71
      %s86 = sphi 0, %s72
      %s92 = sphi 0, %s94
      %s95 = sphi 0, %s92
      %s96 = sphi 0, %s95
      %s112 = sphi 0, %s96
      %s118 = sphi 0, %s120
      %s121 = sphi 0, %s118
      %s122 = sphi 0, %s121
      %s138 = sphi 0, %s122
      %s144 = sphi 0, %s146
      %s147 = sphi 0, %s144
      %s148 = sphi 0, %s147
      %s164 = sphi 0, %s148
    $region4: #{tpu_custom_call.1} parent=1 // loop_header_branch
      %22 = sbr.rel (%p20) target = $region8
    $region5: #{tpu_custom_call.1} parent=1 // loop_body
      %s24 = ssub.s32 %s19, 1
      %s25 = ssub.s32 %s19, 2
      %s26 = sadd.s32 %s19, 1
      %s28 = sadd.s32 %s27, 1
      %p31 = scmp.eq.s32.totalorder %s19, 3
      %p32 = scmp.ne.s32.totalorder %s27, %s29
      %p33 = scmp.eq.s32.totalorder %s19, 0
      %p34 = por %p32, %p33
      %p35 = scmp.ne.s32.totalorder %s27, %s29
      %p36 = scmp.eq.s32.totalorder %s24, 3
      %p37 = por %p35, %p36
      %p38 = scmp.ne.s32.totalorder %s29, %s30
      %p39 = scmp.eq.s32.totalorder %s24, 0
      %p40 = por %p38, %p39
      %p41 = scmp.ne.s32.totalorder %s29, %s30
      %p42 = scmp.eq.s32.totalorder %s25, 3
      %p43 = por %p41, %p42
      %p45 = scmp.ne.s32.totalorder %s30, %s44
      %p46 = scmp.eq.s32.totalorder %s25, 0
      %p47 = por %p45, %p46
      %s49 = sadd.s32 %s48, 1
      %p52 = scmp.eq.s32.totalorder %s19, 3
      %p53 = scmp.ne.s32.totalorder %s48, %s50
      %p54 = scmp.eq.s32.totalorder %s19, 0
      %p55 = por %p53, %p54
      %p56 = scmp.ne.s32.totalorder %s48, %s50
      %p57 = scmp.eq.s32.totalorder %s24, 3
      %p58 = por %p56, %p57
      %p59 = scmp.ne.s32.totalorder %s50, %s51
      %p60 = scmp.eq.s32.totalorder %s24, 0
      %p61 = por %p59, %p60
      %p62 = scmp.ne.s32.totalorder %s50, %s51
      %p63 = scmp.eq.s32.totalorder %s25, 3
      %p64 = por %p62, %p63
      %p66 = scmp.ne.s32.totalorder %s51, %s65
      %p67 = scmp.eq.s32.totalorder %s25, 0
      %p68 = por %p66, %p67
      %s70 = sadd.s32 %s69, 1
      %p73 = scmp.eq.s32.totalorder %s19, 3
      %p74 = scmp.ne.s32.totalorder %s69, %s71
      %p75 = scmp.eq.s32.totalorder %s19, 0
      %p76 = por %p74, %p75
      %p77 = scmp.ne.s32.totalorder %s69, %s71
      %p78 = scmp.eq.s32.totalorder %s24, 3
      %p79 = por %p77, %p78
      %p80 = scmp.ne.s32.totalorder %s71, %s72
      %p81 = scmp.eq.s32.totalorder %s24, 0
      %p82 = por %p80, %p81
      %p83 = scmp.ne.s32.totalorder %s71, %s72
      %p84 = scmp.eq.s32.totalorder %s25, 3
      %p85 = por %p83, %p84
      %p87 = scmp.ne.s32.totalorder %s72, %s86
      %p88 = scmp.eq.s32.totalorder %s25, 0
      %p89 = por %p87, %p88
      %s90 = ssub.s32 %s19, %s26
      %p91 = scmp.eq.s32.totalorder %s90, 0
      %s93 = sadd.s32 %s92, 1
      %s94 = scalar_select %p91, %s92, %s93
      %p97 = pneg %p91
      %p98 = scmp.eq.s32.totalorder %s19, 3
      %p99 = por %p97, %p98
      %p100 = scmp.ne.s32.totalorder %s92, %s95
      %p101 = scmp.eq.s32.totalorder %s19, 0
      %p102 = por %p100, %p101
      %p103 = scmp.ne.s32.totalorder %s92, %s95
      %p104 = scmp.eq.s32.totalorder %s24, 3
      %p105 = por %p103, %p104
      %p106 = scmp.ne.s32.totalorder %s95, %s96
      %p107 = scmp.eq.s32.totalorder %s24, 0
      %p108 = por %p106, %p107
      %p109 = scmp.ne.s32.totalorder %s95, %s96
      %p110 = scmp.eq.s32.totalorder %s25, 3
      %p111 = por %p109, %p110
      %p113 = scmp.ne.s32.totalorder %s96, %s112
      %p114 = scmp.eq.s32.totalorder %s25, 0
      %p115 = por %p113, %p114
      %s116 = ssub.s32 %s19, %s26
      %p117 = scmp.eq.s32.totalorder %s116, 0
      %s119 = sadd.s32 %s118, 1
      %s120 = scalar_select %p117, %s118, %s119
      %p123 = pneg %p117
      %p124 = scmp.eq.s32.totalorder %s19, 3
      %p125 = por %p123, %p124
      %p126 = scmp.ne.s32.totalorder %s118, %s121
      %p127 = scmp.eq.s32.totalorder %s19, 0
      %p128 = por %p126, %p127
      %p129 = scmp.ne.s32.totalorder %s118, %s121
      %p130 = scmp.eq.s32.totalorder %s24, 3
      %p131 = por %p129, %p130
      %p132 = scmp.ne.s32.totalorder %s121, %s122
      %p133 = scmp.eq.s32.totalorder %s24, 0
      %p134 = por %p132, %p133
      %p135 = scmp.ne.s32.totalorder %s121, %s122
      %p136 = scmp.eq.s32.totalorder %s25, 3
      %p137 = por %p135, %p136
      %p139 = scmp.ne.s32.totalorder %s122, %s138
      %p140 = scmp.eq.s32.totalorder %s25, 0
      %p141 = por %p139, %p140
      %s142 = ssub.s32 %s19, %s26
      %p143 = scmp.eq.s32.totalorder %s142, 0
      %s145 = sadd.s32 %s144, 1
      %s146 = scalar_select %p143, %s144, %s145
      %p149 = pneg %p143
      %p150 = scmp.eq.s32.totalorder %s19, 3
      %p151 = por %p149, %p150
      %p152 = scmp.ne.s32.totalorder %s144, %s147
      %p153 = scmp.eq.s32.totalorder %s19, 0
      %p154 = por %p152, %p153
      %p155 = scmp.ne.s32.totalorder %s144, %s147
      %p156 = scmp.eq.s32.totalorder %s24, 3
      %p157 = por %p155, %p156
      %p158 = scmp.ne.s32.totalorder %s147, %s148
      %p159 = scmp.eq.s32.totalorder %s24, 0
      %p160 = por %p158, %p159
      %p161 = scmp.ne.s32.totalorder %s147, %s148
      %p162 = scmp.eq.s32.totalorder %s25, 3
      %p163 = por %p161, %p162
      %p165 = scmp.ne.s32.totalorder %s148, %s164
      %p166 = scmp.eq.s32.totalorder %s25, 0
      %p167 = por %p165, %p166
      %p168 = scmp.le.s32.totalorder 1, %s19
      %p169 = scmp.lt.s32.totalorder %s19, 5
      %p170 = pnand %p168, %p169
      %p171 = pneg %p170
      // Predicated region
      $region9: #{tpu_custom_call.1} parent=5 // pred_check
        _
      $region10: #{tpu_custom_call.1} parent=5 // pred_check_branch
        %173 = sbr.rel (%p170) target = $region12
      $region11: #{tpu_custom_call.1} parent=5 // pred_region
        %s174 = ssub.s32 %s19, 1
        // Predicated region
        $region13: #{tpu_custom_call.1} parent=11 // pred_check
          %p175 = pneg %p40
        $region14: #{tpu_custom_call.1} parent=11 // pred_check_branch
          %177 = sbr.rel (%p175) target = $region16
        $region15: #{tpu_custom_call.1} parent=11 // pred_region
          %s179 = ssub.s32 32, 32
          %180 = vsyncadd [#allocation3], %s179
          %s182 = sshll.u32 [#allocation2], 4
          %s183 = int_to_ptr.vmem [resolvable:$true] %s182
          %185 = dma.hbm_to_vmem [thread:$0]  %s0, 32, %s183, [#allocation3]
        $region16: #{tpu_custom_call.1} parent=11 // pred_fallthru
          _
        // Predicated region
        $region17: #{tpu_custom_call.1} parent=11 // pred_check
          %p186 = pneg %p61
        $region18: #{tpu_custom_call.1} parent=11 // pred_check_branch
          %188 = sbr.rel (%p186) target = $region20
        $region19: #{tpu_custom_call.1} parent=11 // pred_region
          %s190 = ssub.s32 512, 512
          %191 = vsyncadd [#allocation6], %s190
          %s192 = sshll.u32 [#allocation5], 4
          %s193 = int_to_ptr.vmem [resolvable:$true] %s192
          %198 = dma.hbm_to_vmem [thread:$0]  %s1, 512, %s193, [#allocation6], 128, 128, 8
        $region20: #{tpu_custom_call.1} parent=11 // pred_fallthru
          _
        // Predicated region
        $region21: #{tpu_custom_call.1} parent=11 // pred_check
          %p199 = pneg %p82
        $region22: #{tpu_custom_call.1} parent=11 // pred_check_branch
          %201 = sbr.rel (%p199) target = $region24
        $region23: #{tpu_custom_call.1} parent=11 // pred_region
          %s203 = ssub.s32 16, 16
          %204 = vsyncadd [#allocation6], %s203
          %s206 = sshll.u32 [#allocation7], 4
          %s207 = int_to_ptr.vmem [resolvable:$true] %s206
          %209 = dma.hbm_to_vmem [thread:$0]  %s2, 16, %s207, [#allocation6]
        $region24: #{tpu_custom_call.1} parent=11 // pred_fallthru
          _
      $region12: #{tpu_custom_call.1} parent=5 // pred_fallthru
        _
      %p210 = scmp.lt.s32.totalorder %s19, 4
      // Predicated region
      $region25: #{tpu_custom_call.1} parent=5 // pred_check
        %p211 = pneg %p210
      $region26: #{tpu_custom_call.1} parent=5 // pred_check_branch
        %213 = sbr.rel (%p211) target = $region28
      $region27: #{tpu_custom_call.1} parent=5 // pred_region
        // Predicated region
        $region29: #{tpu_custom_call.1} parent=27 // pred_check
          %p214 = pneg %p102
        $region30: #{tpu_custom_call.1} parent=27 // pred_check_branch
          %216 = sbr.rel (%p214) target = $region32
        $region31: #{tpu_custom_call.1} parent=27 // pred_region
          %s217 = sand.u32 %s19, 1
          %s218 = scalar_lea.sflag [#allocation9], %s217
          %s219 = sand.u32 %s92, 1
          %s220 = smul.addr %s219, 3072
          %s221 = scalar_lea.vmem [#allocation8], %s220
          %s222 = smul.u32 96, %s19
          %s224 = ssub.s32 49152, 49152
          %225 = vsyncadd %s218, %s224
          %s226 = smul.addr %s222, 64
          %s227 = scalar_lea.hbm %s3, %s226
          %s228 = sshll.u32 %s221, 4
          %s229 = int_to_ptr.vmem [resolvable:$true] %s228
          %234 = dma.hbm_to_vmem [thread:$0]  %s227, 49152, %s229, %s218, 24576, 6144, 384
        $region32: #{tpu_custom_call.1} parent=27 // pred_fallthru
          _
        // Predicated region
        $region33: #{tpu_custom_call.1} parent=27 // pred_check
          %p235 = pneg %p128
        $region34: #{tpu_custom_call.1} parent=27 // pred_check_branch
          %237 = sbr.rel (%p235) target = $region36
        $region35: #{tpu_custom_call.1} parent=27 // pred_region
          %s238 = sand.u32 %s19, 1
          %s239 = scalar_lea.sflag [#allocation9], %s238
          %s240 = sand.u32 %s118, 1
          %s241 = smul.addr %s240, 96
          %s242 = scalar_lea.vmem [#allocation10], %s241
          %s243 = smul.u32 96, %s19
          %s245 = ssub.s32 1536, 1536
          %246 = vsyncadd %s239, %s245
          %s247 = smul.addr %s243, 16
          %s248 = scalar_lea.hbm %s4, %s247
          %s250 = sshll.u32 %s242, 4
          %s251 = int_to_ptr.vmem [resolvable:$true] %s250
          %253 = dma.hbm_to_vmem [thread:$0]  %s248, 1536, %s251, %s239
        $region36: #{tpu_custom_call.1} parent=27 // pred_fallthru
          _
      $region28: #{tpu_custom_call.1} parent=5 // pred_fallthru
        _
      %p254 = scmp.le.s32.totalorder 1, %s19
      %p255 = scmp.lt.s32.totalorder %s19, 5
      %p256 = pnand %p254, %p255
      %p257 = pneg %p256
      // Predicated region
      $region37: #{tpu_custom_call.1} parent=5 // pred_check
        _
      $region38: #{tpu_custom_call.1} parent=5 // pred_check_branch
        %259 = sbr.rel (%p256) target = $region40
      $region39: #{tpu_custom_call.1} parent=5 // pred_region
        %s260 = ssub.s32 %s19, 1
        // Predicated region
        $region41: #{tpu_custom_call.1} parent=39 // pred_check
          %p261 = pneg %p40
        $region42: #{tpu_custom_call.1} parent=39 // pred_check_branch
          %263 = sbr.rel (%p261) target = $region44
        $region43: #{tpu_custom_call.1} parent=39 // pred_region
          %264 = dma.done [#allocation3], 32
        $region44: #{tpu_custom_call.1} parent=39 // pred_fallthru
          _
        // Predicated region
        $region45: #{tpu_custom_call.1} parent=39 // pred_check
          %p265 = pneg %p61
        $region46: #{tpu_custom_call.1} parent=39 // pred_check_branch
          %267 = sbr.rel (%p265) target = $region48
        $region47: #{tpu_custom_call.1} parent=39 // pred_region
          %268 = dma.done [#allocation6], 512
        $region48: #{tpu_custom_call.1} parent=39 // pred_fallthru
          _
        // Predicated region
        $region49: #{tpu_custom_call.1} parent=39 // pred_check
          %p269 = pneg %p82
        $region50: #{tpu_custom_call.1} parent=39 // pred_check_branch
          %271 = sbr.rel (%p269) target = $region52
        $region51: #{tpu_custom_call.1} parent=39 // pred_region
          %272 = dma.done [#allocation6], 16
        $region52: #{tpu_custom_call.1} parent=39 // pred_fallthru
          _
        %s273 = sand.u32 %s24, 1
        %s274 = scalar_lea.sflag [#allocation9], %s273
        %s275 = sand.u32 %s95, 1
        %s276 = smul.addr %s275, 3072
        %s277 = scalar_lea.vmem [#allocation8], %s276
        // Predicated region
        $region53: #{tpu_custom_call.1} parent=39 // pred_check
          %p278 = pneg %p108
        $region54: #{tpu_custom_call.1} parent=39 // pred_check_branch
          %280 = sbr.rel (%p278) target = $region56
        $region55: #{tpu_custom_call.1} parent=39 // pred_region
          %281 = dma.done %s274, 49152
        $region56: #{tpu_custom_call.1} parent=39 // pred_fallthru
          _
        %s282 = sand.u32 %s24, 1
        %s283 = scalar_lea.sflag [#allocation9], %s282
        %s284 = sand.u32 %s121, 1
        %s285 = smul.addr %s284, 96
        %s286 = scalar_lea.vmem [#allocation10], %s285
        // Predicated region
        $region57: #{tpu_custom_call.1} parent=39 // pred_check
          %p287 = pneg %p134
        $region58: #{tpu_custom_call.1} parent=39 // pred_check_branch
          %289 = sbr.rel (%p287) target = $region60
        $region59: #{tpu_custom_call.1} parent=39 // pred_region
          %290 = dma.done %s283, 1536
        $region60: #{tpu_custom_call.1} parent=39 // pred_fallthru
          _
        %p291 = pneg %p40
        %p292 = pneg %p37
        %p293 = pneg %p61
        %p294 = pneg %p58
        %p295 = pneg %p82
        %p296 = pneg %p79
        %s297 = sand.u32 %s24, 1
        %s298 = scalar_lea.sflag [#allocation9], %s297
        %s299 = sand.u32 %s95, 1
        %s300 = smul.addr %s299, 3072
        %s301 = scalar_lea.vmem [#allocation8], %s300
        %p302 = pneg %p108
        %p303 = pneg %p105
        %s304 = sand.u32 %s24, 1
        %s305 = scalar_lea.sflag [#allocation9], %s304
        %s306 = sand.u32 %s121, 1
        %s307 = smul.addr %s306, 96
        %s308 = scalar_lea.vmem [#allocation10], %s307
        %p309 = pneg %p134
        %p310 = pneg %p131
        %p311 = pneg %p160
        %p312 = pneg %p157
        %s313 = sand.u32 %s147, 1
        %s314 = scalar_lea.sflag [#allocation4], %s313
        %s315 = sand.u32 %s147, 1
        %s316 = smul.addr %s315, 192
        %s317 = scalar_lea.vmem [#allocation11], %s316
        %s318 = smul.u32 96, %s24
        %s319 = smul.u32 96, %s24
        %s320 = smul.u32 96, %s24
        %v321 = vld [vmem:[#allocation2] sm:$0x3]
        %v322 = vld [vmem:[#allocation5] sm:$0xff]
        %v323 = vld [vmem:[#allocation5 + $0x8] sm:$0xff]
        %v324 = vld [vmem:[#allocation5 + $0x10] sm:$0xff]
        %v325 = vld [vmem:[#allocation5 + $0x18] sm:$0xff]
        %v326 = vld [vmem:[#allocation7] sm:$0x1]
        %v328 = vlaneseq
        %v329 = vshrl.u32 %v328, 7
        %v330 = vsub.s32 0, %v329
        %v331 = vrot.slane %v326, %v330
        %vm333 = vcmask 261120
        %v335 = vsel %vm333, %v321, 0
        %337 = vmatprep.subr.mxu0 0.0
        %338 = vmatpush1.msra.mxu0 0.0
        %339 = vmatprep.subr.mxu0 0.0
        %340 = vmatpush1.msra.mxu0 0.0
        %341 = vmatprep.subr.mxu0 0.0
        %342 = vmatpush1.msra.mxu0 0.0
        %343 = vmatprep.subr.mxu0 0.0
        %344 = vmatpush1.msra.mxu0 0.0
        %345 = vmatprep.subr.mxu0 0.0
        %346 = vmatpush1.msra.mxu0 0.0
        %347 = vmatprep.subr.mxu0 0.0
        %348 = vmatpush1.msra.mxu0 0.0
        %349 = vmatprep.subr.mxu0 0.0
        %350 = vmatpush1.msra.mxu0 0.0
        %351 = vmatprep.subr.mxu0 0.0
        %352 = vmatpush1.msra.mxu0 0.0
        %353 = vmatprep.subr.mxu0 0.0
        %354 = vmatpush1.msra.mxu0 0.0
        %355 = vmatprep.subr.mxu0 0.0
        %356 = vmatpush1.msra.mxu0 0.0
        %357 = vmatprep.subr.mxu0 0.0
        %358 = vmatpush1.msra.mxu0 0.0
        %359 = vmatprep.subr.mxu0 0.0
        %360 = vmatpush1.msra.mxu0 0.0
        %361 = vmatprep.subr.mxu0 0.0
        %362 = vmatpush1.msra.mxu0 %v325
        %363 = vmatprep.subr.mxu0 0.0
        %364 = vmatpush1.msra.mxu0 %v324
        %365 = vmatprep.subr.mxu0 0.0
        %366 = vmatpush1.msra.mxu0 %v323
        %367 = vmatprep.subr.mxu0 0.0
        %368 = vmatpush1.msra.mxu0 %v322
        %369 = vmatprep.subr.mxu0 0.0
        %370 = vmatpush2.msra.mxu0 0.0
        %371 = vmatprep.subr.mxu0 0.0
        %372 = vmatpush2.msra.mxu0 0.0
        %373 = vmatprep.subr.mxu0 0.0
        %374 = vmatpush2.msra.mxu0 0.0
        %375 = vmatprep.subr.mxu0 0.0
        %376 = vmatpush2.msra.mxu0 0.0
        %377 = vmatprep.subr.mxu0 0.0
        %378 = vmatpush2.msra.mxu0 0.0
        %379 = vmatprep.subr.mxu0 0.0
        %380 = vmatpush2.msra.mxu0 0.0
        %381 = vmatprep.subr.mxu0 0.0
        %382 = vmatpush2.msra.mxu0 0.0
        %383 = vmatprep.subr.mxu0 0.0
        %384 = vmatpush2.msra.mxu0 0.0
        %385 = vmatprep.subr.mxu0 0.0
        %386 = vmatpush2.msra.mxu0 0.0
        %387 = vmatprep.subr.mxu0 0.0
        %388 = vmatpush2.msra.mxu0 0.0
        %389 = vmatprep.subr.mxu0 0.0
        %390 = vmatpush2.msra.mxu0 0.0
        %391 = vmatprep.subr.mxu0 0.0
        %392 = vmatpush2.msra.mxu0 0.0
        %393 = vmatprep.subr.mxu0 0.0
        %394 = vmatpush2.msra.mxu0 0.0
        %395 = vmatprep.subr.mxu0 0.0
        %396 = vmatpush2.msra.mxu0 0.0
        %397 = vmatprep.subr.mxu0 0.0
        %398 = vmatpush2.msra.mxu0 0.0
        %399 = vmatprep.subr.mxu0 0.0
        %400 = vmatpush2.msra.mxu0 0.0
        %401 = vmatprep.mubr.f32.mxu0 0.0
        %402 = vmatmul.mubr.f32.gmra.mxu0 %v335
        %v403 = vpop.f32.mrf.mxu0
        %v404 = vadd.f32 %v331, %v403
        %v405 = vpop.f32.mrf.mxu0
        %406 = vdwg.mxu0
        %v407 = vmax.f32 %v404, 0.0
        %v408 = vld [vmem:[%s277] sm:$0xff]
        %v409 = vld [vmem:[%s277 + $0x8] sm:$0xff]
        %v410 = vld [vmem:[%s277 + $0x10] sm:$0xff]
        %v411 = vld [vmem:[%s277 + $0x18] sm:$0xff]
        %v412 = vld [vmem:[%s277 + $0x20] sm:$0xff]
        %v413 = vld [vmem:[%s277 + $0x28] sm:$0xff]
        %v414 = vld [vmem:[%s277 + $0x30] sm:$0xff]
        %v415 = vld [vmem:[%s277 + $0x38] sm:$0xff]
        %v416 = vld [vmem:[%s277 + $0x40] sm:$0xff]
        %v417 = vld [vmem:[%s277 + $0x48] sm:$0xff]
        %v418 = vld [vmem:[%s277 + $0x50] sm:$0xff]
        %v419 = vld [vmem:[%s277 + $0x58] sm:$0xff]
        %v420 = vld [vmem:[%s277 + $0x60] sm:$0xff]
        %v421 = vld [vmem:[%s277 + $0x68] sm:$0xff]
        %v422 = vld [vmem:[%s277 + $0x70] sm:$0xff]
        %v423 = vld [vmem:[%s277 + $0x78] sm:$0xff]
        %v424 = vld [vmem:[%s277 + $0x80] sm:$0xff]
        %v425 = vld [vmem:[%s277 + $0x88] sm:$0xff]
        %v426 = vld [vmem:[%s277 + $0x90] sm:$0xff]
        %v427 = vld [vmem:[%s277 + $0x98] sm:$0xff]
        %v428 = vld [vmem:[%s277 + $0xa0] sm:$0xff]
        %v429 = vld [vmem:[%s277 + $0xa8] sm:$0xff]
        %v430 = vld [vmem:[%s277 + $0xb0] sm:$0xff]
        %v431 = vld [vmem:[%s277 + $0xb8] sm:$0xff]
        %v432 = vld [vmem:[%s277 + $0xc0] sm:$0xff]
        %v433 = vld [vmem:[%s277 + $0xc8] sm:$0xff]
        %v434 = vld [vmem:[%s277 + $0xd0] sm:$0xff]
        %v435 = vld [vmem:[%s277 + $0xd8] sm:$0xff]
        %v436 = vld [vmem:[%s277 + $0xe0] sm:$0xff]
        %v437 = vld [vmem:[%s277 + $0xe8] sm:$0xff]
        %v438 = vld [vmem:[%s277 + $0xf0] sm:$0xff]
        %v439 = vld [vmem:[%s277 + $0xf8] sm:$0xff]
        %v440 = vld [vmem:[%s277 + $0x100] sm:$0xff]
        %v441 = vld [vmem:[%s277 + $0x108] sm:$0xff]
        %v442 = vld [vmem:[%s277 + $0x110] sm:$0xff]
        %v443 = vld [vmem:[%s277 + $0x118] sm:$0xff]
        %v444 = vld [vmem:[%s277 + $0x120] sm:$0xff]
        %v445 = vld [vmem:[%s277 + $0x128] sm:$0xff]
        %v446 = vld [vmem:[%s277 + $0x130] sm:$0xff]
        %v447 = vld [vmem:[%s277 + $0x138] sm:$0xff]
        %v448 = vld [vmem:[%s277 + $0x140] sm:$0xff]
        %v449 = vld [vmem:[%s277 + $0x148] sm:$0xff]
        %v450 = vld [vmem:[%s277 + $0x150] sm:$0xff]
        %v451 = vld [vmem:[%s277 + $0x158] sm:$0xff]
        %v452 = vld [vmem:[%s277 + $0x160] sm:$0xff]
        %v453 = vld [vmem:[%s277 + $0x168] sm:$0xff]
        %v454 = vld [vmem:[%s277 + $0x170] sm:$0xff]
        %v455 = vld [vmem:[%s277 + $0x178] sm:$0xff]
        %v456 = vld [vmem:[%s277 + $0x180] sm:$0xff]
        %v457 = vld [vmem:[%s277 + $0x188] sm:$0xff]
        %v458 = vld [vmem:[%s277 + $0x190] sm:$0xff]
        %v459 = vld [vmem:[%s277 + $0x198] sm:$0xff]
        %v460 = vld [vmem:[%s277 + $0x1a0] sm:$0xff]
        %v461 = vld [vmem:[%s277 + $0x1a8] sm:$0xff]
        %v462 = vld [vmem:[%s277 + $0x1b0] sm:$0xff]
        %v463 = vld [vmem:[%s277 + $0x1b8] sm:$0xff]
        %v464 = vld [vmem:[%s277 + $0x1c0] sm:$0xff]
        %v465 = vld [vmem:[%s277 + $0x1c8] sm:$0xff]
        %v466 = vld [vmem:[%s277 + $0x1d0] sm:$0xff]
        %v467 = vld [vmem:[%s277 + $0x1d8] sm:$0xff]
        %v468 = vld [vmem:[%s277 + $0x1e0] sm:$0xff]
        %v469 = vld [vmem:[%s277 + $0x1e8] sm:$0xff]
        %v470 = vld [vmem:[%s277 + $0x1f0] sm:$0xff]
        %v471 = vld [vmem:[%s277 + $0x1f8] sm:$0xff]
        %v472 = vld [vmem:[%s277 + $0x200] sm:$0xff]
        %v473 = vld [vmem:[%s277 + $0x208] sm:$0xff]
        %v474 = vld [vmem:[%s277 + $0x210] sm:$0xff]
        %v475 = vld [vmem:[%s277 + $0x218] sm:$0xff]
        %v476 = vld [vmem:[%s277 + $0x220] sm:$0xff]
        %v477 = vld [vmem:[%s277 + $0x228] sm:$0xff]
        %v478 = vld [vmem:[%s277 + $0x230] sm:$0xff]
        %v479 = vld [vmem:[%s277 + $0x238] sm:$0xff]
        %v480 = vld [vmem:[%s277 + $0x240] sm:$0xff]
        %v481 = vld [vmem:[%s277 + $0x248] sm:$0xff]
        %v482 = vld [vmem:[%s277 + $0x250] sm:$0xff]
        %v483 = vld [vmem:[%s277 + $0x258] sm:$0xff]
        %v484 = vld [vmem:[%s277 + $0x260] sm:$0xff]
        %v485 = vld [vmem:[%s277 + $0x268] sm:$0xff]
        %v486 = vld [vmem:[%s277 + $0x270] sm:$0xff]
        %v487 = vld [vmem:[%s277 + $0x278] sm:$0xff]
        %v488 = vld [vmem:[%s277 + $0x280] sm:$0xff]
        %v489 = vld [vmem:[%s277 + $0x288] sm:$0xff]
        %v490 = vld [vmem:[%s277 + $0x290] sm:$0xff]
        %v491 = vld [vmem:[%s277 + $0x298] sm:$0xff]
        %v492 = vld [vmem:[%s277 + $0x2a0] sm:$0xff]
        %v493 = vld [vmem:[%s277 + $0x2a8] sm:$0xff]
        %v494 = vld [vmem:[%s277 + $0x2b0] sm:$0xff]
        %v495 = vld [vmem:[%s277 + $0x2b8] sm:$0xff]
        %v496 = vld [vmem:[%s277 + $0x2c0] sm:$0xff]
        %v497 = vld [vmem:[%s277 + $0x2c8] sm:$0xff]
        %v498 = vld [vmem:[%s277 + $0x2d0] sm:$0xff]
        %v499 = vld [vmem:[%s277 + $0x2d8] sm:$0xff]
        %v500 = vld [vmem:[%s277 + $0x2e0] sm:$0xff]
        %v501 = vld [vmem:[%s277 + $0x2e8] sm:$0xff]
        %v502 = vld [vmem:[%s277 + $0x2f0] sm:$0xff]
        %v503 = vld [vmem:[%s277 + $0x2f8] sm:$0xff]
        %v504 = vld [vmem:[%s277 + $0x300] sm:$0xff]
        %v505 = vld [vmem:[%s277 + $0x308] sm:$0xff]
        %v506 = vld [vmem:[%s277 + $0x310] sm:$0xff]
        %v507 = vld [vmem:[%s277 + $0x318] sm:$0xff]
        %v508 = vld [vmem:[%s277 + $0x320] sm:$0xff]
        %v509 = vld [vmem:[%s277 + $0x328] sm:$0xff]
        %v510 = vld [vmem:[%s277 + $0x330] sm:$0xff]
        %v511 = vld [vmem:[%s277 + $0x338] sm:$0xff]
        %v512 = vld [vmem:[%s277 + $0x340] sm:$0xff]
        %v513 = vld [vmem:[%s277 + $0x348] sm:$0xff]
        %v514 = vld [vmem:[%s277 + $0x350] sm:$0xff]
        %v515 = vld [vmem:[%s277 + $0x358] sm:$0xff]
        %v516 = vld [vmem:[%s277 + $0x360] sm:$0xff]
        %v517 = vld [vmem:[%s277 + $0x368] sm:$0xff]
        %v518 = vld [vmem:[%s277 + $0x370] sm:$0xff]
        %v519 = vld [vmem:[%s277 + $0x378] sm:$0xff]
        %v520 = vld [vmem:[%s277 + $0x380] sm:$0xff]
        %v521 = vld [vmem:[%s277 + $0x388] sm:$0xff]
        %v522 = vld [vmem:[%s277 + $0x390] sm:$0xff]
        %v523 = vld [vmem:[%s277 + $0x398] sm:$0xff]
        %v524 = vld [vmem:[%s277 + $0x3a0] sm:$0xff]
        %v525 = vld [vmem:[%s277 + $0x3a8] sm:$0xff]
        %v526 = vld [vmem:[%s277 + $0x3b0] sm:$0xff]
        %v527 = vld [vmem:[%s277 + $0x3b8] sm:$0xff]
        %v528 = vld [vmem:[%s277 + $0x3c0] sm:$0xff]
        %v529 = vld [vmem:[%s277 + $0x3c8] sm:$0xff]
        %v530 = vld [vmem:[%s277 + $0x3d0] sm:$0xff]
        %v531 = vld [vmem:[%s277 + $0x3d8] sm:$0xff]
        %v532 = vld [vmem:[%s277 + $0x3e0] sm:$0xff]
        %v533 = vld [vmem:[%s277 + $0x3e8] sm:$0xff]
        %v534 = vld [vmem:[%s277 + $0x3f0] sm:$0xff]
        %v535 = vld [vmem:[%s277 + $0x3f8] sm:$0xff]
        %v536 = vld [vmem:[%s277 + $0x400] sm:$0xff]
        %v537 = vld [vmem:[%s277 + $0x408] sm:$0xff]
        %v538 = vld [vmem:[%s277 + $0x410] sm:$0xff]
        %v539 = vld [vmem:[%s277 + $0x418] sm:$0xff]
        %v540 = vld [vmem:[%s277 + $0x420] sm:$0xff]
        %v541 = vld [vmem:[%s277 + $0x428] sm:$0xff]
        %v542 = vld [vmem:[%s277 + $0x430] sm:$0xff]
        %v543 = vld [vmem:[%s277 + $0x438] sm:$0xff]
        %v544 = vld [vmem:[%s277 + $0x440] sm:$0xff]
        %v545 = vld [vmem:[%s277 + $0x448] sm:$0xff]
        %v546 = vld [vmem:[%s277 + $0x450] sm:$0xff]
        %v547 = vld [vmem:[%s277 + $0x458] sm:$0xff]
        %v548 = vld [vmem:[%s277 + $0x460] sm:$0xff]
        %v549 = vld [vmem:[%s277 + $0x468] sm:$0xff]
        %v550 = vld [vmem:[%s277 + $0x470] sm:$0xff]
        %v551 = vld [vmem:[%s277 + $0x478] sm:$0xff]
        %v552 = vld [vmem:[%s277 + $0x480] sm:$0xff]
        %v553 = vld [vmem:[%s277 + $0x488] sm:$0xff]
        %v554 = vld [vmem:[%s277 + $0x490] sm:$0xff]
        %v555 = vld [vmem:[%s277 + $0x498] sm:$0xff]
        %v556 = vld [vmem:[%s277 + $0x4a0] sm:$0xff]
        %v557 = vld [vmem:[%s277 + $0x4a8] sm:$0xff]
        %v558 = vld [vmem:[%s277 + $0x4b0] sm:$0xff]
        %v559 = vld [vmem:[%s277 + $0x4b8] sm:$0xff]
        %v560 = vld [vmem:[%s277 + $0x4c0] sm:$0xff]
        %v561 = vld [vmem:[%s277 + $0x4c8] sm:$0xff]
        %v562 = vld [vmem:[%s277 + $0x4d0] sm:$0xff]
        %v563 = vld [vmem:[%s277 + $0x4d8] sm:$0xff]
        %v564 = vld [vmem:[%s277 + $0x4e0] sm:$0xff]
        %v565 = vld [vmem:[%s277 + $0x4e8] sm:$0xff]
        %v566 = vld [vmem:[%s277 + $0x4f0] sm:$0xff]
        %v567 = vld [vmem:[%s277 + $0x4f8] sm:$0xff]
        %v568 = vld [vmem:[%s277 + $0x500] sm:$0xff]
        %v569 = vld [vmem:[%s277 + $0x508] sm:$0xff]
        %v570 = vld [vmem:[%s277 + $0x510] sm:$0xff]
        %v571 = vld [vmem:[%s277 + $0x518] sm:$0xff]
        %v572 = vld [vmem:[%s277 + $0x520] sm:$0xff]
        %v573 = vld [vmem:[%s277 + $0x528] sm:$0xff]
        %v574 = vld [vmem:[%s277 + $0x530] sm:$0xff]
        %v575 = vld [vmem:[%s277 + $0x538] sm:$0xff]
        %v576 = vld [vmem:[%s277 + $0x540] sm:$0xff]
        %v577 = vld [vmem:[%s277 + $0x548] sm:$0xff]
        %v578 = vld [vmem:[%s277 + $0x550] sm:$0xff]
        %v579 = vld [vmem:[%s277 + $0x558] sm:$0xff]
        %v580 = vld [vmem:[%s277 + $0x560] sm:$0xff]
        %v581 = vld [vmem:[%s277 + $0x568] sm:$0xff]
        %v582 = vld [vmem:[%s277 + $0x570] sm:$0xff]
        %v583 = vld [vmem:[%s277 + $0x578] sm:$0xff]
        %v584 = vld [vmem:[%s277 + $0x580] sm:$0xff]
        %v585 = vld [vmem:[%s277 + $0x588] sm:$0xff]
        %v586 = vld [vmem:[%s277 + $0x590] sm:$0xff]
        %v587 = vld [vmem:[%s277 + $0x598] sm:$0xff]
        %v588 = vld [vmem:[%s277 + $0x5a0] sm:$0xff]
        %v589 = vld [vmem:[%s277 + $0x5a8] sm:$0xff]
        %v590 = vld [vmem:[%s277 + $0x5b0] sm:$0xff]
        %v591 = vld [vmem:[%s277 + $0x5b8] sm:$0xff]
        %v592 = vld [vmem:[%s277 + $0x5c0] sm:$0xff]
        %v593 = vld [vmem:[%s277 + $0x5c8] sm:$0xff]
        %v594 = vld [vmem:[%s277 + $0x5d0] sm:$0xff]
        %v595 = vld [vmem:[%s277 + $0x5d8] sm:$0xff]
        %v596 = vld [vmem:[%s277 + $0x5e0] sm:$0xff]
        %v597 = vld [vmem:[%s277 + $0x5e8] sm:$0xff]
        %v598 = vld [vmem:[%s277 + $0x5f0] sm:$0xff]
        %v599 = vld [vmem:[%s277 + $0x5f8] sm:$0xff]
        %v600 = vld [vmem:[%s277 + $0x600] sm:$0xff]
        %v601 = vld [vmem:[%s277 + $0x608] sm:$0xff]
        %v602 = vld [vmem:[%s277 + $0x610] sm:$0xff]
        %v603 = vld [vmem:[%s277 + $0x618] sm:$0xff]
        %v604 = vld [vmem:[%s277 + $0x620] sm:$0xff]
        %v605 = vld [vmem:[%s277 + $0x628] sm:$0xff]
        %v606 = vld [vmem:[%s277 + $0x630] sm:$0xff]
        %v607 = vld [vmem:[%s277 + $0x638] sm:$0xff]
        %v608 = vld [vmem:[%s277 + $0x640] sm:$0xff]
        %v609 = vld [vmem:[%s277 + $0x648] sm:$0xff]
        %v610 = vld [vmem:[%s277 + $0x650] sm:$0xff]
        %v611 = vld [vmem:[%s277 + $0x658] sm:$0xff]
        %v612 = vld [vmem:[%s277 + $0x660] sm:$0xff]
        %v613 = vld [vmem:[%s277 + $0x668] sm:$0xff]
        %v614 = vld [vmem:[%s277 + $0x670] sm:$0xff]
        %v615 = vld [vmem:[%s277 + $0x678] sm:$0xff]
        %v616 = vld [vmem:[%s277 + $0x680] sm:$0xff]
        %v617 = vld [vmem:[%s277 + $0x688] sm:$0xff]
        %v618 = vld [vmem:[%s277 + $0x690] sm:$0xff]
        %v619 = vld [vmem:[%s277 + $0x698] sm:$0xff]
        %v620 = vld [vmem:[%s277 + $0x6a0] sm:$0xff]
        %v621 = vld [vmem:[%s277 + $0x6a8] sm:$0xff]
        %v622 = vld [vmem:[%s277 + $0x6b0] sm:$0xff]
        %v623 = vld [vmem:[%s277 + $0x6b8] sm:$0xff]
        %v624 = vld [vmem:[%s277 + $0x6c0] sm:$0xff]
        %v625 = vld [vmem:[%s277 + $0x6c8] sm:$0xff]
        %v626 = vld [vmem:[%s277 + $0x6d0] sm:$0xff]
        %v627 = vld [vmem:[%s277 + $0x6d8] sm:$0xff]
        %v628 = vld [vmem:[%s277 + $0x6e0] sm:$0xff]
        %v629 = vld [vmem:[%s277 + $0x6e8] sm:$0xff]
        %v630 = vld [vmem:[%s277 + $0x6f0] sm:$0xff]
        %v631 = vld [vmem:[%s277 + $0x6f8] sm:$0xff]
        %v632 = vld [vmem:[%s277 + $0x700] sm:$0xff]
        %v633 = vld [vmem:[%s277 + $0x708] sm:$0xff]
        %v634 = vld [vmem:[%s277 + $0x710] sm:$0xff]
        %v635 = vld [vmem:[%s277 + $0x718] sm:$0xff]
        %v636 = vld [vmem:[%s277 + $0x720] sm:$0xff]
        %v637 = vld [vmem:[%s277 + $0x728] sm:$0xff]
        %v638 = vld [vmem:[%s277 + $0x730] sm:$0xff]
        %v639 = vld [vmem:[%s277 + $0x738] sm:$0xff]
        %v640 = vld [vmem:[%s277 + $0x740] sm:$0xff]
        %v641 = vld [vmem:[%s277 + $0x748] sm:$0xff]
        %v642 = vld [vmem:[%s277 + $0x750] sm:$0xff]
        %v643 = vld [vmem:[%s277 + $0x758] sm:$0xff]
        %v644 = vld [vmem:[%s277 + $0x760] sm:$0xff]
        %v645 = vld [vmem:[%s277 + $0x768] sm:$0xff]
        %v646 = vld [vmem:[%s277 + $0x770] sm:$0xff]
        %v647 = vld [vmem:[%s277 + $0x778] sm:$0xff]
        %v648 = vld [vmem:[%s277 + $0x780] sm:$0xff]
        %v649 = vld [vmem:[%s277 + $0x788] sm:$0xff]
        %v650 = vld [vmem:[%s277 + $0x790] sm:$0xff]
        %v651 = vld [vmem:[%s277 + $0x798] sm:$0xff]
        %v652 = vld [vmem:[%s277 + $0x7a0] sm:$0xff]
        %v653 = vld [vmem:[%s277 + $0x7a8] sm:$0xff]
        %v654 = vld [vmem:[%s277 + $0x7b0] sm:$0xff]
        %v655 = vld [vmem:[%s277 + $0x7b8] sm:$0xff]
        %v656 = vld [vmem:[%s277 + $0x7c0] sm:$0xff]
        %v657 = vld [vmem:[%s277 + $0x7c8] sm:$0xff]
        %v658 = vld [vmem:[%s277 + $0x7d0] sm:$0xff]
        %v659 = vld [vmem:[%s277 + $0x7d8] sm:$0xff]
        %v660 = vld [vmem:[%s277 + $0x7e0] sm:$0xff]
        %v661 = vld [vmem:[%s277 + $0x7e8] sm:$0xff]
        %v662 = vld [vmem:[%s277 + $0x7f0] sm:$0xff]
        %v663 = vld [vmem:[%s277 + $0x7f8] sm:$0xff]
        %v664 = vld [vmem:[%s277 + $0x800] sm:$0xff]
        %v665 = vld [vmem:[%s277 + $0x808] sm:$0xff]
        %v666 = vld [vmem:[%s277 + $0x810] sm:$0xff]
        %v667 = vld [vmem:[%s277 + $0x818] sm:$0xff]
        %v668 = vld [vmem:[%s277 + $0x820] sm:$0xff]
        %v669 = vld [vmem:[%s277 + $0x828] sm:$0xff]
        %v670 = vld [vmem:[%s277 + $0x830] sm:$0xff]
        %v671 = vld [vmem:[%s277 + $0x838] sm:$0xff]
        %v672 = vld [vmem:[%s277 + $0x840] sm:$0xff]
        %v673 = vld [vmem:[%s277 + $0x848] sm:$0xff]
        %v674 = vld [vmem:[%s277 + $0x850] sm:$0xff]
        %v675 = vld [vmem:[%s277 + $0x858] sm:$0xff]
        %v676 = vld [vmem:[%s277 + $0x860] sm:$0xff]
        %v677 = vld [vmem:[%s277 + $0x868] sm:$0xff]
        %v678 = vld [vmem:[%s277 + $0x870] sm:$0xff]
        %v679 = vld [vmem:[%s277 + $0x878] sm:$0xff]
        %v680 = vld [vmem:[%s277 + $0x880] sm:$0xff]
        %v681 = vld [vmem:[%s277 + $0x888] sm:$0xff]
        %v682 = vld [vmem:[%s277 + $0x890] sm:$0xff]
        %v683 = vld [vmem:[%s277 + $0x898] sm:$0xff]
        %v684 = vld [vmem:[%s277 + $0x8a0] sm:$0xff]
        %v685 = vld [vmem:[%s277 + $0x8a8] sm:$0xff]
        %v686 = vld [vmem:[%s277 + $0x8b0] sm:$0xff]
        %v687 = vld [vmem:[%s277 + $0x8b8] sm:$0xff]
        %v688 = vld [vmem:[%s277 + $0x8c0] sm:$0xff]
        %v689 = vld [vmem:[%s277 + $0x8c8] sm:$0xff]
        %v690 = vld [vmem:[%s277 + $0x8d0] sm:$0xff]
        %v691 = vld [vmem:[%s277 + $0x8d8] sm:$0xff]
        %v692 = vld [vmem:[%s277 + $0x8e0] sm:$0xff]
        %v693 = vld [vmem:[%s277 + $0x8e8] sm:$0xff]
        %v694 = vld [vmem:[%s277 + $0x8f0] sm:$0xff]
        %v695 = vld [vmem:[%s277 + $0x8f8] sm:$0xff]
        %v696 = vld [vmem:[%s277 + $0x900] sm:$0xff]
        %v697 = vld [vmem:[%s277 + $0x908] sm:$0xff]
        %v698 = vld [vmem:[%s277 + $0x910] sm:$0xff]
        %v699 = vld [vmem:[%s277 + $0x918] sm:$0xff]
        %v700 = vld [vmem:[%s277 + $0x920] sm:$0xff]
        %v701 = vld [vmem:[%s277 + $0x928] sm:$0xff]
        %v702 = vld [vmem:[%s277 + $0x930] sm:$0xff]
        %v703 = vld [vmem:[%s277 + $0x938] sm:$0xff]
        %v704 = vld [vmem:[%s277 + $0x940] sm:$0xff]
        %v705 = vld [vmem:[%s277 + $0x948] sm:$0xff]
        %v706 = vld [vmem:[%s277 + $0x950] sm:$0xff]
        %v707 = vld [vmem:[%s277 + $0x958] sm:$0xff]
        %v708 = vld [vmem:[%s277 + $0x960] sm:$0xff]
        %v709 = vld [vmem:[%s277 + $0x968] sm:$0xff]
        %v710 = vld [vmem:[%s277 + $0x970] sm:$0xff]
        %v711 = vld [vmem:[%s277 + $0x978] sm:$0xff]
        %v712 = vld [vmem:[%s277 + $0x980] sm:$0xff]
        %v713 = vld [vmem:[%s277 + $0x988] sm:$0xff]
        %v714 = vld [vmem:[%s277 + $0x990] sm:$0xff]
        %v715 = vld [vmem:[%s277 + $0x998] sm:$0xff]
        %v716 = vld [vmem:[%s277 + $0x9a0] sm:$0xff]
        %v717 = vld [vmem:[%s277 + $0x9a8] sm:$0xff]
        %v718 = vld [vmem:[%s277 + $0x9b0] sm:$0xff]
        %v719 = vld [vmem:[%s277 + $0x9b8] sm:$0xff]
        %v720 = vld [vmem:[%s277 + $0x9c0] sm:$0xff]
        %v721 = vld [vmem:[%s277 + $0x9c8] sm:$0xff]
        %v722 = vld [vmem:[%s277 + $0x9d0] sm:$0xff]
        %v723 = vld [vmem:[%s277 + $0x9d8] sm:$0xff]
        %v724 = vld [vmem:[%s277 + $0x9e0] sm:$0xff]
        %v725 = vld [vmem:[%s277 + $0x9e8] sm:$0xff]
        %v726 = vld [vmem:[%s277 + $0x9f0] sm:$0xff]
        %v727 = vld [vmem:[%s277 + $0x9f8] sm:$0xff]
        %v728 = vld [vmem:[%s277 + $0xa00] sm:$0xff]
        %v729 = vld [vmem:[%s277 + $0xa08] sm:$0xff]
        %v730 = vld [vmem:[%s277 + $0xa10] sm:$0xff]
        %v731 = vld [vmem:[%s277 + $0xa18] sm:$0xff]
        %v732 = vld [vmem:[%s277 + $0xa20] sm:$0xff]
        %v733 = vld [vmem:[%s277 + $0xa28] sm:$0xff]
        %v734 = vld [vmem:[%s277 + $0xa30] sm:$0xff]
        %v735 = vld [vmem:[%s277 + $0xa38] sm:$0xff]
        %v736 = vld [vmem:[%s277 + $0xa40] sm:$0xff]
        %v737 = vld [vmem:[%s277 + $0xa48] sm:$0xff]
        %v738 = vld [vmem:[%s277 + $0xa50] sm:$0xff]
        %v739 = vld [vmem:[%s277 + $0xa58] sm:$0xff]
        %v740 = vld [vmem:[%s277 + $0xa60] sm:$0xff]
        %v741 = vld [vmem:[%s277 + $0xa68] sm:$0xff]
        %v742 = vld [vmem:[%s277 + $0xa70] sm:$0xff]
        %v743 = vld [vmem:[%s277 + $0xa78] sm:$0xff]
        %v744 = vld [vmem:[%s277 + $0xa80] sm:$0xff]
        %v745 = vld [vmem:[%s277 + $0xa88] sm:$0xff]
        %v746 = vld [vmem:[%s277 + $0xa90] sm:$0xff]
        %v747 = vld [vmem:[%s277 + $0xa98] sm:$0xff]
        %v748 = vld [vmem:[%s277 + $0xaa0] sm:$0xff]
        %v749 = vld [vmem:[%s277 + $0xaa8] sm:$0xff]
        %v750 = vld [vmem:[%s277 + $0xab0] sm:$0xff]
        %v751 = vld [vmem:[%s277 + $0xab8] sm:$0xff]
        %v752 = vld [vmem:[%s277 + $0xac0] sm:$0xff]
        %v753 = vld [vmem:[%s277 + $0xac8] sm:$0xff]
        %v754 = vld [vmem:[%s277 + $0xad0] sm:$0xff]
        %v755 = vld [vmem:[%s277 + $0xad8] sm:$0xff]
        %v756 = vld [vmem:[%s277 + $0xae0] sm:$0xff]
        %v757 = vld [vmem:[%s277 + $0xae8] sm:$0xff]
        %v758 = vld [vmem:[%s277 + $0xaf0] sm:$0xff]
        %v759 = vld [vmem:[%s277 + $0xaf8] sm:$0xff]
        %v760 = vld [vmem:[%s277 + $0xb00] sm:$0xff]
        %v761 = vld [vmem:[%s277 + $0xb08] sm:$0xff]
        %v762 = vld [vmem:[%s277 + $0xb10] sm:$0xff]
        %v763 = vld [vmem:[%s277 + $0xb18] sm:$0xff]
        %v764 = vld [vmem:[%s277 + $0xb20] sm:$0xff]
        %v765 = vld [vmem:[%s277 + $0xb28] sm:$0xff]
        %v766 = vld [vmem:[%s277 + $0xb30] sm:$0xff]
        %v767 = vld [vmem:[%s277 + $0xb38] sm:$0xff]
        %v768 = vld [vmem:[%s277 + $0xb40] sm:$0xff]
        %v769 = vld [vmem:[%s277 + $0xb48] sm:$0xff]
        %v770 = vld [vmem:[%s277 + $0xb50] sm:$0xff]
        %v771 = vld [vmem:[%s277 + $0xb58] sm:$0xff]
        %v772 = vld [vmem:[%s277 + $0xb60] sm:$0xff]
        %v773 = vld [vmem:[%s277 + $0xb68] sm:$0xff]
        %v774 = vld [vmem:[%s277 + $0xb70] sm:$0xff]
        %v775 = vld [vmem:[%s277 + $0xb78] sm:$0xff]
        %v776 = vld [vmem:[%s277 + $0xb80] sm:$0xff]
        %v777 = vld [vmem:[%s277 + $0xb88] sm:$0xff]
        %v778 = vld [vmem:[%s277 + $0xb90] sm:$0xff]
        %v779 = vld [vmem:[%s277 + $0xb98] sm:$0xff]
        %v780 = vld [vmem:[%s277 + $0xba0] sm:$0xff]
        %v781 = vld [vmem:[%s277 + $0xba8] sm:$0xff]
        %v782 = vld [vmem:[%s277 + $0xbb0] sm:$0xff]
        %v783 = vld [vmem:[%s277 + $0xbb8] sm:$0xff]
        %v784 = vld [vmem:[%s277 + $0xbc0] sm:$0xff]
        %v785 = vld [vmem:[%s277 + $0xbc8] sm:$0xff]
        %v786 = vld [vmem:[%s277 + $0xbd0] sm:$0xff]
        %v787 = vld [vmem:[%s277 + $0xbd8] sm:$0xff]
        %v788 = vld [vmem:[%s277 + $0xbe0] sm:$0xff]
        %v789 = vld [vmem:[%s277 + $0xbe8] sm:$0xff]
        %v790 = vld [vmem:[%s277 + $0xbf0] sm:$0xff]
        %v791 = vld [vmem:[%s277 + $0xbf8] sm:$0xff]
        %v792 = vunpack.c.l.bf16 %v408
        %v793 = vunpack.c.h.bf16 %v408
        %v794 = vunpack.c.l.bf16 %v409
        %v795 = vunpack.c.h.bf16 %v409
        %v796 = vunpack.c.l.bf16 %v410
        %v797 = vunpack.c.h.bf16 %v410
        %v798 = vunpack.c.l.bf16 %v411
        %v799 = vunpack.c.h.bf16 %v411
        %v800 = vunpack.c.l.bf16 %v412
        %v801 = vunpack.c.h.bf16 %v412
        %v802 = vunpack.c.l.bf16 %v413
        %v803 = vunpack.c.h.bf16 %v413
        %v804 = vunpack.c.l.bf16 %v414
        %v805 = vunpack.c.h.bf16 %v414
        %v806 = vunpack.c.l.bf16 %v415
        %v807 = vunpack.c.h.bf16 %v415
        %v808 = vunpack.c.l.bf16 %v416
        %v809 = vunpack.c.h.bf16 %v416
        %v810 = vunpack.c.l.bf16 %v417
        %v811 = vunpack.c.h.bf16 %v417
        %v812 = vunpack.c.l.bf16 %v418
        %v813 = vunpack.c.h.bf16 %v418
        %v814 = vunpack.c.l.bf16 %v419
        %v815 = vunpack.c.h.bf16 %v419
        %v816 = vunpack.c.l.bf16 %v420
        %v817 = vunpack.c.h.bf16 %v420
        %v818 = vunpack.c.l.bf16 %v421
        %v819 = vunpack.c.h.bf16 %v421
        %v820 = vunpack.c.l.bf16 %v422
        %v821 = vunpack.c.h.bf16 %v422
        %v822 = vunpack.c.l.bf16 %v423
        %v823 = vunpack.c.h.bf16 %v423
        %v824 = vunpack.c.l.bf16 %v424
        %v825 = vunpack.c.h.bf16 %v424
        %v826 = vunpack.c.l.bf16 %v425
        %v827 = vunpack.c.h.bf16 %v425
        %v828 = vunpack.c.l.bf16 %v426
        %v829 = vunpack.c.h.bf16 %v426
        %v830 = vunpack.c.l.bf16 %v427
        %v831 = vunpack.c.h.bf16 %v427
        %v832 = vunpack.c.l.bf16 %v428
        %v833 = vunpack.c.h.bf16 %v428
        %v834 = vunpack.c.l.bf16 %v429
        %v835 = vunpack.c.h.bf16 %v429
        %v836 = vunpack.c.l.bf16 %v430
        %v837 = vunpack.c.h.bf16 %v430
        %v838 = vunpack.c.l.bf16 %v431
        %v839 = vunpack.c.h.bf16 %v431
        %v840 = vunpack.c.l.bf16 %v432
        %v841 = vunpack.c.h.bf16 %v432
        %v842 = vunpack.c.l.bf16 %v433
        %v843 = vunpack.c.h.bf16 %v433
        %v844 = vunpack.c.l.bf16 %v434
        %v845 = vunpack.c.h.bf16 %v434
        %v846 = vunpack.c.l.bf16 %v435
        %v847 = vunpack.c.h.bf16 %v435
        %v848 = vunpack.c.l.bf16 %v436
        %v849 = vunpack.c.h.bf16 %v436
        %v850 = vunpack.c.l.bf16 %v437
        %v851 = vunpack.c.h.bf16 %v437
        %v852 = vunpack.c.l.bf16 %v438
        %v853 = vunpack.c.h.bf16 %v438
        %v854 = vunpack.c.l.bf16 %v439
        %v855 = vunpack.c.h.bf16 %v439
        %v856 = vunpack.c.l.bf16 %v440
        %v857 = vunpack.c.h.bf16 %v440
        %v858 = vunpack.c.l.bf16 %v441
        %v859 = vunpack.c.h.bf16 %v441
        %v860 = vunpack.c.l.bf16 %v442
        %v861 = vunpack.c.h.bf16 %v442
        %v862 = vunpack.c.l.bf16 %v443
        %v863 = vunpack.c.h.bf16 %v443
        %v864 = vunpack.c.l.bf16 %v444
        %v865 = vunpack.c.h.bf16 %v444
        %v866 = vunpack.c.l.bf16 %v445
        %v867 = vunpack.c.h.bf16 %v445
        %v868 = vunpack.c.l.bf16 %v446
        %v869 = vunpack.c.h.bf16 %v446
        %v870 = vunpack.c.l.bf16 %v447
        %v871 = vunpack.c.h.bf16 %v447
        %v872 = vunpack.c.l.bf16 %v448
        %v873 = vunpack.c.h.bf16 %v448
        %v874 = vunpack.c.l.bf16 %v449
        %v875 = vunpack.c.h.bf16 %v449
        %v876 = vunpack.c.l.bf16 %v450
        %v877 = vunpack.c.h.bf16 %v450
        %v878 = vunpack.c.l.bf16 %v451
        %v879 = vunpack.c.h.bf16 %v451
        %v880 = vunpack.c.l.bf16 %v452
        %v881 = vunpack.c.h.bf16 %v452
        %v882 = vunpack.c.l.bf16 %v453
        %v883 = vunpack.c.h.bf16 %v453
        %v884 = vunpack.c.l.bf16 %v454
        %v885 = vunpack.c.h.bf16 %v454
        %v886 = vunpack.c.l.bf16 %v455
        %v887 = vunpack.c.h.bf16 %v455
        %v888 = vunpack.c.l.bf16 %v456
        %v889 = vunpack.c.h.bf16 %v456
        %v890 = vunpack.c.l.bf16 %v457
        %v891 = vunpack.c.h.bf16 %v457
        %v892 = vunpack.c.l.bf16 %v458
        %v893 = vunpack.c.h.bf16 %v458
        %v894 = vunpack.c.l.bf16 %v459
        %v895 = vunpack.c.h.bf16 %v459
        %v896 = vunpack.c.l.bf16 %v460
        %v897 = vunpack.c.h.bf16 %v460
        %v898 = vunpack.c.l.bf16 %v461
        %v899 = vunpack.c.h.bf16 %v461
        %v900 = vunpack.c.l.bf16 %v462
        %v901 = vunpack.c.h.bf16 %v462
        %v902 = vunpack.c.l.bf16 %v463
        %v903 = vunpack.c.h.bf16 %v463
        %v904 = vunpack.c.l.bf16 %v464
        %v905 = vunpack.c.h.bf16 %v464
        %v906 = vunpack.c.l.bf16 %v465
        %v907 = vunpack.c.h.bf16 %v465
        %v908 = vunpack.c.l.bf16 %v466
        %v909 = vunpack.c.h.bf16 %v466
        %v910 = vunpack.c.l.bf16 %v467
        %v911 = vunpack.c.h.bf16 %v467
        %v912 = vunpack.c.l.bf16 %v468
        %v913 = vunpack.c.h.bf16 %v468
        %v914 = vunpack.c.l.bf16 %v469
        %v915 = vunpack.c.h.bf16 %v469
        %v916 = vunpack.c.l.bf16 %v470
        %v917 = vunpack.c.h.bf16 %v470
        %v918 = vunpack.c.l.bf16 %v471
        %v919 = vunpack.c.h.bf16 %v471
        %v920 = vunpack.c.l.bf16 %v472
        %v921 = vunpack.c.h.bf16 %v472
        %v922 = vunpack.c.l.bf16 %v473
        %v923 = vunpack.c.h.bf16 %v473
        %v924 = vunpack.c.l.bf16 %v474
        %v925 = vunpack.c.h.bf16 %v474
        %v926 = vunpack.c.l.bf16 %v475
        %v927 = vunpack.c.h.bf16 %v475
        %v928 = vunpack.c.l.bf16 %v476
        %v929 = vunpack.c.h.bf16 %v476
        %v930 = vunpack.c.l.bf16 %v477
        %v931 = vunpack.c.h.bf16 %v477
        %v932 = vunpack.c.l.bf16 %v478
        %v933 = vunpack.c.h.bf16 %v478
        %v934 = vunpack.c.l.bf16 %v479
        %v935 = vunpack.c.h.bf16 %v479
        %v936 = vunpack.c.l.bf16 %v480
        %v937 = vunpack.c.h.bf16 %v480
        %v938 = vunpack.c.l.bf16 %v481
        %v939 = vunpack.c.h.bf16 %v481
        %v940 = vunpack.c.l.bf16 %v482
        %v941 = vunpack.c.h.bf16 %v482
        %v942 = vunpack.c.l.bf16 %v483
        %v943 = vunpack.c.h.bf16 %v483
        %v944 = vunpack.c.l.bf16 %v484
        %v945 = vunpack.c.h.bf16 %v484
        %v946 = vunpack.c.l.bf16 %v485
        %v947 = vunpack.c.h.bf16 %v485
        %v948 = vunpack.c.l.bf16 %v486
        %v949 = vunpack.c.h.bf16 %v486
        %v950 = vunpack.c.l.bf16 %v487
        %v951 = vunpack.c.h.bf16 %v487
        %v952 = vunpack.c.l.bf16 %v488
        %v953 = vunpack.c.h.bf16 %v488
        %v954 = vunpack.c.l.bf16 %v489
        %v955 = vunpack.c.h.bf16 %v489
        %v956 = vunpack.c.l.bf16 %v490
        %v957 = vunpack.c.h.bf16 %v490
        %v958 = vunpack.c.l.bf16 %v491
        %v959 = vunpack.c.h.bf16 %v491
        %v960 = vunpack.c.l.bf16 %v492
        %v961 = vunpack.c.h.bf16 %v492
        %v962 = vunpack.c.l.bf16 %v493
        %v963 = vunpack.c.h.bf16 %v493
        %v964 = vunpack.c.l.bf16 %v494
        %v965 = vunpack.c.h.bf16 %v494
        %v966 = vunpack.c.l.bf16 %v495
        %v967 = vunpack.c.h.bf16 %v495
        %v968 = vunpack.c.l.bf16 %v496
        %v969 = vunpack.c.h.bf16 %v496
        %v970 = vunpack.c.l.bf16 %v497
        %v971 = vunpack.c.h.bf16 %v497
        %v972 = vunpack.c.l.bf16 %v498
        %v973 = vunpack.c.h.bf16 %v498
        %v974 = vunpack.c.l.bf16 %v499
        %v975 = vunpack.c.h.bf16 %v499
        %v976 = vunpack.c.l.bf16 %v500
        %v977 = vunpack.c.h.bf16 %v500
        %v978 = vunpack.c.l.bf16 %v501
        %v979 = vunpack.c.h.bf16 %v501
        %v980 = vunpack.c.l.bf16 %v502
        %v981 = vunpack.c.h.bf16 %v502
        %v982 = vunpack.c.l.bf16 %v503
        %v983 = vunpack.c.h.bf16 %v503
        %v984 = vunpack.c.l.bf16 %v504
        %v985 = vunpack.c.h.bf16 %v504
        %v986 = vunpack.c.l.bf16 %v505
        %v987 = vunpack.c.h.bf16 %v505
        %v988 = vunpack.c.l.bf16 %v506
        %v989 = vunpack.c.h.bf16 %v506
        %v990 = vunpack.c.l.bf16 %v507
        %v991 = vunpack.c.h.bf16 %v507
        %v992 = vunpack.c.l.bf16 %v508
        %v993 = vunpack.c.h.bf16 %v508
        %v994 = vunpack.c.l.bf16 %v509
        %v995 = vunpack.c.h.bf16 %v509
        %v996 = vunpack.c.l.bf16 %v510
        %v997 = vunpack.c.h.bf16 %v510
        %v998 = vunpack.c.l.bf16 %v511
        %v999 = vunpack.c.h.bf16 %v511
        %v1000 = vunpack.c.l.bf16 %v512
        %v1001 = vunpack.c.h.bf16 %v512
        %v1002 = vunpack.c.l.bf16 %v513
        %v1003 = vunpack.c.h.bf16 %v513
        %v1004 = vunpack.c.l.bf16 %v514
        %v1005 = vunpack.c.h.bf16 %v514
        %v1006 = vunpack.c.l.bf16 %v515
        %v1007 = vunpack.c.h.bf16 %v515
        %v1008 = vunpack.c.l.bf16 %v516
        %v1009 = vunpack.c.h.bf16 %v516
        %v1010 = vunpack.c.l.bf16 %v517
        %v1011 = vunpack.c.h.bf16 %v517
        %v1012 = vunpack.c.l.bf16 %v518
        %v1013 = vunpack.c.h.bf16 %v518
        %v1014 = vunpack.c.l.bf16 %v519
        %v1015 = vunpack.c.h.bf16 %v519
        %v1016 = vunpack.c.l.bf16 %v520
        %v1017 = vunpack.c.h.bf16 %v520
        %v1018 = vunpack.c.l.bf16 %v521
        %v1019 = vunpack.c.h.bf16 %v521
        %v1020 = vunpack.c.l.bf16 %v522
        %v1021 = vunpack.c.h.bf16 %v522
        %v1022 = vunpack.c.l.bf16 %v523
        %v1023 = vunpack.c.h.bf16 %v523
        %v1024 = vunpack.c.l.bf16 %v524
        %v1025 = vunpack.c.h.bf16 %v524
        %v1026 = vunpack.c.l.bf16 %v525
        %v1027 = vunpack.c.h.bf16 %v525
        %v1028 = vunpack.c.l.bf16 %v526
        %v1029 = vunpack.c.h.bf16 %v526
        %v1030 = vunpack.c.l.bf16 %v527
        %v1031 = vunpack.c.h.bf16 %v527
        %v1032 = vunpack.c.l.bf16 %v528
        %v1033 = vunpack.c.h.bf16 %v528
        %v1034 = vunpack.c.l.bf16 %v529
        %v1035 = vunpack.c.h.bf16 %v529
        %v1036 = vunpack.c.l.bf16 %v530
        %v1037 = vunpack.c.h.bf16 %v530
        %v1038 = vunpack.c.l.bf16 %v531
        %v1039 = vunpack.c.h.bf16 %v531
        %v1040 = vunpack.c.l.bf16 %v532
        %v1041 = vunpack.c.h.bf16 %v532
        %v1042 = vunpack.c.l.bf16 %v533
        %v1043 = vunpack.c.h.bf16 %v533
        %v1044 = vunpack.c.l.bf16 %v534
        %v1045 = vunpack.c.h.bf16 %v534
        %v1046 = vunpack.c.l.bf16 %v535
        %v1047 = vunpack.c.h.bf16 %v535
        %v1048 = vunpack.c.l.bf16 %v536
        %v1049 = vunpack.c.h.bf16 %v536
        %v1050 = vunpack.c.l.bf16 %v537
        %v1051 = vunpack.c.h.bf16 %v537
        %v1052 = vunpack.c.l.bf16 %v538
        %v1053 = vunpack.c.h.bf16 %v538
        %v1054 = vunpack.c.l.bf16 %v539
        %v1055 = vunpack.c.h.bf16 %v539
        %v1056 = vunpack.c.l.bf16 %v540
        %v1057 = vunpack.c.h.bf16 %v540
        %v1058 = vunpack.c.l.bf16 %v541
        %v1059 = vunpack.c.h.bf16 %v541
        %v1060 = vunpack.c.l.bf16 %v542
        %v1061 = vunpack.c.h.bf16 %v542
        %v1062 = vunpack.c.l.bf16 %v543
        %v1063 = vunpack.c.h.bf16 %v543
        %v1064 = vunpack.c.l.bf16 %v544
        %v1065 = vunpack.c.h.bf16 %v544
        %v1066 = vunpack.c.l.bf16 %v545
        %v1067 = vunpack.c.h.bf16 %v545
        %v1068 = vunpack.c.l.bf16 %v546
        %v1069 = vunpack.c.h.bf16 %v546
        %v1070 = vunpack.c.l.bf16 %v547
        %v1071 = vunpack.c.h.bf16 %v547
        %v1072 = vunpack.c.l.bf16 %v548
        %v1073 = vunpack.c.h.bf16 %v548
        %v1074 = vunpack.c.l.bf16 %v549
        %v1075 = vunpack.c.h.bf16 %v549
        %v1076 = vunpack.c.l.bf16 %v550
        %v1077 = vunpack.c.h.bf16 %v550
        %v1078 = vunpack.c.l.bf16 %v551
        %v1079 = vunpack.c.h.bf16 %v551
        %v1080 = vunpack.c.l.bf16 %v552
        %v1081 = vunpack.c.h.bf16 %v552
        %v1082 = vunpack.c.l.bf16 %v553
        %v1083 = vunpack.c.h.bf16 %v553
        %v1084 = vunpack.c.l.bf16 %v554
        %v1085 = vunpack.c.h.bf16 %v554
        %v1086 = vunpack.c.l.bf16 %v555
        %v1087 = vunpack.c.h.bf16 %v555
        %v1088 = vunpack.c.l.bf16 %v556
        %v1089 = vunpack.c.h.bf16 %v556
        %v1090 = vunpack.c.l.bf16 %v557
        %v1091 = vunpack.c.h.bf16 %v557
        %v1092 = vunpack.c.l.bf16 %v558
        %v1093 = vunpack.c.h.bf16 %v558
        %v1094 = vunpack.c.l.bf16 %v559
        %v1095 = vunpack.c.h.bf16 %v559
        %v1096 = vunpack.c.l.bf16 %v560
        %v1097 = vunpack.c.h.bf16 %v560
        %v1098 = vunpack.c.l.bf16 %v561
        %v1099 = vunpack.c.h.bf16 %v561
        %v1100 = vunpack.c.l.bf16 %v562
        %v1101 = vunpack.c.h.bf16 %v562
        %v1102 = vunpack.c.l.bf16 %v563
        %v1103 = vunpack.c.h.bf16 %v563
        %v1104 = vunpack.c.l.bf16 %v564
        %v1105 = vunpack.c.h.bf16 %v564
        %v1106 = vunpack.c.l.bf16 %v565
        %v1107 = vunpack.c.h.bf16 %v565
        %v1108 = vunpack.c.l.bf16 %v566
        %v1109 = vunpack.c.h.bf16 %v566
        %v1110 = vunpack.c.l.bf16 %v567
        %v1111 = vunpack.c.h.bf16 %v567
        %v1112 = vunpack.c.l.bf16 %v568
        %v1113 = vunpack.c.h.bf16 %v568
        %v1114 = vunpack.c.l.bf16 %v569
        %v1115 = vunpack.c.h.bf16 %v569
        %v1116 = vunpack.c.l.bf16 %v570
        %v1117 = vunpack.c.h.bf16 %v570
        %v1118 = vunpack.c.l.bf16 %v571
        %v1119 = vunpack.c.h.bf16 %v571
        %v1120 = vunpack.c.l.bf16 %v572
        %v1121 = vunpack.c.h.bf16 %v572
        %v1122 = vunpack.c.l.bf16 %v573
        %v1123 = vunpack.c.h.bf16 %v573
        %v1124 = vunpack.c.l.bf16 %v574
        %v1125 = vunpack.c.h.bf16 %v574
        %v1126 = vunpack.c.l.bf16 %v575
        %v1127 = vunpack.c.h.bf16 %v575
        %v1128 = vunpack.c.l.bf16 %v576
        %v1129 = vunpack.c.h.bf16 %v576
        %v1130 = vunpack.c.l.bf16 %v577
        %v1131 = vunpack.c.h.bf16 %v577
        %v1132 = vunpack.c.l.bf16 %v578
        %v1133 = vunpack.c.h.bf16 %v578
        %v1134 = vunpack.c.l.bf16 %v579
        %v1135 = vunpack.c.h.bf16 %v579
        %v1136 = vunpack.c.l.bf16 %v580
        %v1137 = vunpack.c.h.bf16 %v580
        %v1138 = vunpack.c.l.bf16 %v581
        %v1139 = vunpack.c.h.bf16 %v581
        %v1140 = vunpack.c.l.bf16 %v582
        %v1141 = vunpack.c.h.bf16 %v582
        %v1142 = vunpack.c.l.bf16 %v583
        %v1143 = vunpack.c.h.bf16 %v583
        %v1144 = vunpack.c.l.bf16 %v584
        %v1145 = vunpack.c.h.bf16 %v584
        %v1146 = vunpack.c.l.bf16 %v585
        %v1147 = vunpack.c.h.bf16 %v585
        %v1148 = vunpack.c.l.bf16 %v586
        %v1149 = vunpack.c.h.bf16 %v586
        %v1150 = vunpack.c.l.bf16 %v587
        %v1151 = vunpack.c.h.bf16 %v587
        %v1152 = vunpack.c.l.bf16 %v588
        %v1153 = vunpack.c.h.bf16 %v588
        %v1154 = vunpack.c.l.bf16 %v589
        %v1155 = vunpack.c.h.bf16 %v589
        %v1156 = vunpack.c.l.bf16 %v590
        %v1157 = vunpack.c.h.bf16 %v590
        %v1158 = vunpack.c.l.bf16 %v591
        %v1159 = vunpack.c.h.bf16 %v591
        %v1160 = vunpack.c.l.bf16 %v592
        %v1161 = vunpack.c.h.bf16 %v592
        %v1162 = vunpack.c.l.bf16 %v593
        %v1163 = vunpack.c.h.bf16 %v593
        %v1164 = vunpack.c.l.bf16 %v594
        %v1165 = vunpack.c.h.bf16 %v594
        %v1166 = vunpack.c.l.bf16 %v595
        %v1167 = vunpack.c.h.bf16 %v595
        %v1168 = vunpack.c.l.bf16 %v596
        %v1169 = vunpack.c.h.bf16 %v596
        %v1170 = vunpack.c.l.bf16 %v597
        %v1171 = vunpack.c.h.bf16 %v597
        %v1172 = vunpack.c.l.bf16 %v598
        %v1173 = vunpack.c.h.bf16 %v598
        %v1174 = vunpack.c.l.bf16 %v599
        %v1175 = vunpack.c.h.bf16 %v599
        %v1176 = vunpack.c.l.bf16 %v600
        %v1177 = vunpack.c.h.bf16 %v600
        %v1178 = vunpack.c.l.bf16 %v601
        %v1179 = vunpack.c.h.bf16 %v601
        %v1180 = vunpack.c.l.bf16 %v602
        %v1181 = vunpack.c.h.bf16 %v602
        %v1182 = vunpack.c.l.bf16 %v603
        %v1183 = vunpack.c.h.bf16 %v603
        %v1184 = vunpack.c.l.bf16 %v604
        %v1185 = vunpack.c.h.bf16 %v604
        %v1186 = vunpack.c.l.bf16 %v605
        %v1187 = vunpack.c.h.bf16 %v605
        %v1188 = vunpack.c.l.bf16 %v606
        %v1189 = vunpack.c.h.bf16 %v606
        %v1190 = vunpack.c.l.bf16 %v607
        %v1191 = vunpack.c.h.bf16 %v607
        %v1192 = vunpack.c.l.bf16 %v608
        %v1193 = vunpack.c.h.bf16 %v608
        %v1194 = vunpack.c.l.bf16 %v609
        %v1195 = vunpack.c.h.bf16 %v609
        %v1196 = vunpack.c.l.bf16 %v610
        %v1197 = vunpack.c.h.bf16 %v610
        %v1198 = vunpack.c.l.bf16 %v611
        %v1199 = vunpack.c.h.bf16 %v611
        %v1200 = vunpack.c.l.bf16 %v612
        %v1201 = vunpack.c.h.bf16 %v612
        %v1202 = vunpack.c.l.bf16 %v613
        %v1203 = vunpack.c.h.bf16 %v613
        %v1204 = vunpack.c.l.bf16 %v614
        %v1205 = vunpack.c.h.bf16 %v614
        %v1206 = vunpack.c.l.bf16 %v615
        %v1207 = vunpack.c.h.bf16 %v615
        %v1208 = vunpack.c.l.bf16 %v616
        %v1209 = vunpack.c.h.bf16 %v616
        %v1210 = vunpack.c.l.bf16 %v617
        %v1211 = vunpack.c.h.bf16 %v617
        %v1212 = vunpack.c.l.bf16 %v618
        %v1213 = vunpack.c.h.bf16 %v618
        %v1214 = vunpack.c.l.bf16 %v619
        %v1215 = vunpack.c.h.bf16 %v619
        %v1216 = vunpack.c.l.bf16 %v620
        %v1217 = vunpack.c.h.bf16 %v620
        %v1218 = vunpack.c.l.bf16 %v621
        %v1219 = vunpack.c.h.bf16 %v621
        %v1220 = vunpack.c.l.bf16 %v622
        %v1221 = vunpack.c.h.bf16 %v622
        %v1222 = vunpack.c.l.bf16 %v623
        %v1223 = vunpack.c.h.bf16 %v623
        %v1224 = vunpack.c.l.bf16 %v624
        %v1225 = vunpack.c.h.bf16 %v624
        %v1226 = vunpack.c.l.bf16 %v625
        %v1227 = vunpack.c.h.bf16 %v625
        %v1228 = vunpack.c.l.bf16 %v626
        %v1229 = vunpack.c.h.bf16 %v626
        %v1230 = vunpack.c.l.bf16 %v627
        %v1231 = vunpack.c.h.bf16 %v627
        %v1232 = vunpack.c.l.bf16 %v628
        %v1233 = vunpack.c.h.bf16 %v628
        %v1234 = vunpack.c.l.bf16 %v629
        %v1235 = vunpack.c.h.bf16 %v629
        %v1236 = vunpack.c.l.bf16 %v630
        %v1237 = vunpack.c.h.bf16 %v630
        %v1238 = vunpack.c.l.bf16 %v631
        %v1239 = vunpack.c.h.bf16 %v631
        %v1240 = vunpack.c.l.bf16 %v632
        %v1241 = vunpack.c.h.bf16 %v632
        %v1242 = vunpack.c.l.bf16 %v633
        %v1243 = vunpack.c.h.bf16 %v633
        %v1244 = vunpack.c.l.bf16 %v634
        %v1245 = vunpack.c.h.bf16 %v634
        %v1246 = vunpack.c.l.bf16 %v635
        %v1247 = vunpack.c.h.bf16 %v635
        %v1248 = vunpack.c.l.bf16 %v636
        %v1249 = vunpack.c.h.bf16 %v636
        %v1250 = vunpack.c.l.bf16 %v637
        %v1251 = vunpack.c.h.bf16 %v637
        %v1252 = vunpack.c.l.bf16 %v638
        %v1253 = vunpack.c.h.bf16 %v638
        %v1254 = vunpack.c.l.bf16 %v639
        %v1255 = vunpack.c.h.bf16 %v639
        %v1256 = vunpack.c.l.bf16 %v640
        %v1257 = vunpack.c.h.bf16 %v640
        %v1258 = vunpack.c.l.bf16 %v641
        %v1259 = vunpack.c.h.bf16 %v641
        %v1260 = vunpack.c.l.bf16 %v642
        %v1261 = vunpack.c.h.bf16 %v642
        %v1262 = vunpack.c.l.bf16 %v643
        %v1263 = vunpack.c.h.bf16 %v643
        %v1264 = vunpack.c.l.bf16 %v644
        %v1265 = vunpack.c.h.bf16 %v644
        %v1266 = vunpack.c.l.bf16 %v645
        %v1267 = vunpack.c.h.bf16 %v645
        %v1268 = vunpack.c.l.bf16 %v646
        %v1269 = vunpack.c.h.bf16 %v646
        %v1270 = vunpack.c.l.bf16 %v647
        %v1271 = vunpack.c.h.bf16 %v647
        %v1272 = vunpack.c.l.bf16 %v648
        %v1273 = vunpack.c.h.bf16 %v648
        %v1274 = vunpack.c.l.bf16 %v649
        %v1275 = vunpack.c.h.bf16 %v649
        %v1276 = vunpack.c.l.bf16 %v650
        %v1277 = vunpack.c.h.bf16 %v650
        %v1278 = vunpack.c.l.bf16 %v651
        %v1279 = vunpack.c.h.bf16 %v651
        %v1280 = vunpack.c.l.bf16 %v652
        %v1281 = vunpack.c.h.bf16 %v652
        %v1282 = vunpack.c.l.bf16 %v653
        %v1283 = vunpack.c.h.bf16 %v653
        %v1284 = vunpack.c.l.bf16 %v654
        %v1285 = vunpack.c.h.bf16 %v654
        %v1286 = vunpack.c.l.bf16 %v655
        %v1287 = vunpack.c.h.bf16 %v655
        %v1288 = vunpack.c.l.bf16 %v656
        %v1289 = vunpack.c.h.bf16 %v656
        %v1290 = vunpack.c.l.bf16 %v657
        %v1291 = vunpack.c.h.bf16 %v657
        %v1292 = vunpack.c.l.bf16 %v658
        %v1293 = vunpack.c.h.bf16 %v658
        %v1294 = vunpack.c.l.bf16 %v659
        %v1295 = vunpack.c.h.bf16 %v659
        %v1296 = vunpack.c.l.bf16 %v660
        %v1297 = vunpack.c.h.bf16 %v660
        %v1298 = vunpack.c.l.bf16 %v661
        %v1299 = vunpack.c.h.bf16 %v661
        %v1300 = vunpack.c.l.bf16 %v662
        %v1301 = vunpack.c.h.bf16 %v662
        %v1302 = vunpack.c.l.bf16 %v663
        %v1303 = vunpack.c.h.bf16 %v663
        %v1304 = vunpack.c.l.bf16 %v664
        %v1305 = vunpack.c.h.bf16 %v664
        %v1306 = vunpack.c.l.bf16 %v665
        %v1307 = vunpack.c.h.bf16 %v665
        %v1308 = vunpack.c.l.bf16 %v666
        %v1309 = vunpack.c.h.bf16 %v666
        %v1310 = vunpack.c.l.bf16 %v667
        %v1311 = vunpack.c.h.bf16 %v667
        %v1312 = vunpack.c.l.bf16 %v668
        %v1313 = vunpack.c.h.bf16 %v668
        %v1314 = vunpack.c.l.bf16 %v669
        %v1315 = vunpack.c.h.bf16 %v669
        %v1316 = vunpack.c.l.bf16 %v670
        %v1317 = vunpack.c.h.bf16 %v670
        %v1318 = vunpack.c.l.bf16 %v671
        %v1319 = vunpack.c.h.bf16 %v671
        %v1320 = vunpack.c.l.bf16 %v672
        %v1321 = vunpack.c.h.bf16 %v672
        %v1322 = vunpack.c.l.bf16 %v673
        %v1323 = vunpack.c.h.bf16 %v673
        %v1324 = vunpack.c.l.bf16 %v674
        %v1325 = vunpack.c.h.bf16 %v674
        %v1326 = vunpack.c.l.bf16 %v675
        %v1327 = vunpack.c.h.bf16 %v675
        %v1328 = vunpack.c.l.bf16 %v676
        %v1329 = vunpack.c.h.bf16 %v676
        %v1330 = vunpack.c.l.bf16 %v677
        %v1331 = vunpack.c.h.bf16 %v677
        %v1332 = vunpack.c.l.bf16 %v678
        %v1333 = vunpack.c.h.bf16 %v678
        %v1334 = vunpack.c.l.bf16 %v679
        %v1335 = vunpack.c.h.bf16 %v679
        %v1336 = vunpack.c.l.bf16 %v680
        %v1337 = vunpack.c.h.bf16 %v680
        %v1338 = vunpack.c.l.bf16 %v681
        %v1339 = vunpack.c.h.bf16 %v681
        %v1340 = vunpack.c.l.bf16 %v682
        %v1341 = vunpack.c.h.bf16 %v682
        %v1342 = vunpack.c.l.bf16 %v683
        %v1343 = vunpack.c.h.bf16 %v683
        %v1344 = vunpack.c.l.bf16 %v684
        %v1345 = vunpack.c.h.bf16 %v684
        %v1346 = vunpack.c.l.bf16 %v685
        %v1347 = vunpack.c.h.bf16 %v685
        %v1348 = vunpack.c.l.bf16 %v686
        %v1349 = vunpack.c.h.bf16 %v686
        %v1350 = vunpack.c.l.bf16 %v687
        %v1351 = vunpack.c.h.bf16 %v687
        %v1352 = vunpack.c.l.bf16 %v688
        %v1353 = vunpack.c.h.bf16 %v688
        %v1354 = vunpack.c.l.bf16 %v689
        %v1355 = vunpack.c.h.bf16 %v689
        %v1356 = vunpack.c.l.bf16 %v690
        %v1357 = vunpack.c.h.bf16 %v690
        %v1358 = vunpack.c.l.bf16 %v691
        %v1359 = vunpack.c.h.bf16 %v691
        %v1360 = vunpack.c.l.bf16 %v692
        %v1361 = vunpack.c.h.bf16 %v692
        %v1362 = vunpack.c.l.bf16 %v693
        %v1363 = vunpack.c.h.bf16 %v693
        %v1364 = vunpack.c.l.bf16 %v694
        %v1365 = vunpack.c.h.bf16 %v694
        %v1366 = vunpack.c.l.bf16 %v695
        %v1367 = vunpack.c.h.bf16 %v695
        %v1368 = vunpack.c.l.bf16 %v696
        %v1369 = vunpack.c.h.bf16 %v696
        %v1370 = vunpack.c.l.bf16 %v697
        %v1371 = vunpack.c.h.bf16 %v697
        %v1372 = vunpack.c.l.bf16 %v698
        %v1373 = vunpack.c.h.bf16 %v698
        %v1374 = vunpack.c.l.bf16 %v699
        %v1375 = vunpack.c.h.bf16 %v699
        %v1376 = vunpack.c.l.bf16 %v700
        %v1377 = vunpack.c.h.bf16 %v700
        %v1378 = vunpack.c.l.bf16 %v701
        %v1379 = vunpack.c.h.bf16 %v701
        %v1380 = vunpack.c.l.bf16 %v702
        %v1381 = vunpack.c.h.bf16 %v702
        %v1382 = vunpack.c.l.bf16 %v703
        %v1383 = vunpack.c.h.bf16 %v703
        %v1384 = vunpack.c.l.bf16 %v704
        %v1385 = vunpack.c.h.bf16 %v704
        %v1386 = vunpack.c.l.bf16 %v705
        %v1387 = vunpack.c.h.bf16 %v705
        %v1388 = vunpack.c.l.bf16 %v706
        %v1389 = vunpack.c.h.bf16 %v706
        %v1390 = vunpack.c.l.bf16 %v707
        %v1391 = vunpack.c.h.bf16 %v707
        %v1392 = vunpack.c.l.bf16 %v708
        %v1393 = vunpack.c.h.bf16 %v708
        %v1394 = vunpack.c.l.bf16 %v709
        %v1395 = vunpack.c.h.bf16 %v709
        %v1396 = vunpack.c.l.bf16 %v710
        %v1397 = vunpack.c.h.bf16 %v710
        %v1398 = vunpack.c.l.bf16 %v711
        %v1399 = vunpack.c.h.bf16 %v711
        %v1400 = vunpack.c.l.bf16 %v712
        %v1401 = vunpack.c.h.bf16 %v712
        %v1402 = vunpack.c.l.bf16 %v713
        %v1403 = vunpack.c.h.bf16 %v713
        %v1404 = vunpack.c.l.bf16 %v714
        %v1405 = vunpack.c.h.bf16 %v714
        %v1406 = vunpack.c.l.bf16 %v715
        %v1407 = vunpack.c.h.bf16 %v715
        %v1408 = vunpack.c.l.bf16 %v716
        %v1409 = vunpack.c.h.bf16 %v716
        %v1410 = vunpack.c.l.bf16 %v717
        %v1411 = vunpack.c.h.bf16 %v717
        %v1412 = vunpack.c.l.bf16 %v718
        %v1413 = vunpack.c.h.bf16 %v718
        %v1414 = vunpack.c.l.bf16 %v719
        %v1415 = vunpack.c.h.bf16 %v719
        %v1416 = vunpack.c.l.bf16 %v720
        %v1417 = vunpack.c.h.bf16 %v720
        %v1418 = vunpack.c.l.bf16 %v721
        %v1419 = vunpack.c.h.bf16 %v721
        %v1420 = vunpack.c.l.bf16 %v722
        %v1421 = vunpack.c.h.bf16 %v722
        %v1422 = vunpack.c.l.bf16 %v723
        %v1423 = vunpack.c.h.bf16 %v723
        %v1424 = vunpack.c.l.bf16 %v724
        %v1425 = vunpack.c.h.bf16 %v724
        %v1426 = vunpack.c.l.bf16 %v725
        %v1427 = vunpack.c.h.bf16 %v725
        %v1428 = vunpack.c.l.bf16 %v726
        %v1429 = vunpack.c.h.bf16 %v726
        %v1430 = vunpack.c.l.bf16 %v727
        %v1431 = vunpack.c.h.bf16 %v727
        %v1432 = vunpack.c.l.bf16 %v728
        %v1433 = vunpack.c.h.bf16 %v728
        %v1434 = vunpack.c.l.bf16 %v729
        %v1435 = vunpack.c.h.bf16 %v729
        %v1436 = vunpack.c.l.bf16 %v730
        %v1437 = vunpack.c.h.bf16 %v730
        %v1438 = vunpack.c.l.bf16 %v731
        %v1439 = vunpack.c.h.bf16 %v731
        %v1440 = vunpack.c.l.bf16 %v732
        %v1441 = vunpack.c.h.bf16 %v732
        %v1442 = vunpack.c.l.bf16 %v733
        %v1443 = vunpack.c.h.bf16 %v733
        %v1444 = vunpack.c.l.bf16 %v734
        %v1445 = vunpack.c.h.bf16 %v734
        %v1446 = vunpack.c.l.bf16 %v735
        %v1447 = vunpack.c.h.bf16 %v735
        %v1448 = vunpack.c.l.bf16 %v736
        %v1449 = vunpack.c.h.bf16 %v736
        %v1450 = vunpack.c.l.bf16 %v737
        %v1451 = vunpack.c.h.bf16 %v737
        %v1452 = vunpack.c.l.bf16 %v738
        %v1453 = vunpack.c.h.bf16 %v738
        %v1454 = vunpack.c.l.bf16 %v739
        %v1455 = vunpack.c.h.bf16 %v739
        %v1456 = vunpack.c.l.bf16 %v740
        %v1457 = vunpack.c.h.bf16 %v740
        %v1458 = vunpack.c.l.bf16 %v741
        %v1459 = vunpack.c.h.bf16 %v741
        %v1460 = vunpack.c.l.bf16 %v742
        %v1461 = vunpack.c.h.bf16 %v742
        %v1462 = vunpack.c.l.bf16 %v743
        %v1463 = vunpack.c.h.bf16 %v743
        %v1464 = vunpack.c.l.bf16 %v744
        %v1465 = vunpack.c.h.bf16 %v744
        %v1466 = vunpack.c.l.bf16 %v745
        %v1467 = vunpack.c.h.bf16 %v745
        %v1468 = vunpack.c.l.bf16 %v746
        %v1469 = vunpack.c.h.bf16 %v746
        %v1470 = vunpack.c.l.bf16 %v747
        %v1471 = vunpack.c.h.bf16 %v747
        %v1472 = vunpack.c.l.bf16 %v748
        %v1473 = vunpack.c.h.bf16 %v748
        %v1474 = vunpack.c.l.bf16 %v749
        %v1475 = vunpack.c.h.bf16 %v749
        %v1476 = vunpack.c.l.bf16 %v750
        %v1477 = vunpack.c.h.bf16 %v750
        %v1478 = vunpack.c.l.bf16 %v751
        %v1479 = vunpack.c.h.bf16 %v751
        %v1480 = vunpack.c.l.bf16 %v752
        %v1481 = vunpack.c.h.bf16 %v752
        %v1482 = vunpack.c.l.bf16 %v753
        %v1483 = vunpack.c.h.bf16 %v753
        %v1484 = vunpack.c.l.bf16 %v754
        %v1485 = vunpack.c.h.bf16 %v754
        %v1486 = vunpack.c.l.bf16 %v755
        %v1487 = vunpack.c.h.bf16 %v755
        %v1488 = vunpack.c.l.bf16 %v756
        %v1489 = vunpack.c.h.bf16 %v756
        %v1490 = vunpack.c.l.bf16 %v757
        %v1491 = vunpack.c.h.bf16 %v757
        %v1492 = vunpack.c.l.bf16 %v758
        %v1493 = vunpack.c.h.bf16 %v758
        %v1494 = vunpack.c.l.bf16 %v759
        %v1495 = vunpack.c.h.bf16 %v759
        %v1496 = vunpack.c.l.bf16 %v760
        %v1497 = vunpack.c.h.bf16 %v760
        %v1498 = vunpack.c.l.bf16 %v761
        %v1499 = vunpack.c.h.bf16 %v761
        %v1500 = vunpack.c.l.bf16 %v762
        %v1501 = vunpack.c.h.bf16 %v762
        %v1502 = vunpack.c.l.bf16 %v763
        %v1503 = vunpack.c.h.bf16 %v763
        %v1504 = vunpack.c.l.bf16 %v764
        %v1505 = vunpack.c.h.bf16 %v764
        %v1506 = vunpack.c.l.bf16 %v765
        %v1507 = vunpack.c.h.bf16 %v765
        %v1508 = vunpack.c.l.bf16 %v766
        %v1509 = vunpack.c.h.bf16 %v766
        %v1510 = vunpack.c.l.bf16 %v767
        %v1511 = vunpack.c.h.bf16 %v767
        %v1512 = vunpack.c.l.bf16 %v768
        %v1513 = vunpack.c.h.bf16 %v768
        %v1514 = vunpack.c.l.bf16 %v769
        %v1515 = vunpack.c.h.bf16 %v769
        %v1516 = vunpack.c.l.bf16 %v770
        %v1517 = vunpack.c.h.bf16 %v770
        %v1518 = vunpack.c.l.bf16 %v771
        %v1519 = vunpack.c.h.bf16 %v771
        %v1520 = vunpack.c.l.bf16 %v772
        %v1521 = vunpack.c.h.bf16 %v772
        %v1522 = vunpack.c.l.bf16 %v773
        %v1523 = vunpack.c.h.bf16 %v773
        %v1524 = vunpack.c.l.bf16 %v774
        %v1525 = vunpack.c.h.bf16 %v774
        %v1526 = vunpack.c.l.bf16 %v775
        %v1527 = vunpack.c.h.bf16 %v775
        %v1528 = vunpack.c.l.bf16 %v776
        %v1529 = vunpack.c.h.bf16 %v776
        %v1530 = vunpack.c.l.bf16 %v777
        %v1531 = vunpack.c.h.bf16 %v777
        %v1532 = vunpack.c.l.bf16 %v778
        %v1533 = vunpack.c.h.bf16 %v778
        %v1534 = vunpack.c.l.bf16 %v779
        %v1535 = vunpack.c.h.bf16 %v779
        %v1536 = vunpack.c.l.bf16 %v780
        %v1537 = vunpack.c.h.bf16 %v780
        %v1538 = vunpack.c.l.bf16 %v781
        %v1539 = vunpack.c.h.bf16 %v781
        %v1540 = vunpack.c.l.bf16 %v782
        %v1541 = vunpack.c.h.bf16 %v782
        %v1542 = vunpack.c.l.bf16 %v783
        %v1543 = vunpack.c.h.bf16 %v783
        %v1544 = vunpack.c.l.bf16 %v784
        %v1545 = vunpack.c.h.bf16 %v784
        %v1546 = vunpack.c.l.bf16 %v785
        %v1547 = vunpack.c.h.bf16 %v785
        %v1548 = vunpack.c.l.bf16 %v786
        %v1549 = vunpack.c.h.bf16 %v786
        %v1550 = vunpack.c.l.bf16 %v787
        %v1551 = vunpack.c.h.bf16 %v787
        %v1552 = vunpack.c.l.bf16 %v788
        %v1553 = vunpack.c.h.bf16 %v788
        %v1554 = vunpack.c.l.bf16 %v789
        %v1555 = vunpack.c.h.bf16 %v789
        %v1556 = vunpack.c.l.bf16 %v790
        %v1557 = vunpack.c.h.bf16 %v790
        %v1558 = vunpack.c.l.bf16 %v791
        %v1559 = vunpack.c.h.bf16 %v791
        %v1560 = vld [vmem:[%s286] sm:$0xff]
        %v1561 = vld [vmem:[%s286 + $0x8] sm:$0xff]
        %v1562 = vld [vmem:[%s286 + $0x10] sm:$0xff]
        %v1563 = vld [vmem:[%s286 + $0x18] sm:$0xff]
        %v1564 = vld [vmem:[%s286 + $0x20] sm:$0xff]
        %v1565 = vld [vmem:[%s286 + $0x28] sm:$0xff]
        %v1566 = vld [vmem:[%s286 + $0x30] sm:$0xff]
        %v1567 = vld [vmem:[%s286 + $0x38] sm:$0xff]
        %v1568 = vld [vmem:[%s286 + $0x40] sm:$0xff]
        %v1569 = vld [vmem:[%s286 + $0x48] sm:$0xff]
        %v1570 = vld [vmem:[%s286 + $0x50] sm:$0xff]
        %v1571 = vld [vmem:[%s286 + $0x58] sm:$0xff]
        %v1584 = vlaneseq
        %v1585 = vshrl.u32 %v1584, 7
        %v1586 = vsub.s32 0, %v1585
        %v1587 = vrot.slane %v1560, %v1586
        %v1588 = vlaneseq
        %v1589 = vshrl.u32 %v1588, 7
        %v1590 = vsub.s32 1, %v1589
        %v1591 = vrot.slane %v1560, %v1590
        %v1592 = vlaneseq
        %v1593 = vshrl.u32 %v1592, 7
        %v1594 = vsub.s32 2, %v1593
        %v1595 = vrot.slane %v1560, %v1594
        %v1596 = vlaneseq
        %v1597 = vshrl.u32 %v1596, 7
        %v1598 = vsub.s32 3, %v1597
        %v1599 = vrot.slane %v1560, %v1598
        %v1600 = vlaneseq
        %v1601 = vshrl.u32 %v1600, 7
        %v1602 = vsub.s32 4, %v1601
        %v1603 = vrot.slane %v1560, %v1602
        %v1604 = vlaneseq
        %v1605 = vshrl.u32 %v1604, 7
        %v1606 = vsub.s32 5, %v1605
        %v1607 = vrot.slane %v1560, %v1606
        %v1608 = vlaneseq
        %v1609 = vshrl.u32 %v1608, 7
        %v1610 = vsub.s32 6, %v1609
        %v1611 = vrot.slane %v1560, %v1610
        %v1612 = vlaneseq
        %v1613 = vshrl.u32 %v1612, 7
        %v1614 = vsub.s32 7, %v1613
        %v1615 = vrot.slane %v1560, %v1614
        %v1616 = vlaneseq
        %v1617 = vshrl.u32 %v1616, 7
        %v1618 = vsub.s32 0, %v1617
        %v1619 = vrot.slane %v1561, %v1618
        %v1620 = vlaneseq
        %v1621 = vshrl.u32 %v1620, 7
        %v1622 = vsub.s32 1, %v1621
        %v1623 = vrot.slane %v1561, %v1622
        %v1624 = vlaneseq
        %v1625 = vshrl.u32 %v1624, 7
        %v1626 = vsub.s32 2, %v1625
        %v1627 = vrot.slane %v1561, %v1626
        %v1628 = vlaneseq
        %v1629 = vshrl.u32 %v1628, 7
        %v1630 = vsub.s32 3, %v1629
        %v1631 = vrot.slane %v1561, %v1630
        %v1632 = vlaneseq
        %v1633 = vshrl.u32 %v1632, 7
        %v1634 = vsub.s32 4, %v1633
        %v1635 = vrot.slane %v1561, %v1634
        %v1636 = vlaneseq
        %v1637 = vshrl.u32 %v1636, 7
        %v1638 = vsub.s32 5, %v1637
        %v1639 = vrot.slane %v1561, %v1638
        %v1640 = vlaneseq
        %v1641 = vshrl.u32 %v1640, 7
        %v1642 = vsub.s32 6, %v1641
        %v1643 = vrot.slane %v1561, %v1642
        %v1644 = vlaneseq
        %v1645 = vshrl.u32 %v1644, 7
        %v1646 = vsub.s32 7, %v1645
        %v1647 = vrot.slane %v1561, %v1646
        %v1648 = vlaneseq
        %v1649 = vshrl.u32 %v1648, 7
        %v1650 = vsub.s32 0, %v1649
        %v1651 = vrot.slane %v1562, %v1650
        %v1652 = vlaneseq
        %v1653 = vshrl.u32 %v1652, 7
        %v1654 = vsub.s32 1, %v1653
        %v1655 = vrot.slane %v1562, %v1654
        %v1656 = vlaneseq
        %v1657 = vshrl.u32 %v1656, 7
        %v1658 = vsub.s32 2, %v1657
        %v1659 = vrot.slane %v1562, %v1658
        %v1660 = vlaneseq
        %v1661 = vshrl.u32 %v1660, 7
        %v1662 = vsub.s32 3, %v1661
        %v1663 = vrot.slane %v1562, %v1662
        %v1664 = vlaneseq
        %v1665 = vshrl.u32 %v1664, 7
        %v1666 = vsub.s32 4, %v1665
        %v1667 = vrot.slane %v1562, %v1666
        %v1668 = vlaneseq
        %v1669 = vshrl.u32 %v1668, 7
        %v1670 = vsub.s32 5, %v1669
        %v1671 = vrot.slane %v1562, %v1670
        %v1672 = vlaneseq
        %v1673 = vshrl.u32 %v1672, 7
        %v1674 = vsub.s32 6, %v1673
        %v1675 = vrot.slane %v1562, %v1674
        %v1676 = vlaneseq
        %v1677 = vshrl.u32 %v1676, 7
        %v1678 = vsub.s32 7, %v1677
        %v1679 = vrot.slane %v1562, %v1678
        %v1680 = vlaneseq
        %v1681 = vshrl.u32 %v1680, 7
        %v1682 = vsub.s32 0, %v1681
        %v1683 = vrot.slane %v1563, %v1682
        %v1684 = vlaneseq
        %v1685 = vshrl.u32 %v1684, 7
        %v1686 = vsub.s32 1, %v1685
        %v1687 = vrot.slane %v1563, %v1686
        %v1688 = vlaneseq
        %v1689 = vshrl.u32 %v1688, 7
        %v1690 = vsub.s32 2, %v1689
        %v1691 = vrot.slane %v1563, %v1690
        %v1692 = vlaneseq
        %v1693 = vshrl.u32 %v1692, 7
        %v1694 = vsub.s32 3, %v1693
        %v1695 = vrot.slane %v1563, %v1694
        %v1696 = vlaneseq
        %v1697 = vshrl.u32 %v1696, 7
        %v1698 = vsub.s32 4, %v1697
        %v1699 = vrot.slane %v1563, %v1698
        %v1700 = vlaneseq
        %v1701 = vshrl.u32 %v1700, 7
        %v1702 = vsub.s32 5, %v1701
        %v1703 = vrot.slane %v1563, %v1702
        %v1704 = vlaneseq
        %v1705 = vshrl.u32 %v1704, 7
        %v1706 = vsub.s32 6, %v1705
        %v1707 = vrot.slane %v1563, %v1706
        %v1708 = vlaneseq
        %v1709 = vshrl.u32 %v1708, 7
        %v1710 = vsub.s32 7, %v1709
        %v1711 = vrot.slane %v1563, %v1710
        %v1712 = vlaneseq
        %v1713 = vshrl.u32 %v1712, 7
        %v1714 = vsub.s32 0, %v1713
        %v1715 = vrot.slane %v1564, %v1714
        %v1716 = vlaneseq
        %v1717 = vshrl.u32 %v1716, 7
        %v1718 = vsub.s32 1, %v1717
        %v1719 = vrot.slane %v1564, %v1718
        %v1720 = vlaneseq
        %v1721 = vshrl.u32 %v1720, 7
        %v1722 = vsub.s32 2, %v1721
        %v1723 = vrot.slane %v1564, %v1722
        %v1724 = vlaneseq
        %v1725 = vshrl.u32 %v1724, 7
        %v1726 = vsub.s32 3, %v1725
        %v1727 = vrot.slane %v1564, %v1726
        %v1728 = vlaneseq
        %v1729 = vshrl.u32 %v1728, 7
        %v1730 = vsub.s32 4, %v1729
        %v1731 = vrot.slane %v1564, %v1730
        %v1732 = vlaneseq
        %v1733 = vshrl.u32 %v1732, 7
        %v1734 = vsub.s32 5, %v1733
        %v1735 = vrot.slane %v1564, %v1734
        %v1736 = vlaneseq
        %v1737 = vshrl.u32 %v1736, 7
        %v1738 = vsub.s32 6, %v1737
        %v1739 = vrot.slane %v1564, %v1738
        %v1740 = vlaneseq
        %v1741 = vshrl.u32 %v1740, 7
        %v1742 = vsub.s32 7, %v1741
        %v1743 = vrot.slane %v1564, %v1742
        %v1744 = vlaneseq
        %v1745 = vshrl.u32 %v1744, 7
        %v1746 = vsub.s32 0, %v1745
        %v1747 = vrot.slane %v1565, %v1746
        %v1748 = vlaneseq
        %v1749 = vshrl.u32 %v1748, 7
        %v1750 = vsub.s32 1, %v1749
        %v1751 = vrot.slane %v1565, %v1750
        %v1752 = vlaneseq
        %v1753 = vshrl.u32 %v1752, 7
        %v1754 = vsub.s32 2, %v1753
        %v1755 = vrot.slane %v1565, %v1754
        %v1756 = vlaneseq
        %v1757 = vshrl.u32 %v1756, 7
        %v1758 = vsub.s32 3, %v1757
        %v1759 = vrot.slane %v1565, %v1758
        %v1760 = vlaneseq
        %v1761 = vshrl.u32 %v1760, 7
        %v1762 = vsub.s32 4, %v1761
        %v1763 = vrot.slane %v1565, %v1762
        %v1764 = vlaneseq
        %v1765 = vshrl.u32 %v1764, 7
        %v1766 = vsub.s32 5, %v1765
        %v1767 = vrot.slane %v1565, %v1766
        %v1768 = vlaneseq
        %v1769 = vshrl.u32 %v1768, 7
        %v1770 = vsub.s32 6, %v1769
        %v1771 = vrot.slane %v1565, %v1770
        %v1772 = vlaneseq
        %v1773 = vshrl.u32 %v1772, 7
        %v1774 = vsub.s32 7, %v1773
        %v1775 = vrot.slane %v1565, %v1774
        %v1776 = vlaneseq
        %v1777 = vshrl.u32 %v1776, 7
        %v1778 = vsub.s32 0, %v1777
        %v1779 = vrot.slane %v1566, %v1778
        %v1780 = vlaneseq
        %v1781 = vshrl.u32 %v1780, 7
        %v1782 = vsub.s32 1, %v1781
        %v1783 = vrot.slane %v1566, %v1782
        %v1784 = vlaneseq
        %v1785 = vshrl.u32 %v1784, 7
        %v1786 = vsub.s32 2, %v1785
        %v1787 = vrot.slane %v1566, %v1786
        %v1788 = vlaneseq
        %v1789 = vshrl.u32 %v1788, 7
        %v1790 = vsub.s32 3, %v1789
        %v1791 = vrot.slane %v1566, %v1790
        %v1792 = vlaneseq
        %v1793 = vshrl.u32 %v1792, 7
        %v1794 = vsub.s32 4, %v1793
        %v1795 = vrot.slane %v1566, %v1794
        %v1796 = vlaneseq
        %v1797 = vshrl.u32 %v1796, 7
        %v1798 = vsub.s32 5, %v1797
        %v1799 = vrot.slane %v1566, %v1798
        %v1800 = vlaneseq
        %v1801 = vshrl.u32 %v1800, 7
        %v1802 = vsub.s32 6, %v1801
        %v1803 = vrot.slane %v1566, %v1802
        %v1804 = vlaneseq
        %v1805 = vshrl.u32 %v1804, 7
        %v1806 = vsub.s32 7, %v1805
        %v1807 = vrot.slane %v1566, %v1806
        %v1808 = vlaneseq
        %v1809 = vshrl.u32 %v1808, 7
        %v1810 = vsub.s32 0, %v1809
        %v1811 = vrot.slane %v1567, %v1810
        %v1812 = vlaneseq
        %v1813 = vshrl.u32 %v1812, 7
        %v1814 = vsub.s32 1, %v1813
        %v1815 = vrot.slane %v1567, %v1814
        %v1816 = vlaneseq
        %v1817 = vshrl.u32 %v1816, 7
        %v1818 = vsub.s32 2, %v1817
        %v1819 = vrot.slane %v1567, %v1818
        %v1820 = vlaneseq
        %v1821 = vshrl.u32 %v1820, 7
        %v1822 = vsub.s32 3, %v1821
        %v1823 = vrot.slane %v1567, %v1822
        %v1824 = vlaneseq
        %v1825 = vshrl.u32 %v1824, 7
        %v1826 = vsub.s32 4, %v1825
        %v1827 = vrot.slane %v1567, %v1826
        %v1828 = vlaneseq
        %v1829 = vshrl.u32 %v1828, 7
        %v1830 = vsub.s32 5, %v1829
        %v1831 = vrot.slane %v1567, %v1830
        %v1832 = vlaneseq
        %v1833 = vshrl.u32 %v1832, 7
        %v1834 = vsub.s32 6, %v1833
        %v1835 = vrot.slane %v1567, %v1834
        %v1836 = vlaneseq
        %v1837 = vshrl.u32 %v1836, 7
        %v1838 = vsub.s32 7, %v1837
        %v1839 = vrot.slane %v1567, %v1838
        %v1840 = vlaneseq
        %v1841 = vshrl.u32 %v1840, 7
        %v1842 = vsub.s32 0, %v1841
        %v1843 = vrot.slane %v1568, %v1842
        %v1844 = vlaneseq
        %v1845 = vshrl.u32 %v1844, 7
        %v1846 = vsub.s32 1, %v1845
        %v1847 = vrot.slane %v1568, %v1846
        %v1848 = vlaneseq
        %v1849 = vshrl.u32 %v1848, 7
        %v1850 = vsub.s32 2, %v1849
        %v1851 = vrot.slane %v1568, %v1850
        %v1852 = vlaneseq
        %v1853 = vshrl.u32 %v1852, 7
        %v1854 = vsub.s32 3, %v1853
        %v1855 = vrot.slane %v1568, %v1854
        %v1856 = vlaneseq
        %v1857 = vshrl.u32 %v1856, 7
        %v1858 = vsub.s32 4, %v1857
        %v1859 = vrot.slane %v1568, %v1858
        %v1860 = vlaneseq
        %v1861 = vshrl.u32 %v1860, 7
        %v1862 = vsub.s32 5, %v1861
        %v1863 = vrot.slane %v1568, %v1862
        %v1864 = vlaneseq
        %v1865 = vshrl.u32 %v1864, 7
        %v1866 = vsub.s32 6, %v1865
        %v1867 = vrot.slane %v1568, %v1866
        %v1868 = vlaneseq
        %v1869 = vshrl.u32 %v1868, 7
        %v1870 = vsub.s32 7, %v1869
        %v1871 = vrot.slane %v1568, %v1870
        %v1872 = vlaneseq
        %v1873 = vshrl.u32 %v1872, 7
        %v1874 = vsub.s32 0, %v1873
        %v1875 = vrot.slane %v1569, %v1874
        %v1876 = vlaneseq
        %v1877 = vshrl.u32 %v1876, 7
        %v1878 = vsub.s32 1, %v1877
        %v1879 = vrot.slane %v1569, %v1878
        %v1880 = vlaneseq
        %v1881 = vshrl.u32 %v1880, 7
        %v1882 = vsub.s32 2, %v1881
        %v1883 = vrot.slane %v1569, %v1882
        %v1884 = vlaneseq
        %v1885 = vshrl.u32 %v1884, 7
        %v1886 = vsub.s32 3, %v1885
        %v1887 = vrot.slane %v1569, %v1886
        %v1888 = vlaneseq
        %v1889 = vshrl.u32 %v1888, 7
        %v1890 = vsub.s32 4, %v1889
        %v1891 = vrot.slane %v1569, %v1890
        %v1892 = vlaneseq
        %v1893 = vshrl.u32 %v1892, 7
        %v1894 = vsub.s32 5, %v1893
        %v1895 = vrot.slane %v1569, %v1894
        %v1896 = vlaneseq
        %v1897 = vshrl.u32 %v1896, 7
        %v1898 = vsub.s32 6, %v1897
        %v1899 = vrot.slane %v1569, %v1898
        %v1900 = vlaneseq
        %v1901 = vshrl.u32 %v1900, 7
        %v1902 = vsub.s32 7, %v1901
        %v1903 = vrot.slane %v1569, %v1902
        %v1904 = vlaneseq
        %v1905 = vshrl.u32 %v1904, 7
        %v1906 = vsub.s32 0, %v1905
        %v1907 = vrot.slane %v1570, %v1906
        %v1908 = vlaneseq
        %v1909 = vshrl.u32 %v1908, 7
        %v1910 = vsub.s32 1, %v1909
        %v1911 = vrot.slane %v1570, %v1910
        %v1912 = vlaneseq
        %v1913 = vshrl.u32 %v1912, 7
        %v1914 = vsub.s32 2, %v1913
        %v1915 = vrot.slane %v1570, %v1914
        %v1916 = vlaneseq
        %v1917 = vshrl.u32 %v1916, 7
        %v1918 = vsub.s32 3, %v1917
        %v1919 = vrot.slane %v1570, %v1918
        %v1920 = vlaneseq
        %v1921 = vshrl.u32 %v1920, 7
        %v1922 = vsub.s32 4, %v1921
        %v1923 = vrot.slane %v1570, %v1922
        %v1924 = vlaneseq
        %v1925 = vshrl.u32 %v1924, 7
        %v1926 = vsub.s32 5, %v1925
        %v1927 = vrot.slane %v1570, %v1926
        %v1928 = vlaneseq
        %v1929 = vshrl.u32 %v1928, 7
        %v1930 = vsub.s32 6, %v1929
        %v1931 = vrot.slane %v1570, %v1930
        %v1932 = vlaneseq
        %v1933 = vshrl.u32 %v1932, 7
        %v1934 = vsub.s32 7, %v1933
        %v1935 = vrot.slane %v1570, %v1934
        %v1936 = vlaneseq
        %v1937 = vshrl.u32 %v1936, 7
        %v1938 = vsub.s32 0, %v1937
        %v1939 = vrot.slane %v1571, %v1938
        %v1940 = vlaneseq
        %v1941 = vshrl.u32 %v1940, 7
        %v1942 = vsub.s32 1, %v1941
        %v1943 = vrot.slane %v1571, %v1942
        %v1944 = vlaneseq
        %v1945 = vshrl.u32 %v1944, 7
        %v1946 = vsub.s32 2, %v1945
        %v1947 = vrot.slane %v1571, %v1946
        %v1948 = vlaneseq
        %v1949 = vshrl.u32 %v1948, 7
        %v1950 = vsub.s32 3, %v1949
        %v1951 = vrot.slane %v1571, %v1950
        %v1952 = vlaneseq
        %v1953 = vshrl.u32 %v1952, 7
        %v1954 = vsub.s32 4, %v1953
        %v1955 = vrot.slane %v1571, %v1954
        %v1956 = vlaneseq
        %v1957 = vshrl.u32 %v1956, 7
        %v1958 = vsub.s32 5, %v1957
        %v1959 = vrot.slane %v1571, %v1958
        %v1960 = vlaneseq
        %v1961 = vshrl.u32 %v1960, 7
        %v1962 = vsub.s32 6, %v1961
        %v1963 = vrot.slane %v1571, %v1962
        %v1964 = vlaneseq
        %v1965 = vshrl.u32 %v1964, 7
        %v1966 = vsub.s32 7, %v1965
        %v1967 = vrot.slane %v1571, %v1966
        %vm2064 = vcmask 523264
        %v2066 = vsel %vm2064, %v407, 0
        %2068 = vmatprep.subr.mxu0 0.0
        %2069 = vmatpush1.msra.mxu0 0.0
        %2070 = vmatprep.subr.mxu0 0.0
        %2071 = vmatpush1.msra.mxu0 0.0
        %2072 = vmatprep.subr.mxu0 0.0
        %2073 = vmatpush1.msra.mxu0 0.0
        %2074 = vmatprep.subr.mxu0 0.0
        %2075 = vmatpush1.msra.mxu0 0.0
        %2076 = vmatprep.subr.mxu0 0.0
        %2077 = vmatpush1.msra.mxu0 0.0
        %2078 = vmatprep.subr.mxu0 0.0
        %2079 = vmatpush1.msra.mxu0 0.0
        %2080 = vmatprep.subr.mxu0 0.0
        %2081 = vmatpush1.msra.mxu0 0.0
        %2082 = vmatprep.subr.mxu0 0.0
        %2083 = vmatpush1.msra.mxu0 0.0
        %2084 = vmatprep.subr.mxu0 %v1465
        %2085 = vmatpush1.msra.mxu0 %v1464
        %2086 = vmatprep.subr.mxu0 %v1369
        %2087 = vmatpush1.msra.mxu0 %v1368
        %2088 = vmatprep.subr.mxu0 %v1273
        %2089 = vmatpush1.msra.mxu0 %v1272
        %2090 = vmatprep.subr.mxu0 %v1177
        %2091 = vmatpush1.msra.mxu0 %v1176
        %2092 = vmatprep.subr.mxu0 %v1081
        %2093 = vmatpush1.msra.mxu0 %v1080
        %2094 = vmatprep.subr.mxu0 %v985
        %2095 = vmatpush1.msra.mxu0 %v984
        %2096 = vmatprep.subr.mxu0 %v889
        %2097 = vmatpush1.msra.mxu0 %v888
        %2098 = vmatprep.subr.mxu0 %v793
        %2099 = vmatpush1.msra.mxu0 %v792
        %2100 = vmatprep.subr.mxu0 0.0
        %2101 = vmatpush2.msra.mxu0 0.0
        %2102 = vmatprep.subr.mxu0 0.0
        %2103 = vmatpush2.msra.mxu0 0.0
        %2104 = vmatprep.subr.mxu0 0.0
        %2105 = vmatpush2.msra.mxu0 0.0
        %2106 = vmatprep.subr.mxu0 0.0
        %2107 = vmatpush2.msra.mxu0 0.0
        %2108 = vmatprep.subr.mxu0 0.0
        %2109 = vmatpush2.msra.mxu0 0.0
        %2110 = vmatprep.subr.mxu0 0.0
        %2111 = vmatpush2.msra.mxu0 0.0
        %2112 = vmatprep.subr.mxu0 0.0
        %2113 = vmatpush2.msra.mxu0 0.0
        %2114 = vmatprep.subr.mxu0 0.0
        %2115 = vmatpush2.msra.mxu0 0.0
        %2116 = vmatprep.subr.mxu0 0.0
        %2117 = vmatpush2.msra.mxu0 0.0
        %2118 = vmatprep.subr.mxu0 0.0
        %2119 = vmatpush2.msra.mxu0 0.0
        %2120 = vmatprep.subr.mxu0 0.0
        %2121 = vmatpush2.msra.mxu0 0.0
        %2122 = vmatprep.subr.mxu0 0.0
        %2123 = vmatpush2.msra.mxu0 0.0
        %2124 = vmatprep.subr.mxu0 0.0
        %2125 = vmatpush2.msra.mxu0 0.0
        %2126 = vmatprep.subr.mxu0 0.0
        %2127 = vmatpush2.msra.mxu0 0.0
        %2128 = vmatprep.subr.mxu0 0.0
        %2129 = vmatpush2.msra.mxu0 0.0
        %2130 = vmatprep.subr.mxu0 0.0
        %2131 = vmatpush2.msra.mxu0 0.0
        %2132 = vmatprep.mubr.f32.mxu0 0.0
        %2133 = vmatmul.mubr.f32.gmra.mxu0 %v2066
        %v2134 = vpop.f32.mrf.mxu0
        %v2135 = vadd.f32 %v1587, %v2134
        %v2136 = vpop.f32.mrf.mxu0
        %v2137 = vadd.f32 %v1591, %v2136
        %2138 = vdwg.mxu0
        %2139 = vmatprep.subr.mxu0 0.0
        %2140 = vmatpush1.msra.mxu0 0.0
        %2141 = vmatprep.subr.mxu0 0.0
        %2142 = vmatpush1.msra.mxu0 0.0
        %2143 = vmatprep.subr.mxu0 0.0
        %2144 = vmatpush1.msra.mxu0 0.0
        %2145 = vmatprep.subr.mxu0 0.0
        %2146 = vmatpush1.msra.mxu0 0.0
        %2147 = vmatprep.subr.mxu0 0.0
        %2148 = vmatpush1.msra.mxu0 0.0
        %2149 = vmatprep.subr.mxu0 0.0
        %2150 = vmatpush1.msra.mxu0 0.0
        %2151 = vmatprep.subr.mxu0 0.0
        %2152 = vmatpush1.msra.mxu0 0.0
        %2153 = vmatprep.subr.mxu0 0.0
        %2154 = vmatpush1.msra.mxu0 0.0
        %2155 = vmatprep.subr.mxu0 %v1467
        %2156 = vmatpush1.msra.mxu0 %v1466
        %2157 = vmatprep.subr.mxu0 %v1371
        %2158 = vmatpush1.msra.mxu0 %v1370
        %2159 = vmatprep.subr.mxu0 %v1275
        %2160 = vmatpush1.msra.mxu0 %v1274
        %2161 = vmatprep.subr.mxu0 %v1179
        %2162 = vmatpush1.msra.mxu0 %v1178
        %2163 = vmatprep.subr.mxu0 %v1083
        %2164 = vmatpush1.msra.mxu0 %v1082
        %2165 = vmatprep.subr.mxu0 %v987
        %2166 = vmatpush1.msra.mxu0 %v986
        %2167 = vmatprep.subr.mxu0 %v891
        %2168 = vmatpush1.msra.mxu0 %v890
        %2169 = vmatprep.subr.mxu0 %v795
        %2170 = vmatpush1.msra.mxu0 %v794
        %2171 = vmatprep.subr.mxu0 0.0
        %2172 = vmatpush2.msra.mxu0 0.0
        %2173 = vmatprep.subr.mxu0 0.0
        %2174 = vmatpush2.msra.mxu0 0.0
        %2175 = vmatprep.subr.mxu0 0.0
        %2176 = vmatpush2.msra.mxu0 0.0
        %2177 = vmatprep.subr.mxu0 0.0
        %2178 = vmatpush2.msra.mxu0 0.0
        %2179 = vmatprep.subr.mxu0 0.0
        %2180 = vmatpush2.msra.mxu0 0.0
        %2181 = vmatprep.subr.mxu0 0.0
        %2182 = vmatpush2.msra.mxu0 0.0
        %2183 = vmatprep.subr.mxu0 0.0
        %2184 = vmatpush2.msra.mxu0 0.0
        %2185 = vmatprep.subr.mxu0 0.0
        %2186 = vmatpush2.msra.mxu0 0.0
        %2187 = vmatprep.subr.mxu0 0.0
        %2188 = vmatpush2.msra.mxu0 0.0
        %2189 = vmatprep.subr.mxu0 0.0
        %2190 = vmatpush2.msra.mxu0 0.0
        %2191 = vmatprep.subr.mxu0 0.0
        %2192 = vmatpush2.msra.mxu0 0.0
        %2193 = vmatprep.subr.mxu0 0.0
        %2194 = vmatpush2.msra.mxu0 0.0
        %2195 = vmatprep.subr.mxu0 0.0
        %2196 = vmatpush2.msra.mxu0 0.0
        %2197 = vmatprep.subr.mxu0 0.0
        %2198 = vmatpush2.msra.mxu0 0.0
        %2199 = vmatprep.subr.mxu0 0.0
        %2200 = vmatpush2.msra.mxu0 0.0
        %2201 = vmatprep.subr.mxu0 0.0
        %2202 = vmatpush2.msra.mxu0 0.0
        %2203 = vmatprep.mubr.f32.mxu0 0.0
        %2204 = vmatmul.mubr.f32.gmra.mxu0 %v2066
        %v2205 = vpop.f32.mrf.mxu0
        %v2206 = vadd.f32 %v1595, %v2205
        %v2207 = vpop.f32.mrf.mxu0
        %v2208 = vadd.f32 %v1599, %v2207
        %2209 = vdwg.mxu0
        %2210 = vmatprep.subr.mxu0 0.0
        %2211 = vmatpush1.msra.mxu0 0.0
        %2212 = vmatprep.subr.mxu0 0.0
        %2213 = vmatpush1.msra.mxu0 0.0
        %2214 = vmatprep.subr.mxu0 0.0
        %2215 = vmatpush1.msra.mxu0 0.0
        %2216 = vmatprep.subr.mxu0 0.0
        %2217 = vmatpush1.msra.mxu0 0.0
        %2218 = vmatprep.subr.mxu0 0.0
        %2219 = vmatpush1.msra.mxu0 0.0
        %2220 = vmatprep.subr.mxu0 0.0
        %2221 = vmatpush1.msra.mxu0 0.0
        %2222 = vmatprep.subr.mxu0 0.0
        %2223 = vmatpush1.msra.mxu0 0.0
        %2224 = vmatprep.subr.mxu0 0.0
        %2225 = vmatpush1.msra.mxu0 0.0
        %2226 = vmatprep.subr.mxu0 %v1469
        %2227 = vmatpush1.msra.mxu0 %v1468
        %2228 = vmatprep.subr.mxu0 %v1373
        %2229 = vmatpush1.msra.mxu0 %v1372
        %2230 = vmatprep.subr.mxu0 %v1277
        %2231 = vmatpush1.msra.mxu0 %v1276
        %2232 = vmatprep.subr.mxu0 %v1181
        %2233 = vmatpush1.msra.mxu0 %v1180
        %2234 = vmatprep.subr.mxu0 %v1085
        %2235 = vmatpush1.msra.mxu0 %v1084
        %2236 = vmatprep.subr.mxu0 %v989
        %2237 = vmatpush1.msra.mxu0 %v988
        %2238 = vmatprep.subr.mxu0 %v893
        %2239 = vmatpush1.msra.mxu0 %v892
        %2240 = vmatprep.subr.mxu0 %v797
        %2241 = vmatpush1.msra.mxu0 %v796
        %2242 = vmatprep.subr.mxu0 0.0
        %2243 = vmatpush2.msra.mxu0 0.0
        %2244 = vmatprep.subr.mxu0 0.0
        %2245 = vmatpush2.msra.mxu0 0.0
        %2246 = vmatprep.subr.mxu0 0.0
        %2247 = vmatpush2.msra.mxu0 0.0
        %2248 = vmatprep.subr.mxu0 0.0
        %2249 = vmatpush2.msra.mxu0 0.0
        %2250 = vmatprep.subr.mxu0 0.0
        %2251 = vmatpush2.msra.mxu0 0.0
        %2252 = vmatprep.subr.mxu0 0.0
        %2253 = vmatpush2.msra.mxu0 0.0
        %2254 = vmatprep.subr.mxu0 0.0
        %2255 = vmatpush2.msra.mxu0 0.0
        %2256 = vmatprep.subr.mxu0 0.0
        %2257 = vmatpush2.msra.mxu0 0.0
        %2258 = vmatprep.subr.mxu0 0.0
        %2259 = vmatpush2.msra.mxu0 0.0
        %2260 = vmatprep.subr.mxu0 0.0
        %2261 = vmatpush2.msra.mxu0 0.0
        %2262 = vmatprep.subr.mxu0 0.0
        %2263 = vmatpush2.msra.mxu0 0.0
        %2264 = vmatprep.subr.mxu0 0.0
        %2265 = vmatpush2.msra.mxu0 0.0
        %2266 = vmatprep.subr.mxu0 0.0
        %2267 = vmatpush2.msra.mxu0 0.0
        %2268 = vmatprep.subr.mxu0 0.0
        %2269 = vmatpush2.msra.mxu0 0.0
        %2270 = vmatprep.subr.mxu0 0.0
        %2271 = vmatpush2.msra.mxu0 0.0
        %2272 = vmatprep.subr.mxu0 0.0
        %2273 = vmatpush2.msra.mxu0 0.0
        %2274 = vmatprep.mubr.f32.mxu0 0.0
        %2275 = vmatmul.mubr.f32.gmra.mxu0 %v2066
        %v2276 = vpop.f32.mrf.mxu0
        %v2277 = vadd.f32 %v1603, %v2276
        %v2278 = vpop.f32.mrf.mxu0
        %v2279 = vadd.f32 %v1607, %v2278
        %2280 = vdwg.mxu0
        %2281 = vmatprep.subr.mxu0 0.0
        %2282 = vmatpush1.msra.mxu0 0.0
        %2283 = vmatprep.subr.mxu0 0.0
        %2284 = vmatpush1.msra.mxu0 0.0
        %2285 = vmatprep.subr.mxu0 0.0
        %2286 = vmatpush1.msra.mxu0 0.0
        %2287 = vmatprep.subr.mxu0 0.0
        %2288 = vmatpush1.msra.mxu0 0.0
        %2289 = vmatprep.subr.mxu0 0.0
        %2290 = vmatpush1.msra.mxu0 0.0
        %2291 = vmatprep.subr.mxu0 0.0
        %2292 = vmatpush1.msra.mxu0 0.0
        %2293 = vmatprep.subr.mxu0 0.0
        %2294 = vmatpush1.msra.mxu0 0.0
        %2295 = vmatprep.subr.mxu0 0.0
        %2296 = vmatpush1.msra.mxu0 0.0
        %2297 = vmatprep.subr.mxu0 %v1471
        %2298 = vmatpush1.msra.mxu0 %v1470
        %2299 = vmatprep.subr.mxu0 %v1375
        %2300 = vmatpush1.msra.mxu0 %v1374
        %2301 = vmatprep.subr.mxu0 %v1279
        %2302 = vmatpush1.msra.mxu0 %v1278
        %2303 = vmatprep.subr.mxu0 %v1183
        %2304 = vmatpush1.msra.mxu0 %v1182
        %2305 = vmatprep.subr.mxu0 %v1087
        %2306 = vmatpush1.msra.mxu0 %v1086
        %2307 = vmatprep.subr.mxu0 %v991
        %2308 = vmatpush1.msra.mxu0 %v990
        %2309 = vmatprep.subr.mxu0 %v895
        %2310 = vmatpush1.msra.mxu0 %v894
        %2311 = vmatprep.subr.mxu0 %v799
        %2312 = vmatpush1.msra.mxu0 %v798
        %2313 = vmatprep.subr.mxu0 0.0
        %2314 = vmatpush2.msra.mxu0 0.0
        %2315 = vmatprep.subr.mxu0 0.0
        %2316 = vmatpush2.msra.mxu0 0.0
        %2317 = vmatprep.subr.mxu0 0.0
        %2318 = vmatpush2.msra.mxu0 0.0
        %2319 = vmatprep.subr.mxu0 0.0
        %2320 = vmatpush2.msra.mxu0 0.0
        %2321 = vmatprep.subr.mxu0 0.0
        %2322 = vmatpush2.msra.mxu0 0.0
        %2323 = vmatprep.subr.mxu0 0.0
        %2324 = vmatpush2.msra.mxu0 0.0
        %2325 = vmatprep.subr.mxu0 0.0
        %2326 = vmatpush2.msra.mxu0 0.0
        %2327 = vmatprep.subr.mxu0 0.0
        %2328 = vmatpush2.msra.mxu0 0.0
        %2329 = vmatprep.subr.mxu0 0.0
        %2330 = vmatpush2.msra.mxu0 0.0
        %2331 = vmatprep.subr.mxu0 0.0
        %2332 = vmatpush2.msra.mxu0 0.0
        %2333 = vmatprep.subr.mxu0 0.0
        %2334 = vmatpush2.msra.mxu0 0.0
        %2335 = vmatprep.subr.mxu0 0.0
        %2336 = vmatpush2.msra.mxu0 0.0
        %2337 = vmatprep.subr.mxu0 0.0
        %2338 = vmatpush2.msra.mxu0 0.0
        %2339 = vmatprep.subr.mxu0 0.0
        %2340 = vmatpush2.msra.mxu0 0.0
        %2341 = vmatprep.subr.mxu0 0.0
        %2342 = vmatpush2.msra.mxu0 0.0
        %2343 = vmatprep.subr.mxu0 0.0
        %2344 = vmatpush2.msra.mxu0 0.0
        %2345 = vmatprep.mubr.f32.mxu0 0.0
        %2346 = vmatmul.mubr.f32.gmra.mxu0 %v2066
        %v2347 = vpop.f32.mrf.mxu0
        %v2348 = vadd.f32 %v1611, %v2347
        %v2349 = vpop.f32.mrf.mxu0
        %v2350 = vadd.f32 %v1615, %v2349
        %2351 = vdwg.mxu0
        %2352 = vmatprep.subr.mxu0 0.0
        %2353 = vmatpush1.msra.mxu0 0.0
        %2354 = vmatprep.subr.mxu0 0.0
        %2355 = vmatpush1.msra.mxu0 0.0
        %2356 = vmatprep.subr.mxu0 0.0
        %2357 = vmatpush1.msra.mxu0 0.0
        %2358 = vmatprep.subr.mxu0 0.0
        %2359 = vmatpush1.msra.mxu0 0.0
        %2360 = vmatprep.subr.mxu0 0.0
        %2361 = vmatpush1.msra.mxu0 0.0
        %2362 = vmatprep.subr.mxu0 0.0
        %2363 = vmatpush1.msra.mxu0 0.0
        %2364 = vmatprep.subr.mxu0 0.0
        %2365 = vmatpush1.msra.mxu0 0.0
        %2366 = vmatprep.subr.mxu0 0.0
        %2367 = vmatpush1.msra.mxu0 0.0
        %2368 = vmatprep.subr.mxu0 %v1473
        %2369 = vmatpush1.msra.mxu0 %v1472
        %2370 = vmatprep.subr.mxu0 %v1377
        %2371 = vmatpush1.msra.mxu0 %v1376
        %2372 = vmatprep.subr.mxu0 %v1281
        %2373 = vmatpush1.msra.mxu0 %v1280
        %2374 = vmatprep.subr.mxu0 %v1185
        %2375 = vmatpush1.msra.mxu0 %v1184
        %2376 = vmatprep.subr.mxu0 %v1089
        %2377 = vmatpush1.msra.mxu0 %v1088
        %2378 = vmatprep.subr.mxu0 %v993
        %2379 = vmatpush1.msra.mxu0 %v992
        %2380 = vmatprep.subr.mxu0 %v897
        %2381 = vmatpush1.msra.mxu0 %v896
        %2382 = vmatprep.subr.mxu0 %v801
        %2383 = vmatpush1.msra.mxu0 %v800
        %2384 = vmatprep.subr.mxu0 0.0
        %2385 = vmatpush2.msra.mxu0 0.0
        %2386 = vmatprep.subr.mxu0 0.0
        %2387 = vmatpush2.msra.mxu0 0.0
        %2388 = vmatprep.subr.mxu0 0.0
        %2389 = vmatpush2.msra.mxu0 0.0
        %2390 = vmatprep.subr.mxu0 0.0
        %2391 = vmatpush2.msra.mxu0 0.0
        %2392 = vmatprep.subr.mxu0 0.0
        %2393 = vmatpush2.msra.mxu0 0.0
        %2394 = vmatprep.subr.mxu0 0.0
        %2395 = vmatpush2.msra.mxu0 0.0
        %2396 = vmatprep.subr.mxu0 0.0
        %2397 = vmatpush2.msra.mxu0 0.0
        %2398 = vmatprep.subr.mxu0 0.0
        %2399 = vmatpush2.msra.mxu0 0.0
        %2400 = vmatprep.subr.mxu0 0.0
        %2401 = vmatpush2.msra.mxu0 0.0
        %2402 = vmatprep.subr.mxu0 0.0
        %2403 = vmatpush2.msra.mxu0 0.0
        %2404 = vmatprep.subr.mxu0 0.0
        %2405 = vmatpush2.msra.mxu0 0.0
        %2406 = vmatprep.subr.mxu0 0.0
        %2407 = vmatpush2.msra.mxu0 0.0
        %2408 = vmatprep.subr.mxu0 0.0
        %2409 = vmatpush2.msra.mxu0 0.0
        %2410 = vmatprep.subr.mxu0 0.0
        %2411 = vmatpush2.msra.mxu0 0.0
        %2412 = vmatprep.subr.mxu0 0.0
        %2413 = vmatpush2.msra.mxu0 0.0
        %2414 = vmatprep.subr.mxu0 0.0
        %2415 = vmatpush2.msra.mxu0 0.0
        %2416 = vmatprep.mubr.f32.mxu0 0.0
        %2417 = vmatmul.mubr.f32.gmra.mxu0 %v2066
        %v2418 = vpop.f32.mrf.mxu0
        %v2419 = vadd.f32 %v1619, %v2418
        %v2420 = vpop.f32.mrf.mxu0
        %v2421 = vadd.f32 %v1623, %v2420
        %2422 = vdwg.mxu0
        %2423 = vmatprep.subr.mxu0 0.0
        %2424 = vmatpush1.msra.mxu0 0.0
        %2425 = vmatprep.subr.mxu0 0.0
        %2426 = vmatpush1.msra.mxu0 0.0
        %2427 = vmatprep.subr.mxu0 0.0
        %2428 = vmatpush1.msra.mxu0 0.0
        %2429 = vmatprep.subr.mxu0 0.0
        %2430 = vmatpush1.msra.mxu0 0.0
        %2431 = vmatprep.subr.mxu0 0.0
        %2432 = vmatpush1.msra.mxu0 0.0
        %2433 = vmatprep.subr.mxu0 0.0
        %2434 = vmatpush1.msra.mxu0 0.0
        %2435 = vmatprep.subr.mxu0 0.0
        %2436 = vmatpush1.msra.mxu0 0.0
        %2437 = vmatprep.subr.mxu0 0.0
        %2438 = vmatpush1.msra.mxu0 0.0
        %2439 = vmatprep.subr.mxu0 %v1475
        %2440 = vmatpush1.msra.mxu0 %v1474
        %2441 = vmatprep.subr.mxu0 %v1379
        %2442 = vmatpush1.msra.mxu0 %v1378
        %2443 = vmatprep.subr.mxu0 %v1283
        %2444 = vmatpush1.msra.mxu0 %v1282
        %2445 = vmatprep.subr.mxu0 %v1187
        %2446 = vmatpush1.msra.mxu0 %v1186
        %2447 = vmatprep.subr.mxu0 %v1091
        %2448 = vmatpush1.msra.mxu0 %v1090
        %2449 = vmatprep.subr.mxu0 %v995
        %2450 = vmatpush1.msra.mxu0 %v994
        %2451 = vmatprep.subr.mxu0 %v899
        %2452 = vmatpush1.msra.mxu0 %v898
        %2453 = vmatprep.subr.mxu0 %v803
        %2454 = vmatpush1.msra.mxu0 %v802
        %2455 = vmatprep.subr.mxu0 0.0
        %2456 = vmatpush2.msra.mxu0 0.0
        %2457 = vmatprep.subr.mxu0 0.0
        %2458 = vmatpush2.msra.mxu0 0.0
        %2459 = vmatprep.subr.mxu0 0.0
        %2460 = vmatpush2.msra.mxu0 0.0
        %2461 = vmatprep.subr.mxu0 0.0
        %2462 = vmatpush2.msra.mxu0 0.0
        %2463 = vmatprep.subr.mxu0 0.0
        %2464 = vmatpush2.msra.mxu0 0.0
        %2465 = vmatprep.subr.mxu0 0.0
        %2466 = vmatpush2.msra.mxu0 0.0
        %2467 = vmatprep.subr.mxu0 0.0
        %2468 = vmatpush2.msra.mxu0 0.0
        %2469 = vmatprep.subr.mxu0 0.0
        %2470 = vmatpush2.msra.mxu0 0.0
        %2471 = vmatprep.subr.mxu0 0.0
        %2472 = vmatpush2.msra.mxu0 0.0
        %2473 = vmatprep.subr.mxu0 0.0
        %2474 = vmatpush2.msra.mxu0 0.0
        %2475 = vmatprep.subr.mxu0 0.0
        %2476 = vmatpush2.msra.mxu0 0.0
        %2477 = vmatprep.subr.mxu0 0.0
        %2478 = vmatpush2.msra.mxu0 0.0
        %2479 = vmatprep.subr.mxu0 0.0
        %2480 = vmatpush2.msra.mxu0 0.0
        %2481 = vmatprep.subr.mxu0 0.0
        %2482 = vmatpush2.msra.mxu0 0.0
        %2483 = vmatprep.subr.mxu0 0.0
        %2484 = vmatpush2.msra.mxu0 0.0
        %2485 = vmatprep.subr.mxu0 0.0
        %2486 = vmatpush2.msra.mxu0 0.0
        %2487 = vmatprep.mubr.f32.mxu0 0.0
        %2488 = vmatmul.mubr.f32.gmra.mxu0 %v2066
        %v2489 = vpop.f32.mrf.mxu0
        %v2490 = vadd.f32 %v1627, %v2489
        %v2491 = vpop.f32.mrf.mxu0
        %v2492 = vadd.f32 %v1631, %v2491
        %2493 = vdwg.mxu0
        %2494 = vmatprep.subr.mxu0 0.0
        %2495 = vmatpush1.msra.mxu0 0.0
        %2496 = vmatprep.subr.mxu0 0.0
        %2497 = vmatpush1.msra.mxu0 0.0
        %2498 = vmatprep.subr.mxu0 0.0
        %2499 = vmatpush1.msra.mxu0 0.0
        %2500 = vmatprep.subr.mxu0 0.0
        %2501 = vmatpush1.msra.mxu0 0.0
        %2502 = vmatprep.subr.mxu0 0.0
        %2503 = vmatpush1.msra.mxu0 0.0
        %2504 = vmatprep.subr.mxu0 0.0
        %2505 = vmatpush1.msra.mxu0 0.0
        %2506 = vmatprep.subr.mxu0 0.0
        %2507 = vmatpush1.msra.mxu0 0.0
        %2508 = vmatprep.subr.mxu0 0.0
        %2509 = vmatpush1.msra.mxu0 0.0
        %2510 = vmatprep.subr.mxu0 %v1477
        %2511 = vmatpush1.msra.mxu0 %v1476
        %2512 = vmatprep.subr.mxu0 %v1381
        %2513 = vmatpush1.msra.mxu0 %v1380
        %2514 = vmatprep.subr.mxu0 %v1285
        %2515 = vmatpush1.msra.mxu0 %v1284
        %2516 = vmatprep.subr.mxu0 %v1189
        %2517 = vmatpush1.msra.mxu0 %v1188
        %2518 = vmatprep.subr.mxu0 %v1093
        %2519 = vmatpush1.msra.mxu0 %v1092
        %2520 = vmatprep.subr.mxu0 %v997
        %2521 = vmatpush1.msra.mxu0 %v996
        %2522 = vmatprep.subr.mxu0 %v901
        %2523 = vmatpush1.msra.mxu0 %v900
        %2524 = vmatprep.subr.mxu0 %v805
        %2525 = vmatpush1.msra.mxu0 %v804
        %2526 = vmatprep.subr.mxu0 0.0
        %2527 = vmatpush2.msra.mxu0 0.0
        %2528 = vmatprep.subr.mxu0 0.0
        %2529 = vmatpush2.msra.mxu0 0.0
        %2530 = vmatprep.subr.mxu0 0.0
        %2531 = vmatpush2.msra.mxu0 0.0
        %2532 = vmatprep.subr.mxu0 0.0
        %2533 = vmatpush2.msra.mxu0 0.0
        %2534 = vmatprep.subr.mxu0 0.0
        %2535 = vmatpush2.msra.mxu0 0.0
        %2536 = vmatprep.subr.mxu0 0.0
        %2537 = vmatpush2.msra.mxu0 0.0
        %2538 = vmatprep.subr.mxu0 0.0
        %2539 = vmatpush2.msra.mxu0 0.0
        %2540 = vmatprep.subr.mxu0 0.0
        %2541 = vmatpush2.msra.mxu0 0.0
        %2542 = vmatprep.subr.mxu0 0.0
        %2543 = vmatpush2.msra.mxu0 0.0
        %2544 = vmatprep.subr.mxu0 0.0
        %2545 = vmatpush2.msra.mxu0 0.0
        %2546 = vmatprep.subr.mxu0 0.0
        %2547 = vmatpush2.msra.mxu0 0.0
        %2548 = vmatprep.subr.mxu0 0.0
        %2549 = vmatpush2.msra.mxu0 0.0
        %2550 = vmatprep.subr.mxu0 0.0
        %2551 = vmatpush2.msra.mxu0 0.0
        %2552 = vmatprep.subr.mxu0 0.0
        %2553 = vmatpush2.msra.mxu0 0.0
        %2554 = vmatprep.subr.mxu0 0.0
        %2555 = vmatpush2.msra.mxu0 0.0
        %2556 = vmatprep.subr.mxu0 0.0
        %2557 = vmatpush2.msra.mxu0 0.0
        %2558 = vmatprep.mubr.f32.mxu0 0.0
        %2559 = vmatmul.mubr.f32.gmra.mxu0 %v2066
        %v2560 = vpop.f32.mrf.mxu0
        %v2561 = vadd.f32 %v1635, %v2560
        %v2562 = vpop.f32.mrf.mxu0
        %v2563 = vadd.f32 %v1639, %v2562
        %2564 = vdwg.mxu0
        %2565 = vmatprep.subr.mxu0 0.0
        %2566 = vmatpush1.msra.mxu0 0.0
        %2567 = vmatprep.subr.mxu0 0.0
        %2568 = vmatpush1.msra.mxu0 0.0
        %2569 = vmatprep.subr.mxu0 0.0
        %2570 = vmatpush1.msra.mxu0 0.0
        %2571 = vmatprep.subr.mxu0 0.0
        %2572 = vmatpush1.msra.mxu0 0.0
        %2573 = vmatprep.subr.mxu0 0.0
        %2574 = vmatpush1.msra.mxu0 0.0
        %2575 = vmatprep.subr.mxu0 0.0
        %2576 = vmatpush1.msra.mxu0 0.0
        %2577 = vmatprep.subr.mxu0 0.0
        %2578 = vmatpush1.msra.mxu0 0.0
        %2579 = vmatprep.subr.mxu0 0.0
        %2580 = vmatpush1.msra.mxu0 0.0
        %2581 = vmatprep.subr.mxu0 %v1479
        %2582 = vmatpush1.msra.mxu0 %v1478
        %2583 = vmatprep.subr.mxu0 %v1383
        %2584 = vmatpush1.msra.mxu0 %v1382
        %2585 = vmatprep.subr.mxu0 %v1287
        %2586 = vmatpush1.msra.mxu0 %v1286
        %2587 = vmatprep.subr.mxu0 %v1191
        %2588 = vmatpush1.msra.mxu0 %v1190
        %2589 = vmatprep.subr.mxu0 %v1095
        %2590 = vmatpush1.msra.mxu0 %v1094
        %2591 = vmatprep.subr.mxu0 %v999
        %2592 = vmatpush1.msra.mxu0 %v998
        %2593 = vmatprep.subr.mxu0 %v903
        %2594 = vmatpush1.msra.mxu0 %v902
        %2595 = vmatprep.subr.mxu0 %v807
        %2596 = vmatpush1.msra.mxu0 %v806
        %2597 = vmatprep.subr.mxu0 0.0
        %2598 = vmatpush2.msra.mxu0 0.0
        %2599 = vmatprep.subr.mxu0 0.0
        %2600 = vmatpush2.msra.mxu0 0.0
        %2601 = vmatprep.subr.mxu0 0.0
        %2602 = vmatpush2.msra.mxu0 0.0
        %2603 = vmatprep.subr.mxu0 0.0
        %2604 = vmatpush2.msra.mxu0 0.0
        %2605 = vmatprep.subr.mxu0 0.0
        %2606 = vmatpush2.msra.mxu0 0.0
        %2607 = vmatprep.subr.mxu0 0.0
        %2608 = vmatpush2.msra.mxu0 0.0
        %2609 = vmatprep.subr.mxu0 0.0
        %2610 = vmatpush2.msra.mxu0 0.0
        %2611 = vmatprep.subr.mxu0 0.0
        %2612 = vmatpush2.msra.mxu0 0.0
        %2613 = vmatprep.subr.mxu0 0.0
        %2614 = vmatpush2.msra.mxu0 0.0
        %2615 = vmatprep.subr.mxu0 0.0
        %2616 = vmatpush2.msra.mxu0 0.0
        %2617 = vmatprep.subr.mxu0 0.0
        %2618 = vmatpush2.msra.mxu0 0.0
        %2619 = vmatprep.subr.mxu0 0.0
        %2620 = vmatpush2.msra.mxu0 0.0
        %2621 = vmatprep.subr.mxu0 0.0
        %2622 = vmatpush2.msra.mxu0 0.0
        %2623 = vmatprep.subr.mxu0 0.0
        %2624 = vmatpush2.msra.mxu0 0.0
        %2625 = vmatprep.subr.mxu0 0.0
        %2626 = vmatpush2.msra.mxu0 0.0
        %2627 = vmatprep.subr.mxu0 0.0
        %2628 = vmatpush2.msra.mxu0 0.0
        %2629 = vmatprep.mubr.f32.mxu0 0.0
        %2630 = vmatmul.mubr.f32.gmra.mxu0 %v2066
        %v2631 = vpop.f32.mrf.mxu0
        %v2632 = vadd.f32 %v1643, %v2631
        %v2633 = vpop.f32.mrf.mxu0
        %v2634 = vadd.f32 %v1647, %v2633
        %2635 = vdwg.mxu0
        %2636 = vmatprep.subr.mxu0 0.0
        %2637 = vmatpush1.msra.mxu0 0.0
        %2638 = vmatprep.subr.mxu0 0.0
        %2639 = vmatpush1.msra.mxu0 0.0
        %2640 = vmatprep.subr.mxu0 0.0
        %2641 = vmatpush1.msra.mxu0 0.0
        %2642 = vmatprep.subr.mxu0 0.0
        %2643 = vmatpush1.msra.mxu0 0.0
        %2644 = vmatprep.subr.mxu0 0.0
        %2645 = vmatpush1.msra.mxu0 0.0
        %2646 = vmatprep.subr.mxu0 0.0
        %2647 = vmatpush1.msra.mxu0 0.0
        %2648 = vmatprep.subr.mxu0 0.0
        %2649 = vmatpush1.msra.mxu0 0.0
        %2650 = vmatprep.subr.mxu0 0.0
        %2651 = vmatpush1.msra.mxu0 0.0
        %2652 = vmatprep.subr.mxu0 %v1481
        %2653 = vmatpush1.msra.mxu0 %v1480
        %2654 = vmatprep.subr.mxu0 %v1385
        %2655 = vmatpush1.msra.mxu0 %v1384
        %2656 = vmatprep.subr.mxu0 %v1289
        %2657 = vmatpush1.msra.mxu0 %v1288
        %2658 = vmatprep.subr.mxu0 %v1193
        %2659 = vmatpush1.msra.mxu0 %v1192
        %2660 = vmatprep.subr.mxu0 %v1097
        %2661 = vmatpush1.msra.mxu0 %v1096
        %2662 = vmatprep.subr.mxu0 %v1001
        %2663 = vmatpush1.msra.mxu0 %v1000
        %2664 = vmatprep.subr.mxu0 %v905
        %2665 = vmatpush1.msra.mxu0 %v904
        %2666 = vmatprep.subr.mxu0 %v809
        %2667 = vmatpush1.msra.mxu0 %v808
        %2668 = vmatprep.subr.mxu0 0.0
        %2669 = vmatpush2.msra.mxu0 0.0
        %2670 = vmatprep.subr.mxu0 0.0
        %2671 = vmatpush2.msra.mxu0 0.0
        %2672 = vmatprep.subr.mxu0 0.0
        %2673 = vmatpush2.msra.mxu0 0.0
        %2674 = vmatprep.subr.mxu0 0.0
        %2675 = vmatpush2.msra.mxu0 0.0
        %2676 = vmatprep.subr.mxu0 0.0
        %2677 = vmatpush2.msra.mxu0 0.0
        %2678 = vmatprep.subr.mxu0 0.0
        %2679 = vmatpush2.msra.mxu0 0.0
        %2680 = vmatprep.subr.mxu0 0.0
        %2681 = vmatpush2.msra.mxu0 0.0
        %2682 = vmatprep.subr.mxu0 0.0
        %2683 = vmatpush2.msra.mxu0 0.0
        %2684 = vmatprep.subr.mxu0 0.0
        %2685 = vmatpush2.msra.mxu0 0.0
        %2686 = vmatprep.subr.mxu0 0.0
        %2687 = vmatpush2.msra.mxu0 0.0
        %2688 = vmatprep.subr.mxu0 0.0
        %2689 = vmatpush2.msra.mxu0 0.0
        %2690 = vmatprep.subr.mxu0 0.0
        %2691 = vmatpush2.msra.mxu0 0.0
        %2692 = vmatprep.subr.mxu0 0.0
        %2693 = vmatpush2.msra.mxu0 0.0
        %2694 = vmatprep.subr.mxu0 0.0
        %2695 = vmatpush2.msra.mxu0 0.0
        %2696 = vmatprep.subr.mxu0 0.0
        %2697 = vmatpush2.msra.mxu0 0.0
        %2698 = vmatprep.subr.mxu0 0.0
        %2699 = vmatpush2.msra.mxu0 0.0
        %2700 = vmatprep.mubr.f32.mxu0 0.0
        %2701 = vmatmul.mubr.f32.gmra.mxu0 %v2066
        %v2702 = vpop.f32.mrf.mxu0
        %v2703 = vadd.f32 %v1651, %v2702
        %v2704 = vpop.f32.mrf.mxu0
        %v2705 = vadd.f32 %v1655, %v2704
        %2706 = vdwg.mxu0
        %2707 = vmatprep.subr.mxu0 0.0
        %2708 = vmatpush1.msra.mxu0 0.0
        %2709 = vmatprep.subr.mxu0 0.0
        %2710 = vmatpush1.msra.mxu0 0.0
        %2711 = vmatprep.subr.mxu0 0.0
        %2712 = vmatpush1.msra.mxu0 0.0
        %2713 = vmatprep.subr.mxu0 0.0
        %2714 = vmatpush1.msra.mxu0 0.0
        %2715 = vmatprep.subr.mxu0 0.0
        %2716 = vmatpush1.msra.mxu0 0.0
        %2717 = vmatprep.subr.mxu0 0.0
        %2718 = vmatpush1.msra.mxu0 0.0
        %2719 = vmatprep.subr.mxu0 0.0
        %2720 = vmatpush1.msra.mxu0 0.0
        %2721 = vmatprep.subr.mxu0 0.0
        %2722 = vmatpush1.msra.mxu0 0.0
        %2723 = vmatprep.subr.mxu0 %v1483
        %2724 = vmatpush1.msra.mxu0 %v1482
        %2725 = vmatprep.subr.mxu0 %v1387
        %2726 = vmatpush1.msra.mxu0 %v1386
        %2727 = vmatprep.subr.mxu0 %v1291
        %2728 = vmatpush1.msra.mxu0 %v1290
        %2729 = vmatprep.subr.mxu0 %v1195
        %2730 = vmatpush1.msra.mxu0 %v1194
        %2731 = vmatprep.subr.mxu0 %v1099
        %2732 = vmatpush1.msra.mxu0 %v1098
        %2733 = vmatprep.subr.mxu0 %v1003
        %2734 = vmatpush1.msra.mxu0 %v1002
        %2735 = vmatprep.subr.mxu0 %v907
        %2736 = vmatpush1.msra.mxu0 %v906
        %2737 = vmatprep.subr.mxu0 %v811
        %2738 = vmatpush1.msra.mxu0 %v810
        %2739 = vmatprep.subr.mxu0 0.0
        %2740 = vmatpush2.msra.mxu0 0.0
        %2741 = vmatprep.subr.mxu0 0.0
        %2742 = vmatpush2.msra.mxu0 0.0
        %2743 = vmatprep.subr.mxu0 0.0
        %2744 = vmatpush2.msra.mxu0 0.0
        %2745 = vmatprep.subr.mxu0 0.0
        %2746 = vmatpush2.msra.mxu0 0.0
        %2747 = vmatprep.subr.mxu0 0.0
        %2748 = vmatpush2.msra.mxu0 0.0
        %2749 = vmatprep.subr.mxu0 0.0
        %2750 = vmatpush2.msra.mxu0 0.0
        %2751 = vmatprep.subr.mxu0 0.0
        %2752 = vmatpush2.msra.mxu0 0.0
        %2753 = vmatprep.subr.mxu0 0.0
        %2754 = vmatpush2.msra.mxu0 0.0
        %2755 = vmatprep.subr.mxu0 0.0
        %2756 = vmatpush2.msra.mxu0 0.0
        %2757 = vmatprep.subr.mxu0 0.0
        %2758 = vmatpush2.msra.mxu0 0.0
        %2759 = vmatprep.subr.mxu0 0.0
        %2760 = vmatpush2.msra.mxu0 0.0
        %2761 = vmatprep.subr.mxu0 0.0
        %2762 = vmatpush2.msra.mxu0 0.0
        %2763 = vmatprep.subr.mxu0 0.0
        %2764 = vmatpush2.msra.mxu0 0.0
        %2765 = vmatprep.subr.mxu0 0.0
        %2766 = vmatpush2.msra.mxu0 0.0
        %2767 = vmatprep.subr.mxu0 0.0
        %2768 = vmatpush2.msra.mxu0 0.0
        %2769 = vmatprep.subr.mxu0 0.0
        %2770 = vmatpush2.msra.mxu0 0.0
        %2771 = vmatprep.mubr.f32.mxu0 0.0
        %2772 = vmatmul.mubr.f32.gmra.mxu0 %v2066
        %v2773 = vpop.f32.mrf.mxu0
        %v2774 = vadd.f32 %v1659, %v2773
        %v2775 = vpop.f32.mrf.mxu0
        %v2776 = vadd.f32 %v1663, %v2775
        %2777 = vdwg.mxu0
        %2778 = vmatprep.subr.mxu0 0.0
        %2779 = vmatpush1.msra.mxu0 0.0
        %2780 = vmatprep.subr.mxu0 0.0
        %2781 = vmatpush1.msra.mxu0 0.0
        %2782 = vmatprep.subr.mxu0 0.0
        %2783 = vmatpush1.msra.mxu0 0.0
        %2784 = vmatprep.subr.mxu0 0.0
        %2785 = vmatpush1.msra.mxu0 0.0
        %2786 = vmatprep.subr.mxu0 0.0
        %2787 = vmatpush1.msra.mxu0 0.0
        %2788 = vmatprep.subr.mxu0 0.0
        %2789 = vmatpush1.msra.mxu0 0.0
        %2790 = vmatprep.subr.mxu0 0.0
        %2791 = vmatpush1.msra.mxu0 0.0
        %2792 = vmatprep.subr.mxu0 0.0
        %2793 = vmatpush1.msra.mxu0 0.0
        %2794 = vmatprep.subr.mxu0 %v1485
        %2795 = vmatpush1.msra.mxu0 %v1484
        %2796 = vmatprep.subr.mxu0 %v1389
        %2797 = vmatpush1.msra.mxu0 %v1388
        %2798 = vmatprep.subr.mxu0 %v1293
        %2799 = vmatpush1.msra.mxu0 %v1292
        %2800 = vmatprep.subr.mxu0 %v1197
        %2801 = vmatpush1.msra.mxu0 %v1196
        %2802 = vmatprep.subr.mxu0 %v1101
        %2803 = vmatpush1.msra.mxu0 %v1100
        %2804 = vmatprep.subr.mxu0 %v1005
        %2805 = vmatpush1.msra.mxu0 %v1004
        %2806 = vmatprep.subr.mxu0 %v909
        %2807 = vmatpush1.msra.mxu0 %v908
        %2808 = vmatprep.subr.mxu0 %v813
        %2809 = vmatpush1.msra.mxu0 %v812
        %2810 = vmatprep.subr.mxu0 0.0
        %2811 = vmatpush2.msra.mxu0 0.0
        %2812 = vmatprep.subr.mxu0 0.0
        %2813 = vmatpush2.msra.mxu0 0.0
        %2814 = vmatprep.subr.mxu0 0.0
        %2815 = vmatpush2.msra.mxu0 0.0
        %2816 = vmatprep.subr.mxu0 0.0
        %2817 = vmatpush2.msra.mxu0 0.0
        %2818 = vmatprep.subr.mxu0 0.0
        %2819 = vmatpush2.msra.mxu0 0.0
        %2820 = vmatprep.subr.mxu0 0.0
        %2821 = vmatpush2.msra.mxu0 0.0
        %2822 = vmatprep.subr.mxu0 0.0
        %2823 = vmatpush2.msra.mxu0 0.0
        %2824 = vmatprep.subr.mxu0 0.0
        %2825 = vmatpush2.msra.mxu0 0.0
        %2826 = vmatprep.subr.mxu0 0.0
        %2827 = vmatpush2.msra.mxu0 0.0
        %2828 = vmatprep.subr.mxu0 0.0
        %2829 = vmatpush2.msra.mxu0 0.0
        %2830 = vmatprep.subr.mxu0 0.0
        %2831 = vmatpush2.msra.mxu0 0.0
        %2832 = vmatprep.subr.mxu0 0.0
        %2833 = vmatpush2.msra.mxu0 0.0
        %2834 = vmatprep.subr.mxu0 0.0
        %2835 = vmatpush2.msra.mxu0 0.0
        %2836 = vmatprep.subr.mxu0 0.0
        %2837 = vmatpush2.msra.mxu0 0.0
        %2838 = vmatprep.subr.mxu0 0.0
        %2839 = vmatpush2.msra.mxu0 0.0
        %2840 = vmatprep.subr.mxu0 0.0
        %2841 = vmatpush2.msra.mxu0 0.0
        %2842 = vmatprep.mubr.f32.mxu0 0.0
        %2843 = vmatmul.mubr.f32.gmra.mxu0 %v2066
        %v2844 = vpop.f32.mrf.mxu0
        %v2845 = vadd.f32 %v1667, %v2844
        %v2846 = vpop.f32.mrf.mxu0
        %v2847 = vadd.f32 %v1671, %v2846
        %2848 = vdwg.mxu0
        %2849 = vmatprep.subr.mxu0 0.0
        %2850 = vmatpush1.msra.mxu0 0.0
        %2851 = vmatprep.subr.mxu0 0.0
        %2852 = vmatpush1.msra.mxu0 0.0
        %2853 = vmatprep.subr.mxu0 0.0
        %2854 = vmatpush1.msra.mxu0 0.0
        %2855 = vmatprep.subr.mxu0 0.0
        %2856 = vmatpush1.msra.mxu0 0.0
        %2857 = vmatprep.subr.mxu0 0.0
        %2858 = vmatpush1.msra.mxu0 0.0
        %2859 = vmatprep.subr.mxu0 0.0
        %2860 = vmatpush1.msra.mxu0 0.0
        %2861 = vmatprep.subr.mxu0 0.0
        %2862 = vmatpush1.msra.mxu0 0.0
        %2863 = vmatprep.subr.mxu0 0.0
        %2864 = vmatpush1.msra.mxu0 0.0
        %2865 = vmatprep.subr.mxu0 %v1487
        %2866 = vmatpush1.msra.mxu0 %v1486
        %2867 = vmatprep.subr.mxu0 %v1391
        %2868 = vmatpush1.msra.mxu0 %v1390
        %2869 = vmatprep.subr.mxu0 %v1295
        %2870 = vmatpush1.msra.mxu0 %v1294
        %2871 = vmatprep.subr.mxu0 %v1199
        %2872 = vmatpush1.msra.mxu0 %v1198
        %2873 = vmatprep.subr.mxu0 %v1103
        %2874 = vmatpush1.msra.mxu0 %v1102
        %2875 = vmatprep.subr.mxu0 %v1007
        %2876 = vmatpush1.msra.mxu0 %v1006
        %2877 = vmatprep.subr.mxu0 %v911
        %2878 = vmatpush1.msra.mxu0 %v910
        %2879 = vmatprep.subr.mxu0 %v815
        %2880 = vmatpush1.msra.mxu0 %v814
        %2881 = vmatprep.subr.mxu0 0.0
        %2882 = vmatpush2.msra.mxu0 0.0
        %2883 = vmatprep.subr.mxu0 0.0
        %2884 = vmatpush2.msra.mxu0 0.0
        %2885 = vmatprep.subr.mxu0 0.0
        %2886 = vmatpush2.msra.mxu0 0.0
        %2887 = vmatprep.subr.mxu0 0.0
        %2888 = vmatpush2.msra.mxu0 0.0
        %2889 = vmatprep.subr.mxu0 0.0
        %2890 = vmatpush2.msra.mxu0 0.0
        %2891 = vmatprep.subr.mxu0 0.0
        %2892 = vmatpush2.msra.mxu0 0.0
        %2893 = vmatprep.subr.mxu0 0.0
        %2894 = vmatpush2.msra.mxu0 0.0
        %2895 = vmatprep.subr.mxu0 0.0
        %2896 = vmatpush2.msra.mxu0 0.0
        %2897 = vmatprep.subr.mxu0 0.0
        %2898 = vmatpush2.msra.mxu0 0.0
        %2899 = vmatprep.subr.mxu0 0.0
        %2900 = vmatpush2.msra.mxu0 0.0
        %2901 = vmatprep.subr.mxu0 0.0
        %2902 = vmatpush2.msra.mxu0 0.0
        %2903 = vmatprep.subr.mxu0 0.0
        %2904 = vmatpush2.msra.mxu0 0.0
        %2905 = vmatprep.subr.mxu0 0.0
        %2906 = vmatpush2.msra.mxu0 0.0
        %2907 = vmatprep.subr.mxu0 0.0
        %2908 = vmatpush2.msra.mxu0 0.0
        %2909 = vmatprep.subr.mxu0 0.0
        %2910 = vmatpush2.msra.mxu0 0.0
        %2911 = vmatprep.subr.mxu0 0.0
        %2912 = vmatpush2.msra.mxu0 0.0
        %2913 = vmatprep.mubr.f32.mxu0 0.0
        %2914 = vmatmul.mubr.f32.gmra.mxu0 %v2066
        %v2915 = vpop.f32.mrf.mxu0
        %v2916 = vadd.f32 %v1675, %v2915
        %v2917 = vpop.f32.mrf.mxu0
        %v2918 = vadd.f32 %v1679, %v2917
        %2919 = vdwg.mxu0
        %2920 = vmatprep.subr.mxu0 0.0
        %2921 = vmatpush1.msra.mxu0 0.0
        %2922 = vmatprep.subr.mxu0 0.0
        %2923 = vmatpush1.msra.mxu0 0.0
        %2924 = vmatprep.subr.mxu0 0.0
        %2925 = vmatpush1.msra.mxu0 0.0
        %2926 = vmatprep.subr.mxu0 0.0
        %2927 = vmatpush1.msra.mxu0 0.0
        %2928 = vmatprep.subr.mxu0 0.0
        %2929 = vmatpush1.msra.mxu0 0.0
        %2930 = vmatprep.subr.mxu0 0.0
        %2931 = vmatpush1.msra.mxu0 0.0
        %2932 = vmatprep.subr.mxu0 0.0
        %2933 = vmatpush1.msra.mxu0 0.0
        %2934 = vmatprep.subr.mxu0 0.0
        %2935 = vmatpush1.msra.mxu0 0.0
        %2936 = vmatprep.subr.mxu0 %v1489
        %2937 = vmatpush1.msra.mxu0 %v1488
        %2938 = vmatprep.subr.mxu0 %v1393
        %2939 = vmatpush1.msra.mxu0 %v1392
        %2940 = vmatprep.subr.mxu0 %v1297
        %2941 = vmatpush1.msra.mxu0 %v1296
        %2942 = vmatprep.subr.mxu0 %v1201
        %2943 = vmatpush1.msra.mxu0 %v1200
        %2944 = vmatprep.subr.mxu0 %v1105
        %2945 = vmatpush1.msra.mxu0 %v1104
        %2946 = vmatprep.subr.mxu0 %v1009
        %2947 = vmatpush1.msra.mxu0 %v1008
        %2948 = vmatprep.subr.mxu0 %v913
        %2949 = vmatpush1.msra.mxu0 %v912
        %2950 = vmatprep.subr.mxu0 %v817
        %2951 = vmatpush1.msra.mxu0 %v816
        %2952 = vmatprep.subr.mxu0 0.0
        %2953 = vmatpush2.msra.mxu0 0.0
        %2954 = vmatprep.subr.mxu0 0.0
        %2955 = vmatpush2.msra.mxu0 0.0
        %2956 = vmatprep.subr.mxu0 0.0
        %2957 = vmatpush2.msra.mxu0 0.0
        %2958 = vmatprep.subr.mxu0 0.0
        %2959 = vmatpush2.msra.mxu0 0.0
        %2960 = vmatprep.subr.mxu0 0.0
        %2961 = vmatpush2.msra.mxu0 0.0
        %2962 = vmatprep.subr.mxu0 0.0
        %2963 = vmatpush2.msra.mxu0 0.0
        %2964 = vmatprep.subr.mxu0 0.0
        %2965 = vmatpush2.msra.mxu0 0.0
        %2966 = vmatprep.subr.mxu0 0.0
        %2967 = vmatpush2.msra.mxu0 0.0
        %2968 = vmatprep.subr.mxu0 0.0
        %2969 = vmatpush2.msra.mxu0 0.0
        %2970 = vmatprep.subr.mxu0 0.0
        %2971 = vmatpush2.msra.mxu0 0.0
        %2972 = vmatprep.subr.mxu0 0.0
        %2973 = vmatpush2.msra.mxu0 0.0
        %2974 = vmatprep.subr.mxu0 0.0
        %2975 = vmatpush2.msra.mxu0 0.0
        %2976 = vmatprep.subr.mxu0 0.0
        %2977 = vmatpush2.msra.mxu0 0.0
        %2978 = vmatprep.subr.mxu0 0.0
        %2979 = vmatpush2.msra.mxu0 0.0
        %2980 = vmatprep.subr.mxu0 0.0
        %2981 = vmatpush2.msra.mxu0 0.0
        %2982 = vmatprep.subr.mxu0 0.0
        %2983 = vmatpush2.msra.mxu0 0.0
        %2984 = vmatprep.mubr.f32.mxu0 0.0
        %2985 = vmatmul.mubr.f32.gmra.mxu0 %v2066
        %v2986 = vpop.f32.mrf.mxu0
        %v2987 = vadd.f32 %v1683, %v2986
        %v2988 = vpop.f32.mrf.mxu0
        %v2989 = vadd.f32 %v1687, %v2988
        %2990 = vdwg.mxu0
        %2991 = vmatprep.subr.mxu0 0.0
        %2992 = vmatpush1.msra.mxu0 0.0
        %2993 = vmatprep.subr.mxu0 0.0
        %2994 = vmatpush1.msra.mxu0 0.0
        %2995 = vmatprep.subr.mxu0 0.0
        %2996 = vmatpush1.msra.mxu0 0.0
        %2997 = vmatprep.subr.mxu0 0.0
        %2998 = vmatpush1.msra.mxu0 0.0
        %2999 = vmatprep.subr.mxu0 0.0
        %3000 = vmatpush1.msra.mxu0 0.0
        %3001 = vmatprep.subr.mxu0 0.0
        %3002 = vmatpush1.msra.mxu0 0.0
        %3003 = vmatprep.subr.mxu0 0.0
        %3004 = vmatpush1.msra.mxu0 0.0
        %3005 = vmatprep.subr.mxu0 0.0
        %3006 = vmatpush1.msra.mxu0 0.0
        %3007 = vmatprep.subr.mxu0 %v1491
        %3008 = vmatpush1.msra.mxu0 %v1490
        %3009 = vmatprep.subr.mxu0 %v1395
        %3010 = vmatpush1.msra.mxu0 %v1394
        %3011 = vmatprep.subr.mxu0 %v1299
        %3012 = vmatpush1.msra.mxu0 %v1298
        %3013 = vmatprep.subr.mxu0 %v1203
        %3014 = vmatpush1.msra.mxu0 %v1202
        %3015 = vmatprep.subr.mxu0 %v1107
        %3016 = vmatpush1.msra.mxu0 %v1106
        %3017 = vmatprep.subr.mxu0 %v1011
        %3018 = vmatpush1.msra.mxu0 %v1010
        %3019 = vmatprep.subr.mxu0 %v915
        %3020 = vmatpush1.msra.mxu0 %v914
        %3021 = vmatprep.subr.mxu0 %v819
        %3022 = vmatpush1.msra.mxu0 %v818
        %3023 = vmatprep.subr.mxu0 0.0
        %3024 = vmatpush2.msra.mxu0 0.0
        %3025 = vmatprep.subr.mxu0 0.0
        %3026 = vmatpush2.msra.mxu0 0.0
        %3027 = vmatprep.subr.mxu0 0.0
        %3028 = vmatpush2.msra.mxu0 0.0
        %3029 = vmatprep.subr.mxu0 0.0
        %3030 = vmatpush2.msra.mxu0 0.0
        %3031 = vmatprep.subr.mxu0 0.0
        %3032 = vmatpush2.msra.mxu0 0.0
        %3033 = vmatprep.subr.mxu0 0.0
        %3034 = vmatpush2.msra.mxu0 0.0
        %3035 = vmatprep.subr.mxu0 0.0
        %3036 = vmatpush2.msra.mxu0 0.0
        %3037 = vmatprep.subr.mxu0 0.0
        %3038 = vmatpush2.msra.mxu0 0.0
        %3039 = vmatprep.subr.mxu0 0.0
        %3040 = vmatpush2.msra.mxu0 0.0
        %3041 = vmatprep.subr.mxu0 0.0
        %3042 = vmatpush2.msra.mxu0 0.0
        %3043 = vmatprep.subr.mxu0 0.0
        %3044 = vmatpush2.msra.mxu0 0.0
        %3045 = vmatprep.subr.mxu0 0.0
        %3046 = vmatpush2.msra.mxu0 0.0
        %3047 = vmatprep.subr.mxu0 0.0
        %3048 = vmatpush2.msra.mxu0 0.0
        %3049 = vmatprep.subr.mxu0 0.0
        %3050 = vmatpush2.msra.mxu0 0.0
        %3051 = vmatprep.subr.mxu0 0.0
        %3052 = vmatpush2.msra.mxu0 0.0
        %3053 = vmatprep.subr.mxu0 0.0
        %3054 = vmatpush2.msra.mxu0 0.0
        %3055 = vmatprep.mubr.f32.mxu0 0.0
        %3056 = vmatmul.mubr.f32.gmra.mxu0 %v2066
        %v3057 = vpop.f32.mrf.mxu0
        %v3058 = vadd.f32 %v1691, %v3057
        %v3059 = vpop.f32.mrf.mxu0
        %v3060 = vadd.f32 %v1695, %v3059
        %3061 = vdwg.mxu0
        %3062 = vmatprep.subr.mxu0 0.0
        %3063 = vmatpush1.msra.mxu0 0.0
        %3064 = vmatprep.subr.mxu0 0.0
        %3065 = vmatpush1.msra.mxu0 0.0
        %3066 = vmatprep.subr.mxu0 0.0
        %3067 = vmatpush1.msra.mxu0 0.0
        %3068 = vmatprep.subr.mxu0 0.0
        %3069 = vmatpush1.msra.mxu0 0.0
        %3070 = vmatprep.subr.mxu0 0.0
        %3071 = vmatpush1.msra.mxu0 0.0
        %3072 = vmatprep.subr.mxu0 0.0
        %3073 = vmatpush1.msra.mxu0 0.0
        %3074 = vmatprep.subr.mxu0 0.0
        %3075 = vmatpush1.msra.mxu0 0.0
        %3076 = vmatprep.subr.mxu0 0.0
        %3077 = vmatpush1.msra.mxu0 0.0
        %3078 = vmatprep.subr.mxu0 %v1493
        %3079 = vmatpush1.msra.mxu0 %v1492
        %3080 = vmatprep.subr.mxu0 %v1397
        %3081 = vmatpush1.msra.mxu0 %v1396
        %3082 = vmatprep.subr.mxu0 %v1301
        %3083 = vmatpush1.msra.mxu0 %v1300
        %3084 = vmatprep.subr.mxu0 %v1205
        %3085 = vmatpush1.msra.mxu0 %v1204
        %3086 = vmatprep.subr.mxu0 %v1109
        %3087 = vmatpush1.msra.mxu0 %v1108
        %3088 = vmatprep.subr.mxu0 %v1013
        %3089 = vmatpush1.msra.mxu0 %v1012
        %3090 = vmatprep.subr.mxu0 %v917
        %3091 = vmatpush1.msra.mxu0 %v916
        %3092 = vmatprep.subr.mxu0 %v821
        %3093 = vmatpush1.msra.mxu0 %v820
        %3094 = vmatprep.subr.mxu0 0.0
        %3095 = vmatpush2.msra.mxu0 0.0
        %3096 = vmatprep.subr.mxu0 0.0
        %3097 = vmatpush2.msra.mxu0 0.0
        %3098 = vmatprep.subr.mxu0 0.0
        %3099 = vmatpush2.msra.mxu0 0.0
        %3100 = vmatprep.subr.mxu0 0.0
        %3101 = vmatpush2.msra.mxu0 0.0
        %3102 = vmatprep.subr.mxu0 0.0
        %3103 = vmatpush2.msra.mxu0 0.0
        %3104 = vmatprep.subr.mxu0 0.0
        %3105 = vmatpush2.msra.mxu0 0.0
        %3106 = vmatprep.subr.mxu0 0.0
        %3107 = vmatpush2.msra.mxu0 0.0
        %3108 = vmatprep.subr.mxu0 0.0
        %3109 = vmatpush2.msra.mxu0 0.0
        %3110 = vmatprep.subr.mxu0 0.0
        %3111 = vmatpush2.msra.mxu0 0.0
        %3112 = vmatprep.subr.mxu0 0.0
        %3113 = vmatpush2.msra.mxu0 0.0
        %3114 = vmatprep.subr.mxu0 0.0
        %3115 = vmatpush2.msra.mxu0 0.0
        %3116 = vmatprep.subr.mxu0 0.0
        %3117 = vmatpush2.msra.mxu0 0.0
        %3118 = vmatprep.subr.mxu0 0.0
        %3119 = vmatpush2.msra.mxu0 0.0
        %3120 = vmatprep.subr.mxu0 0.0
        %3121 = vmatpush2.msra.mxu0 0.0
        %3122 = vmatprep.subr.mxu0 0.0
        %3123 = vmatpush2.msra.mxu0 0.0
        %3124 = vmatprep.subr.mxu0 0.0
        %3125 = vmatpush2.msra.mxu0 0.0
        %3126 = vmatprep.mubr.f32.mxu0 0.0
        %3127 = vmatmul.mubr.f32.gmra.mxu0 %v2066
        %v3128 = vpop.f32.mrf.mxu0
        %v3129 = vadd.f32 %v1699, %v3128
        %v3130 = vpop.f32.mrf.mxu0
        %v3131 = vadd.f32 %v1703, %v3130
        %3132 = vdwg.mxu0
        %3133 = vmatprep.subr.mxu0 0.0
        %3134 = vmatpush1.msra.mxu0 0.0
        %3135 = vmatprep.subr.mxu0 0.0
        %3136 = vmatpush1.msra.mxu0 0.0
        %3137 = vmatprep.subr.mxu0 0.0
        %3138 = vmatpush1.msra.mxu0 0.0
        %3139 = vmatprep.subr.mxu0 0.0
        %3140 = vmatpush1.msra.mxu0 0.0
        %3141 = vmatprep.subr.mxu0 0.0
        %3142 = vmatpush1.msra.mxu0 0.0
        %3143 = vmatprep.subr.mxu0 0.0
        %3144 = vmatpush1.msra.mxu0 0.0
        %3145 = vmatprep.subr.mxu0 0.0
        %3146 = vmatpush1.msra.mxu0 0.0
        %3147 = vmatprep.subr.mxu0 0.0
        %3148 = vmatpush1.msra.mxu0 0.0
        %3149 = vmatprep.subr.mxu0 %v1495
        %3150 = vmatpush1.msra.mxu0 %v1494
        %3151 = vmatprep.subr.mxu0 %v1399
        %3152 = vmatpush1.msra.mxu0 %v1398
        %3153 = vmatprep.subr.mxu0 %v1303
        %3154 = vmatpush1.msra.mxu0 %v1302
        %3155 = vmatprep.subr.mxu0 %v1207
        %3156 = vmatpush1.msra.mxu0 %v1206
        %3157 = vmatprep.subr.mxu0 %v1111
        %3158 = vmatpush1.msra.mxu0 %v1110
        %3159 = vmatprep.subr.mxu0 %v1015
        %3160 = vmatpush1.msra.mxu0 %v1014
        %3161 = vmatprep.subr.mxu0 %v919
        %3162 = vmatpush1.msra.mxu0 %v918
        %3163 = vmatprep.subr.mxu0 %v823
        %3164 = vmatpush1.msra.mxu0 %v822
        %3165 = vmatprep.subr.mxu0 0.0
        %3166 = vmatpush2.msra.mxu0 0.0
        %3167 = vmatprep.subr.mxu0 0.0
        %3168 = vmatpush2.msra.mxu0 0.0
        %3169 = vmatprep.subr.mxu0 0.0
        %3170 = vmatpush2.msra.mxu0 0.0
        %3171 = vmatprep.subr.mxu0 0.0
        %3172 = vmatpush2.msra.mxu0 0.0
        %3173 = vmatprep.subr.mxu0 0.0
        %3174 = vmatpush2.msra.mxu0 0.0
        %3175 = vmatprep.subr.mxu0 0.0
        %3176 = vmatpush2.msra.mxu0 0.0
        %3177 = vmatprep.subr.mxu0 0.0
        %3178 = vmatpush2.msra.mxu0 0.0
        %3179 = vmatprep.subr.mxu0 0.0
        %3180 = vmatpush2.msra.mxu0 0.0
        %3181 = vmatprep.subr.mxu0 0.0
        %3182 = vmatpush2.msra.mxu0 0.0
        %3183 = vmatprep.subr.mxu0 0.0
        %3184 = vmatpush2.msra.mxu0 0.0
        %3185 = vmatprep.subr.mxu0 0.0
        %3186 = vmatpush2.msra.mxu0 0.0
        %3187 = vmatprep.subr.mxu0 0.0
        %3188 = vmatpush2.msra.mxu0 0.0
        %3189 = vmatprep.subr.mxu0 0.0
        %3190 = vmatpush2.msra.mxu0 0.0
        %3191 = vmatprep.subr.mxu0 0.0
        %3192 = vmatpush2.msra.mxu0 0.0
        %3193 = vmatprep.subr.mxu0 0.0
        %3194 = vmatpush2.msra.mxu0 0.0
        %3195 = vmatprep.subr.mxu0 0.0
        %3196 = vmatpush2.msra.mxu0 0.0
        %3197 = vmatprep.mubr.f32.mxu0 0.0
        %3198 = vmatmul.mubr.f32.gmra.mxu0 %v2066
        %v3199 = vpop.f32.mrf.mxu0
        %v3200 = vadd.f32 %v1707, %v3199
        %v3201 = vpop.f32.mrf.mxu0
        %v3202 = vadd.f32 %v1711, %v3201
        %3203 = vdwg.mxu0
        %3204 = vmatprep.subr.mxu0 0.0
        %3205 = vmatpush1.msra.mxu0 0.0
        %3206 = vmatprep.subr.mxu0 0.0
        %3207 = vmatpush1.msra.mxu0 0.0
        %3208 = vmatprep.subr.mxu0 0.0
        %3209 = vmatpush1.msra.mxu0 0.0
        %3210 = vmatprep.subr.mxu0 0.0
        %3211 = vmatpush1.msra.mxu0 0.0
        %3212 = vmatprep.subr.mxu0 0.0
        %3213 = vmatpush1.msra.mxu0 0.0
        %3214 = vmatprep.subr.mxu0 0.0
        %3215 = vmatpush1.msra.mxu0 0.0
        %3216 = vmatprep.subr.mxu0 0.0
        %3217 = vmatpush1.msra.mxu0 0.0
        %3218 = vmatprep.subr.mxu0 0.0
        %3219 = vmatpush1.msra.mxu0 0.0
        %3220 = vmatprep.subr.mxu0 %v1497
        %3221 = vmatpush1.msra.mxu0 %v1496
        %3222 = vmatprep.subr.mxu0 %v1401
        %3223 = vmatpush1.msra.mxu0 %v1400
        %3224 = vmatprep.subr.mxu0 %v1305
        %3225 = vmatpush1.msra.mxu0 %v1304
        %3226 = vmatprep.subr.mxu0 %v1209
        %3227 = vmatpush1.msra.mxu0 %v1208
        %3228 = vmatprep.subr.mxu0 %v1113
        %3229 = vmatpush1.msra.mxu0 %v1112
        %3230 = vmatprep.subr.mxu0 %v1017
        %3231 = vmatpush1.msra.mxu0 %v1016
        %3232 = vmatprep.subr.mxu0 %v921
        %3233 = vmatpush1.msra.mxu0 %v920
        %3234 = vmatprep.subr.mxu0 %v825
        %3235 = vmatpush1.msra.mxu0 %v824
        %3236 = vmatprep.subr.mxu0 0.0
        %3237 = vmatpush2.msra.mxu0 0.0
        %3238 = vmatprep.subr.mxu0 0.0
        %3239 = vmatpush2.msra.mxu0 0.0
        %3240 = vmatprep.subr.mxu0 0.0
        %3241 = vmatpush2.msra.mxu0 0.0
        %3242 = vmatprep.subr.mxu0 0.0
        %3243 = vmatpush2.msra.mxu0 0.0
        %3244 = vmatprep.subr.mxu0 0.0
        %3245 = vmatpush2.msra.mxu0 0.0
        %3246 = vmatprep.subr.mxu0 0.0
        %3247 = vmatpush2.msra.mxu0 0.0
        %3248 = vmatprep.subr.mxu0 0.0
        %3249 = vmatpush2.msra.mxu0 0.0
        %3250 = vmatprep.subr.mxu0 0.0
        %3251 = vmatpush2.msra.mxu0 0.0
        %3252 = vmatprep.subr.mxu0 0.0
        %3253 = vmatpush2.msra.mxu0 0.0
        %3254 = vmatprep.subr.mxu0 0.0
        %3255 = vmatpush2.msra.mxu0 0.0
        %3256 = vmatprep.subr.mxu0 0.0
        %3257 = vmatpush2.msra.mxu0 0.0
        %3258 = vmatprep.subr.mxu0 0.0
        %3259 = vmatpush2.msra.mxu0 0.0
        %3260 = vmatprep.subr.mxu0 0.0
        %3261 = vmatpush2.msra.mxu0 0.0
        %3262 = vmatprep.subr.mxu0 0.0
        %3263 = vmatpush2.msra.mxu0 0.0
        %3264 = vmatprep.subr.mxu0 0.0
        %3265 = vmatpush2.msra.mxu0 0.0
        %3266 = vmatprep.subr.mxu0 0.0
        %3267 = vmatpush2.msra.mxu0 0.0
        %3268 = vmatprep.mubr.f32.mxu0 0.0
        %3269 = vmatmul.mubr.f32.gmra.mxu0 %v2066
        %v3270 = vpop.f32.mrf.mxu0
        %v3271 = vadd.f32 %v1715, %v3270
        %v3272 = vpop.f32.mrf.mxu0
        %v3273 = vadd.f32 %v1719, %v3272
        %3274 = vdwg.mxu0
        %3275 = vmatprep.subr.mxu0 0.0
        %3276 = vmatpush1.msra.mxu0 0.0
        %3277 = vmatprep.subr.mxu0 0.0
        %3278 = vmatpush1.msra.mxu0 0.0
        %3279 = vmatprep.subr.mxu0 0.0
        %3280 = vmatpush1.msra.mxu0 0.0
        %3281 = vmatprep.subr.mxu0 0.0
        %3282 = vmatpush1.msra.mxu0 0.0
        %3283 = vmatprep.subr.mxu0 0.0
        %3284 = vmatpush1.msra.mxu0 0.0
        %3285 = vmatprep.subr.mxu0 0.0
        %3286 = vmatpush1.msra.mxu0 0.0
        %3287 = vmatprep.subr.mxu0 0.0
        %3288 = vmatpush1.msra.mxu0 0.0
        %3289 = vmatprep.subr.mxu0 0.0
        %3290 = vmatpush1.msra.mxu0 0.0
        %3291 = vmatprep.subr.mxu0 %v1499
        %3292 = vmatpush1.msra.mxu0 %v1498
        %3293 = vmatprep.subr.mxu0 %v1403
        %3294 = vmatpush1.msra.mxu0 %v1402
        %3295 = vmatprep.subr.mxu0 %v1307
        %3296 = vmatpush1.msra.mxu0 %v1306
        %3297 = vmatprep.subr.mxu0 %v1211
        %3298 = vmatpush1.msra.mxu0 %v1210
        %3299 = vmatprep.subr.mxu0 %v1115
        %3300 = vmatpush1.msra.mxu0 %v1114
        %3301 = vmatprep.subr.mxu0 %v1019
        %3302 = vmatpush1.msra.mxu0 %v1018
        %3303 = vmatprep.subr.mxu0 %v923
        %3304 = vmatpush1.msra.mxu0 %v922
        %3305 = vmatprep.subr.mxu0 %v827
        %3306 = vmatpush1.msra.mxu0 %v826
        %3307 = vmatprep.subr.mxu0 0.0
        %3308 = vmatpush2.msra.mxu0 0.0
        %3309 = vmatprep.subr.mxu0 0.0
        %3310 = vmatpush2.msra.mxu0 0.0
        %3311 = vmatprep.subr.mxu0 0.0
        %3312 = vmatpush2.msra.mxu0 0.0
        %3313 = vmatprep.subr.mxu0 0.0
        %3314 = vmatpush2.msra.mxu0 0.0
        %3315 = vmatprep.subr.mxu0 0.0
        %3316 = vmatpush2.msra.mxu0 0.0
        %3317 = vmatprep.subr.mxu0 0.0
        %3318 = vmatpush2.msra.mxu0 0.0
        %3319 = vmatprep.subr.mxu0 0.0
        %3320 = vmatpush2.msra.mxu0 0.0
        %3321 = vmatprep.subr.mxu0 0.0
        %3322 = vmatpush2.msra.mxu0 0.0
        %3323 = vmatprep.subr.mxu0 0.0
        %3324 = vmatpush2.msra.mxu0 0.0
        %3325 = vmatprep.subr.mxu0 0.0
        %3326 = vmatpush2.msra.mxu0 0.0
        %3327 = vmatprep.subr.mxu0 0.0
        %3328 = vmatpush2.msra.mxu0 0.0
        %3329 = vmatprep.subr.mxu0 0.0
        %3330 = vmatpush2.msra.mxu0 0.0
        %3331 = vmatprep.subr.mxu0 0.0
        %3332 = vmatpush2.msra.mxu0 0.0
        %3333 = vmatprep.subr.mxu0 0.0
        %3334 = vmatpush2.msra.mxu0 0.0
        %3335 = vmatprep.subr.mxu0 0.0
        %3336 = vmatpush2.msra.mxu0 0.0
        %3337 = vmatprep.subr.mxu0 0.0
        %3338 = vmatpush2.msra.mxu0 0.0
        %3339 = vmatprep.mubr.f32.mxu0 0.0
        %3340 = vmatmul.mubr.f32.gmra.mxu0 %v2066
        %v3341 = vpop.f32.mrf.mxu0
        %v3342 = vadd.f32 %v1723, %v3341
        %v3343 = vpop.f32.mrf.mxu0
        %v3344 = vadd.f32 %v1727, %v3343
        %3345 = vdwg.mxu0
        %3346 = vmatprep.subr.mxu0 0.0
        %3347 = vmatpush1.msra.mxu0 0.0
        %3348 = vmatprep.subr.mxu0 0.0
        %3349 = vmatpush1.msra.mxu0 0.0
        %3350 = vmatprep.subr.mxu0 0.0
        %3351 = vmatpush1.msra.mxu0 0.0
        %3352 = vmatprep.subr.mxu0 0.0
        %3353 = vmatpush1.msra.mxu0 0.0
        %3354 = vmatprep.subr.mxu0 0.0
        %3355 = vmatpush1.msra.mxu0 0.0
        %3356 = vmatprep.subr.mxu0 0.0
        %3357 = vmatpush1.msra.mxu0 0.0
        %3358 = vmatprep.subr.mxu0 0.0
        %3359 = vmatpush1.msra.mxu0 0.0
        %3360 = vmatprep.subr.mxu0 0.0
        %3361 = vmatpush1.msra.mxu0 0.0
        %3362 = vmatprep.subr.mxu0 %v1501
        %3363 = vmatpush1.msra.mxu0 %v1500
        %3364 = vmatprep.subr.mxu0 %v1405
        %3365 = vmatpush1.msra.mxu0 %v1404
        %3366 = vmatprep.subr.mxu0 %v1309
        %3367 = vmatpush1.msra.mxu0 %v1308
        %3368 = vmatprep.subr.mxu0 %v1213
        %3369 = vmatpush1.msra.mxu0 %v1212
        %3370 = vmatprep.subr.mxu0 %v1117
        %3371 = vmatpush1.msra.mxu0 %v1116
        %3372 = vmatprep.subr.mxu0 %v1021
        %3373 = vmatpush1.msra.mxu0 %v1020
        %3374 = vmatprep.subr.mxu0 %v925
        %3375 = vmatpush1.msra.mxu0 %v924
        %3376 = vmatprep.subr.mxu0 %v829
        %3377 = vmatpush1.msra.mxu0 %v828
        %3378 = vmatprep.subr.mxu0 0.0
        %3379 = vmatpush2.msra.mxu0 0.0
        %3380 = vmatprep.subr.mxu0 0.0
        %3381 = vmatpush2.msra.mxu0 0.0
        %3382 = vmatprep.subr.mxu0 0.0
        %3383 = vmatpush2.msra.mxu0 0.0
        %3384 = vmatprep.subr.mxu0 0.0
        %3385 = vmatpush2.msra.mxu0 0.0
        %3386 = vmatprep.subr.mxu0 0.0
        %3387 = vmatpush2.msra.mxu0 0.0
        %3388 = vmatprep.subr.mxu0 0.0
        %3389 = vmatpush2.msra.mxu0 0.0
        %3390 = vmatprep.subr.mxu0 0.0
        %3391 = vmatpush2.msra.mxu0 0.0
        %3392 = vmatprep.subr.mxu0 0.0
        %3393 = vmatpush2.msra.mxu0 0.0
        %3394 = vmatprep.subr.mxu0 0.0
        %3395 = vmatpush2.msra.mxu0 0.0
        %3396 = vmatprep.subr.mxu0 0.0
        %3397 = vmatpush2.msra.mxu0 0.0
        %3398 = vmatprep.subr.mxu0 0.0
        %3399 = vmatpush2.msra.mxu0 0.0
        %3400 = vmatprep.subr.mxu0 0.0
        %3401 = vmatpush2.msra.mxu0 0.0
        %3402 = vmatprep.subr.mxu0 0.0
        %3403 = vmatpush2.msra.mxu0 0.0
        %3404 = vmatprep.subr.mxu0 0.0
        %3405 = vmatpush2.msra.mxu0 0.0
        %3406 = vmatprep.subr.mxu0 0.0
        %3407 = vmatpush2.msra.mxu0 0.0
        %3408 = vmatprep.subr.mxu0 0.0
        %3409 = vmatpush2.msra.mxu0 0.0
        %3410 = vmatprep.mubr.f32.mxu0 0.0
        %3411 = vmatmul.mubr.f32.gmra.mxu0 %v2066
        %v3412 = vpop.f32.mrf.mxu0
        %v3413 = vadd.f32 %v1731, %v3412
        %v3414 = vpop.f32.mrf.mxu0
        %v3415 = vadd.f32 %v1735, %v3414
        %3416 = vdwg.mxu0
        %3417 = vmatprep.subr.mxu0 0.0
        %3418 = vmatpush1.msra.mxu0 0.0
        %3419 = vmatprep.subr.mxu0 0.0
        %3420 = vmatpush1.msra.mxu0 0.0
        %3421 = vmatprep.subr.mxu0 0.0
        %3422 = vmatpush1.msra.mxu0 0.0
        %3423 = vmatprep.subr.mxu0 0.0
        %3424 = vmatpush1.msra.mxu0 0.0
        %3425 = vmatprep.subr.mxu0 0.0
        %3426 = vmatpush1.msra.mxu0 0.0
        %3427 = vmatprep.subr.mxu0 0.0
        %3428 = vmatpush1.msra.mxu0 0.0
        %3429 = vmatprep.subr.mxu0 0.0
        %3430 = vmatpush1.msra.mxu0 0.0
        %3431 = vmatprep.subr.mxu0 0.0
        %3432 = vmatpush1.msra.mxu0 0.0
        %3433 = vmatprep.subr.mxu0 %v1503
        %3434 = vmatpush1.msra.mxu0 %v1502
        %3435 = vmatprep.subr.mxu0 %v1407
        %3436 = vmatpush1.msra.mxu0 %v1406
        %3437 = vmatprep.subr.mxu0 %v1311
        %3438 = vmatpush1.msra.mxu0 %v1310
        %3439 = vmatprep.subr.mxu0 %v1215
        %3440 = vmatpush1.msra.mxu0 %v1214
        %3441 = vmatprep.subr.mxu0 %v1119
        %3442 = vmatpush1.msra.mxu0 %v1118
        %3443 = vmatprep.subr.mxu0 %v1023
        %3444 = vmatpush1.msra.mxu0 %v1022
        %3445 = vmatprep.subr.mxu0 %v927
        %3446 = vmatpush1.msra.mxu0 %v926
        %3447 = vmatprep.subr.mxu0 %v831
        %3448 = vmatpush1.msra.mxu0 %v830
        %3449 = vmatprep.subr.mxu0 0.0
        %3450 = vmatpush2.msra.mxu0 0.0
        %3451 = vmatprep.subr.mxu0 0.0
        %3452 = vmatpush2.msra.mxu0 0.0
        %3453 = vmatprep.subr.mxu0 0.0
        %3454 = vmatpush2.msra.mxu0 0.0
        %3455 = vmatprep.subr.mxu0 0.0
        %3456 = vmatpush2.msra.mxu0 0.0
        %3457 = vmatprep.subr.mxu0 0.0
        %3458 = vmatpush2.msra.mxu0 0.0
        %3459 = vmatprep.subr.mxu0 0.0
        %3460 = vmatpush2.msra.mxu0 0.0
        %3461 = vmatprep.subr.mxu0 0.0
        %3462 = vmatpush2.msra.mxu0 0.0
        %3463 = vmatprep.subr.mxu0 0.0
        %3464 = vmatpush2.msra.mxu0 0.0
        %3465 = vmatprep.subr.mxu0 0.0
        %3466 = vmatpush2.msra.mxu0 0.0
        %3467 = vmatprep.subr.mxu0 0.0
        %3468 = vmatpush2.msra.mxu0 0.0
        %3469 = vmatprep.subr.mxu0 0.0
        %3470 = vmatpush2.msra.mxu0 0.0
        %3471 = vmatprep.subr.mxu0 0.0
        %3472 = vmatpush2.msra.mxu0 0.0
        %3473 = vmatprep.subr.mxu0 0.0
        %3474 = vmatpush2.msra.mxu0 0.0
        %3475 = vmatprep.subr.mxu0 0.0
        %3476 = vmatpush2.msra.mxu0 0.0
        %3477 = vmatprep.subr.mxu0 0.0
        %3478 = vmatpush2.msra.mxu0 0.0
        %3479 = vmatprep.subr.mxu0 0.0
        %3480 = vmatpush2.msra.mxu0 0.0
        %3481 = vmatprep.mubr.f32.mxu0 0.0
        %3482 = vmatmul.mubr.f32.gmra.mxu0 %v2066
        %v3483 = vpop.f32.mrf.mxu0
        %v3484 = vadd.f32 %v1739, %v3483
        %v3485 = vpop.f32.mrf.mxu0
        %v3486 = vadd.f32 %v1743, %v3485
        %3487 = vdwg.mxu0
        %3488 = vmatprep.subr.mxu0 0.0
        %3489 = vmatpush1.msra.mxu0 0.0
        %3490 = vmatprep.subr.mxu0 0.0
        %3491 = vmatpush1.msra.mxu0 0.0
        %3492 = vmatprep.subr.mxu0 0.0
        %3493 = vmatpush1.msra.mxu0 0.0
        %3494 = vmatprep.subr.mxu0 0.0
        %3495 = vmatpush1.msra.mxu0 0.0
        %3496 = vmatprep.subr.mxu0 0.0
        %3497 = vmatpush1.msra.mxu0 0.0
        %3498 = vmatprep.subr.mxu0 0.0
        %3499 = vmatpush1.msra.mxu0 0.0
        %3500 = vmatprep.subr.mxu0 0.0
        %3501 = vmatpush1.msra.mxu0 0.0
        %3502 = vmatprep.subr.mxu0 0.0
        %3503 = vmatpush1.msra.mxu0 0.0
        %3504 = vmatprep.subr.mxu0 %v1505
        %3505 = vmatpush1.msra.mxu0 %v1504
        %3506 = vmatprep.subr.mxu0 %v1409
        %3507 = vmatpush1.msra.mxu0 %v1408
        %3508 = vmatprep.subr.mxu0 %v1313
        %3509 = vmatpush1.msra.mxu0 %v1312
        %3510 = vmatprep.subr.mxu0 %v1217
        %3511 = vmatpush1.msra.mxu0 %v1216
        %3512 = vmatprep.subr.mxu0 %v1121
        %3513 = vmatpush1.msra.mxu0 %v1120
        %3514 = vmatprep.subr.mxu0 %v1025
        %3515 = vmatpush1.msra.mxu0 %v1024
        %3516 = vmatprep.subr.mxu0 %v929
        %3517 = vmatpush1.msra.mxu0 %v928
        %3518 = vmatprep.subr.mxu0 %v833
        %3519 = vmatpush1.msra.mxu0 %v832
        %3520 = vmatprep.subr.mxu0 0.0
        %3521 = vmatpush2.msra.mxu0 0.0
        %3522 = vmatprep.subr.mxu0 0.0
        %3523 = vmatpush2.msra.mxu0 0.0
        %3524 = vmatprep.subr.mxu0 0.0
        %3525 = vmatpush2.msra.mxu0 0.0
        %3526 = vmatprep.subr.mxu0 0.0
        %3527 = vmatpush2.msra.mxu0 0.0
        %3528 = vmatprep.subr.mxu0 0.0
        %3529 = vmatpush2.msra.mxu0 0.0
        %3530 = vmatprep.subr.mxu0 0.0
        %3531 = vmatpush2.msra.mxu0 0.0
        %3532 = vmatprep.subr.mxu0 0.0
        %3533 = vmatpush2.msra.mxu0 0.0
        %3534 = vmatprep.subr.mxu0 0.0
        %3535 = vmatpush2.msra.mxu0 0.0
        %3536 = vmatprep.subr.mxu0 0.0
        %3537 = vmatpush2.msra.mxu0 0.0
        %3538 = vmatprep.subr.mxu0 0.0
        %3539 = vmatpush2.msra.mxu0 0.0
        %3540 = vmatprep.subr.mxu0 0.0
        %3541 = vmatpush2.msra.mxu0 0.0
        %3542 = vmatprep.subr.mxu0 0.0
        %3543 = vmatpush2.msra.mxu0 0.0
        %3544 = vmatprep.subr.mxu0 0.0
        %3545 = vmatpush2.msra.mxu0 0.0
        %3546 = vmatprep.subr.mxu0 0.0
        %3547 = vmatpush2.msra.mxu0 0.0
        %3548 = vmatprep.subr.mxu0 0.0
        %3549 = vmatpush2.msra.mxu0 0.0
        %3550 = vmatprep.subr.mxu0 0.0
        %3551 = vmatpush2.msra.mxu0 0.0
        %3552 = vmatprep.mubr.f32.mxu0 0.0
        %3553 = vmatmul.mubr.f32.gmra.mxu0 %v2066
        %v3554 = vpop.f32.mrf.mxu0
        %v3555 = vadd.f32 %v1747, %v3554
        %v3556 = vpop.f32.mrf.mxu0
        %v3557 = vadd.f32 %v1751, %v3556
        %3558 = vdwg.mxu0
        %3559 = vmatprep.subr.mxu0 0.0
        %3560 = vmatpush1.msra.mxu0 0.0
        %3561 = vmatprep.subr.mxu0 0.0
        %3562 = vmatpush1.msra.mxu0 0.0
        %3563 = vmatprep.subr.mxu0 0.0
        %3564 = vmatpush1.msra.mxu0 0.0
        %3565 = vmatprep.subr.mxu0 0.0
        %3566 = vmatpush1.msra.mxu0 0.0
        %3567 = vmatprep.subr.mxu0 0.0
        %3568 = vmatpush1.msra.mxu0 0.0
        %3569 = vmatprep.subr.mxu0 0.0
        %3570 = vmatpush1.msra.mxu0 0.0
        %3571 = vmatprep.subr.mxu0 0.0
        %3572 = vmatpush1.msra.mxu0 0.0
        %3573 = vmatprep.subr.mxu0 0.0
        %3574 = vmatpush1.msra.mxu0 0.0
        %3575 = vmatprep.subr.mxu0 %v1507
        %3576 = vmatpush1.msra.mxu0 %v1506
        %3577 = vmatprep.subr.mxu0 %v1411
        %3578 = vmatpush1.msra.mxu0 %v1410
        %3579 = vmatprep.subr.mxu0 %v1315
        %3580 = vmatpush1.msra.mxu0 %v1314
        %3581 = vmatprep.subr.mxu0 %v1219
        %3582 = vmatpush1.msra.mxu0 %v1218
        %3583 = vmatprep.subr.mxu0 %v1123
        %3584 = vmatpush1.msra.mxu0 %v1122
        %3585 = vmatprep.subr.mxu0 %v1027
        %3586 = vmatpush1.msra.mxu0 %v1026
        %3587 = vmatprep.subr.mxu0 %v931
        %3588 = vmatpush1.msra.mxu0 %v930
        %3589 = vmatprep.subr.mxu0 %v835
        %3590 = vmatpush1.msra.mxu0 %v834
        %3591 = vmatprep.subr.mxu0 0.0
        %3592 = vmatpush2.msra.mxu0 0.0
        %3593 = vmatprep.subr.mxu0 0.0
        %3594 = vmatpush2.msra.mxu0 0.0
        %3595 = vmatprep.subr.mxu0 0.0
        %3596 = vmatpush2.msra.mxu0 0.0
        %3597 = vmatprep.subr.mxu0 0.0
        %3598 = vmatpush2.msra.mxu0 0.0
        %3599 = vmatprep.subr.mxu0 0.0
        %3600 = vmatpush2.msra.mxu0 0.0
        %3601 = vmatprep.subr.mxu0 0.0
        %3602 = vmatpush2.msra.mxu0 0.0
        %3603 = vmatprep.subr.mxu0 0.0
        %3604 = vmatpush2.msra.mxu0 0.0
        %3605 = vmatprep.subr.mxu0 0.0
        %3606 = vmatpush2.msra.mxu0 0.0
        %3607 = vmatprep.subr.mxu0 0.0
        %3608 = vmatpush2.msra.mxu0 0.0
        %3609 = vmatprep.subr.mxu0 0.0
        %3610 = vmatpush2.msra.mxu0 0.0
        %3611 = vmatprep.subr.mxu0 0.0
        %3612 = vmatpush2.msra.mxu0 0.0
        %3613 = vmatprep.subr.mxu0 0.0
        %3614 = vmatpush2.msra.mxu0 0.0
        %3615 = vmatprep.subr.mxu0 0.0
        %3616 = vmatpush2.msra.mxu0 0.0
        %3617 = vmatprep.subr.mxu0 0.0
        %3618 = vmatpush2.msra.mxu0 0.0
        %3619 = vmatprep.subr.mxu0 0.0
        %3620 = vmatpush2.msra.mxu0 0.0
        %3621 = vmatprep.subr.mxu0 0.0
        %3622 = vmatpush2.msra.mxu0 0.0
        %3623 = vmatprep.mubr.f32.mxu0 0.0
        %3624 = vmatmul.mubr.f32.gmra.mxu0 %v2066
        %v3625 = vpop.f32.mrf.mxu0
        %v3626 = vadd.f32 %v1755, %v3625
        %v3627 = vpop.f32.mrf.mxu0
        %v3628 = vadd.f32 %v1759, %v3627
        %3629 = vdwg.mxu0
        %3630 = vmatprep.subr.mxu0 0.0
        %3631 = vmatpush1.msra.mxu0 0.0
        %3632 = vmatprep.subr.mxu0 0.0
        %3633 = vmatpush1.msra.mxu0 0.0
        %3634 = vmatprep.subr.mxu0 0.0
        %3635 = vmatpush1.msra.mxu0 0.0
        %3636 = vmatprep.subr.mxu0 0.0
        %3637 = vmatpush1.msra.mxu0 0.0
        %3638 = vmatprep.subr.mxu0 0.0
        %3639 = vmatpush1.msra.mxu0 0.0
        %3640 = vmatprep.subr.mxu0 0.0
        %3641 = vmatpush1.msra.mxu0 0.0
        %3642 = vmatprep.subr.mxu0 0.0
        %3643 = vmatpush1.msra.mxu0 0.0
        %3644 = vmatprep.subr.mxu0 0.0
        %3645 = vmatpush1.msra.mxu0 0.0
        %3646 = vmatprep.subr.mxu0 %v1509
        %3647 = vmatpush1.msra.mxu0 %v1508
        %3648 = vmatprep.subr.mxu0 %v1413
        %3649 = vmatpush1.msra.mxu0 %v1412
        %3650 = vmatprep.subr.mxu0 %v1317
        %3651 = vmatpush1.msra.mxu0 %v1316
        %3652 = vmatprep.subr.mxu0 %v1221
        %3653 = vmatpush1.msra.mxu0 %v1220
        %3654 = vmatprep.subr.mxu0 %v1125
        %3655 = vmatpush1.msra.mxu0 %v1124
        %3656 = vmatprep.subr.mxu0 %v1029
        %3657 = vmatpush1.msra.mxu0 %v1028
        %3658 = vmatprep.subr.mxu0 %v933
        %3659 = vmatpush1.msra.mxu0 %v932
        %3660 = vmatprep.subr.mxu0 %v837
        %3661 = vmatpush1.msra.mxu0 %v836
        %3662 = vmatprep.subr.mxu0 0.0
        %3663 = vmatpush2.msra.mxu0 0.0
        %3664 = vmatprep.subr.mxu0 0.0
        %3665 = vmatpush2.msra.mxu0 0.0
        %3666 = vmatprep.subr.mxu0 0.0
        %3667 = vmatpush2.msra.mxu0 0.0
        %3668 = vmatprep.subr.mxu0 0.0
        %3669 = vmatpush2.msra.mxu0 0.0
        %3670 = vmatprep.subr.mxu0 0.0
        %3671 = vmatpush2.msra.mxu0 0.0
        %3672 = vmatprep.subr.mxu0 0.0
        %3673 = vmatpush2.msra.mxu0 0.0
        %3674 = vmatprep.subr.mxu0 0.0
        %3675 = vmatpush2.msra.mxu0 0.0
        %3676 = vmatprep.subr.mxu0 0.0
        %3677 = vmatpush2.msra.mxu0 0.0
        %3678 = vmatprep.subr.mxu0 0.0
        %3679 = vmatpush2.msra.mxu0 0.0
        %3680 = vmatprep.subr.mxu0 0.0
        %3681 = vmatpush2.msra.mxu0 0.0
        %3682 = vmatprep.subr.mxu0 0.0
        %3683 = vmatpush2.msra.mxu0 0.0
        %3684 = vmatprep.subr.mxu0 0.0
        %3685 = vmatpush2.msra.mxu0 0.0
        %3686 = vmatprep.subr.mxu0 0.0
        %3687 = vmatpush2.msra.mxu0 0.0
        %3688 = vmatprep.subr.mxu0 0.0
        %3689 = vmatpush2.msra.mxu0 0.0
        %3690 = vmatprep.subr.mxu0 0.0
        %3691 = vmatpush2.msra.mxu0 0.0
        %3692 = vmatprep.subr.mxu0 0.0
        %3693 = vmatpush2.msra.mxu0 0.0
        %3694 = vmatprep.mubr.f32.mxu0 0.0
        %3695 = vmatmul.mubr.f32.gmra.mxu0 %v2066
        %v3696 = vpop.f32.mrf.mxu0
        %v3697 = vadd.f32 %v1763, %v3696
        %v3698 = vpop.f32.mrf.mxu0
        %v3699 = vadd.f32 %v1767, %v3698
        %3700 = vdwg.mxu0
        %3701 = vmatprep.subr.mxu0 0.0
        %3702 = vmatpush1.msra.mxu0 0.0
        %3703 = vmatprep.subr.mxu0 0.0
        %3704 = vmatpush1.msra.mxu0 0.0
        %3705 = vmatprep.subr.mxu0 0.0
        %3706 = vmatpush1.msra.mxu0 0.0
        %3707 = vmatprep.subr.mxu0 0.0
        %3708 = vmatpush1.msra.mxu0 0.0
        %3709 = vmatprep.subr.mxu0 0.0
        %3710 = vmatpush1.msra.mxu0 0.0
        %3711 = vmatprep.subr.mxu0 0.0
        %3712 = vmatpush1.msra.mxu0 0.0
        %3713 = vmatprep.subr.mxu0 0.0
        %3714 = vmatpush1.msra.mxu0 0.0
        %3715 = vmatprep.subr.mxu0 0.0
        %3716 = vmatpush1.msra.mxu0 0.0
        %3717 = vmatprep.subr.mxu0 %v1511
        %3718 = vmatpush1.msra.mxu0 %v1510
        %3719 = vmatprep.subr.mxu0 %v1415
        %3720 = vmatpush1.msra.mxu0 %v1414
        %3721 = vmatprep.subr.mxu0 %v1319
        %3722 = vmatpush1.msra.mxu0 %v1318
        %3723 = vmatprep.subr.mxu0 %v1223
        %3724 = vmatpush1.msra.mxu0 %v1222
        %3725 = vmatprep.subr.mxu0 %v1127
        %3726 = vmatpush1.msra.mxu0 %v1126
        %3727 = vmatprep.subr.mxu0 %v1031
        %3728 = vmatpush1.msra.mxu0 %v1030
        %3729 = vmatprep.subr.mxu0 %v935
        %3730 = vmatpush1.msra.mxu0 %v934
        %3731 = vmatprep.subr.mxu0 %v839
        %3732 = vmatpush1.msra.mxu0 %v838
        %3733 = vmatprep.subr.mxu0 0.0
        %3734 = vmatpush2.msra.mxu0 0.0
        %3735 = vmatprep.subr.mxu0 0.0
        %3736 = vmatpush2.msra.mxu0 0.0
        %3737 = vmatprep.subr.mxu0 0.0
        %3738 = vmatpush2.msra.mxu0 0.0
        %3739 = vmatprep.subr.mxu0 0.0
        %3740 = vmatpush2.msra.mxu0 0.0
        %3741 = vmatprep.subr.mxu0 0.0
        %3742 = vmatpush2.msra.mxu0 0.0
        %3743 = vmatprep.subr.mxu0 0.0
        %3744 = vmatpush2.msra.mxu0 0.0
        %3745 = vmatprep.subr.mxu0 0.0
        %3746 = vmatpush2.msra.mxu0 0.0
        %3747 = vmatprep.subr.mxu0 0.0
        %3748 = vmatpush2.msra.mxu0 0.0
        %3749 = vmatprep.subr.mxu0 0.0
        %3750 = vmatpush2.msra.mxu0 0.0
        %3751 = vmatprep.subr.mxu0 0.0
        %3752 = vmatpush2.msra.mxu0 0.0
        %3753 = vmatprep.subr.mxu0 0.0
        %3754 = vmatpush2.msra.mxu0 0.0
        %3755 = vmatprep.subr.mxu0 0.0
        %3756 = vmatpush2.msra.mxu0 0.0
        %3757 = vmatprep.subr.mxu0 0.0
        %3758 = vmatpush2.msra.mxu0 0.0
        %3759 = vmatprep.subr.mxu0 0.0
        %3760 = vmatpush2.msra.mxu0 0.0
        %3761 = vmatprep.subr.mxu0 0.0
        %3762 = vmatpush2.msra.mxu0 0.0
        %3763 = vmatprep.subr.mxu0 0.0
        %3764 = vmatpush2.msra.mxu0 0.0
        %3765 = vmatprep.mubr.f32.mxu0 0.0
        %3766 = vmatmul.mubr.f32.gmra.mxu0 %v2066
        %v3767 = vpop.f32.mrf.mxu0
        %v3768 = vadd.f32 %v1771, %v3767
        %v3769 = vpop.f32.mrf.mxu0
        %v3770 = vadd.f32 %v1775, %v3769
        %3771 = vdwg.mxu0
        %3772 = vmatprep.subr.mxu0 0.0
        %3773 = vmatpush1.msra.mxu0 0.0
        %3774 = vmatprep.subr.mxu0 0.0
        %3775 = vmatpush1.msra.mxu0 0.0
        %3776 = vmatprep.subr.mxu0 0.0
        %3777 = vmatpush1.msra.mxu0 0.0
        %3778 = vmatprep.subr.mxu0 0.0
        %3779 = vmatpush1.msra.mxu0 0.0
        %3780 = vmatprep.subr.mxu0 0.0
        %3781 = vmatpush1.msra.mxu0 0.0
        %3782 = vmatprep.subr.mxu0 0.0
        %3783 = vmatpush1.msra.mxu0 0.0
        %3784 = vmatprep.subr.mxu0 0.0
        %3785 = vmatpush1.msra.mxu0 0.0
        %3786 = vmatprep.subr.mxu0 0.0
        %3787 = vmatpush1.msra.mxu0 0.0
        %3788 = vmatprep.subr.mxu0 %v1513
        %3789 = vmatpush1.msra.mxu0 %v1512
        %3790 = vmatprep.subr.mxu0 %v1417
        %3791 = vmatpush1.msra.mxu0 %v1416
        %3792 = vmatprep.subr.mxu0 %v1321
        %3793 = vmatpush1.msra.mxu0 %v1320
        %3794 = vmatprep.subr.mxu0 %v1225
        %3795 = vmatpush1.msra.mxu0 %v1224
        %3796 = vmatprep.subr.mxu0 %v1129
        %3797 = vmatpush1.msra.mxu0 %v1128
        %3798 = vmatprep.subr.mxu0 %v1033
        %3799 = vmatpush1.msra.mxu0 %v1032
        %3800 = vmatprep.subr.mxu0 %v937
        %3801 = vmatpush1.msra.mxu0 %v936
        %3802 = vmatprep.subr.mxu0 %v841
        %3803 = vmatpush1.msra.mxu0 %v840
        %3804 = vmatprep.subr.mxu0 0.0
        %3805 = vmatpush2.msra.mxu0 0.0
        %3806 = vmatprep.subr.mxu0 0.0
        %3807 = vmatpush2.msra.mxu0 0.0
        %3808 = vmatprep.subr.mxu0 0.0
        %3809 = vmatpush2.msra.mxu0 0.0
        %3810 = vmatprep.subr.mxu0 0.0
        %3811 = vmatpush2.msra.mxu0 0.0
        %3812 = vmatprep.subr.mxu0 0.0
        %3813 = vmatpush2.msra.mxu0 0.0
        %3814 = vmatprep.subr.mxu0 0.0
        %3815 = vmatpush2.msra.mxu0 0.0
        %3816 = vmatprep.subr.mxu0 0.0
        %3817 = vmatpush2.msra.mxu0 0.0
        %3818 = vmatprep.subr.mxu0 0.0
        %3819 = vmatpush2.msra.mxu0 0.0
        %3820 = vmatprep.subr.mxu0 0.0
        %3821 = vmatpush2.msra.mxu0 0.0
        %3822 = vmatprep.subr.mxu0 0.0
        %3823 = vmatpush2.msra.mxu0 0.0
        %3824 = vmatprep.subr.mxu0 0.0
        %3825 = vmatpush2.msra.mxu0 0.0
        %3826 = vmatprep.subr.mxu0 0.0
        %3827 = vmatpush2.msra.mxu0 0.0
        %3828 = vmatprep.subr.mxu0 0.0
        %3829 = vmatpush2.msra.mxu0 0.0
        %3830 = vmatprep.subr.mxu0 0.0
        %3831 = vmatpush2.msra.mxu0 0.0
        %3832 = vmatprep.subr.mxu0 0.0
        %3833 = vmatpush2.msra.mxu0 0.0
        %3834 = vmatprep.subr.mxu0 0.0
        %3835 = vmatpush2.msra.mxu0 0.0
        %3836 = vmatprep.mubr.f32.mxu0 0.0
        %3837 = vmatmul.mubr.f32.gmra.mxu0 %v2066
        %v3838 = vpop.f32.mrf.mxu0
        %v3839 = vadd.f32 %v1779, %v3838
        %v3840 = vpop.f32.mrf.mxu0
        %v3841 = vadd.f32 %v1783, %v3840
        %3842 = vdwg.mxu0
        %3843 = vmatprep.subr.mxu0 0.0
        %3844 = vmatpush1.msra.mxu0 0.0
        %3845 = vmatprep.subr.mxu0 0.0
        %3846 = vmatpush1.msra.mxu0 0.0
        %3847 = vmatprep.subr.mxu0 0.0
        %3848 = vmatpush1.msra.mxu0 0.0
        %3849 = vmatprep.subr.mxu0 0.0
        %3850 = vmatpush1.msra.mxu0 0.0
        %3851 = vmatprep.subr.mxu0 0.0
        %3852 = vmatpush1.msra.mxu0 0.0
        %3853 = vmatprep.subr.mxu0 0.0
        %3854 = vmatpush1.msra.mxu0 0.0
        %3855 = vmatprep.subr.mxu0 0.0
        %3856 = vmatpush1.msra.mxu0 0.0
        %3857 = vmatprep.subr.mxu0 0.0
        %3858 = vmatpush1.msra.mxu0 0.0
        %3859 = vmatprep.subr.mxu0 %v1515
        %3860 = vmatpush1.msra.mxu0 %v1514
        %3861 = vmatprep.subr.mxu0 %v1419
        %3862 = vmatpush1.msra.mxu0 %v1418
        %3863 = vmatprep.subr.mxu0 %v1323
        %3864 = vmatpush1.msra.mxu0 %v1322
        %3865 = vmatprep.subr.mxu0 %v1227
        %3866 = vmatpush1.msra.mxu0 %v1226
        %3867 = vmatprep.subr.mxu0 %v1131
        %3868 = vmatpush1.msra.mxu0 %v1130
        %3869 = vmatprep.subr.mxu0 %v1035
        %3870 = vmatpush1.msra.mxu0 %v1034
        %3871 = vmatprep.subr.mxu0 %v939
        %3872 = vmatpush1.msra.mxu0 %v938
        %3873 = vmatprep.subr.mxu0 %v843
        %3874 = vmatpush1.msra.mxu0 %v842
        %3875 = vmatprep.subr.mxu0 0.0
        %3876 = vmatpush2.msra.mxu0 0.0
        %3877 = vmatprep.subr.mxu0 0.0
        %3878 = vmatpush2.msra.mxu0 0.0
        %3879 = vmatprep.subr.mxu0 0.0
        %3880 = vmatpush2.msra.mxu0 0.0
        %3881 = vmatprep.subr.mxu0 0.0
        %3882 = vmatpush2.msra.mxu0 0.0
        %3883 = vmatprep.subr.mxu0 0.0
        %3884 = vmatpush2.msra.mxu0 0.0
        %3885 = vmatprep.subr.mxu0 0.0
        %3886 = vmatpush2.msra.mxu0 0.0
        %3887 = vmatprep.subr.mxu0 0.0
        %3888 = vmatpush2.msra.mxu0 0.0
        %3889 = vmatprep.subr.mxu0 0.0
        %3890 = vmatpush2.msra.mxu0 0.0
        %3891 = vmatprep.subr.mxu0 0.0
        %3892 = vmatpush2.msra.mxu0 0.0
        %3893 = vmatprep.subr.mxu0 0.0
        %3894 = vmatpush2.msra.mxu0 0.0
        %3895 = vmatprep.subr.mxu0 0.0
        %3896 = vmatpush2.msra.mxu0 0.0
        %3897 = vmatprep.subr.mxu0 0.0
        %3898 = vmatpush2.msra.mxu0 0.0
        %3899 = vmatprep.subr.mxu0 0.0
        %3900 = vmatpush2.msra.mxu0 0.0
        %3901 = vmatprep.subr.mxu0 0.0
        %3902 = vmatpush2.msra.mxu0 0.0
        %3903 = vmatprep.subr.mxu0 0.0
        %3904 = vmatpush2.msra.mxu0 0.0
        %3905 = vmatprep.subr.mxu0 0.0
        %3906 = vmatpush2.msra.mxu0 0.0
        %3907 = vmatprep.mubr.f32.mxu0 0.0
        %3908 = vmatmul.mubr.f32.gmra.mxu0 %v2066
        %v3909 = vpop.f32.mrf.mxu0
        %v3910 = vadd.f32 %v1787, %v3909
        %v3911 = vpop.f32.mrf.mxu0
        %v3912 = vadd.f32 %v1791, %v3911
        %3913 = vdwg.mxu0
        %3914 = vmatprep.subr.mxu0 0.0
        %3915 = vmatpush1.msra.mxu0 0.0
        %3916 = vmatprep.subr.mxu0 0.0
        %3917 = vmatpush1.msra.mxu0 0.0
        %3918 = vmatprep.subr.mxu0 0.0
        %3919 = vmatpush1.msra.mxu0 0.0
        %3920 = vmatprep.subr.mxu0 0.0
        %3921 = vmatpush1.msra.mxu0 0.0
        %3922 = vmatprep.subr.mxu0 0.0
        %3923 = vmatpush1.msra.mxu0 0.0
        %3924 = vmatprep.subr.mxu0 0.0
        %3925 = vmatpush1.msra.mxu0 0.0
        %3926 = vmatprep.subr.mxu0 0.0
        %3927 = vmatpush1.msra.mxu0 0.0
        %3928 = vmatprep.subr.mxu0 0.0
        %3929 = vmatpush1.msra.mxu0 0.0
        %3930 = vmatprep.subr.mxu0 %v1517
        %3931 = vmatpush1.msra.mxu0 %v1516
        %3932 = vmatprep.subr.mxu0 %v1421
        %3933 = vmatpush1.msra.mxu0 %v1420
        %3934 = vmatprep.subr.mxu0 %v1325
        %3935 = vmatpush1.msra.mxu0 %v1324
        %3936 = vmatprep.subr.mxu0 %v1229
        %3937 = vmatpush1.msra.mxu0 %v1228
        %3938 = vmatprep.subr.mxu0 %v1133
        %3939 = vmatpush1.msra.mxu0 %v1132
        %3940 = vmatprep.subr.mxu0 %v1037
        %3941 = vmatpush1.msra.mxu0 %v1036
        %3942 = vmatprep.subr.mxu0 %v941
        %3943 = vmatpush1.msra.mxu0 %v940
        %3944 = vmatprep.subr.mxu0 %v845
        %3945 = vmatpush1.msra.mxu0 %v844
        %3946 = vmatprep.subr.mxu0 0.0
        %3947 = vmatpush2.msra.mxu0 0.0
        %3948 = vmatprep.subr.mxu0 0.0
        %3949 = vmatpush2.msra.mxu0 0.0
        %3950 = vmatprep.subr.mxu0 0.0
        %3951 = vmatpush2.msra.mxu0 0.0
        %3952 = vmatprep.subr.mxu0 0.0
        %3953 = vmatpush2.msra.mxu0 0.0
        %3954 = vmatprep.subr.mxu0 0.0
        %3955 = vmatpush2.msra.mxu0 0.0
        %3956 = vmatprep.subr.mxu0 0.0
        %3957 = vmatpush2.msra.mxu0 0.0
        %3958 = vmatprep.subr.mxu0 0.0
        %3959 = vmatpush2.msra.mxu0 0.0
        %3960 = vmatprep.subr.mxu0 0.0
        %3961 = vmatpush2.msra.mxu0 0.0
        %3962 = vmatprep.subr.mxu0 0.0
        %3963 = vmatpush2.msra.mxu0 0.0
        %3964 = vmatprep.subr.mxu0 0.0
        %3965 = vmatpush2.msra.mxu0 0.0
        %3966 = vmatprep.subr.mxu0 0.0
        %3967 = vmatpush2.msra.mxu0 0.0
        %3968 = vmatprep.subr.mxu0 0.0
        %3969 = vmatpush2.msra.mxu0 0.0
        %3970 = vmatprep.subr.mxu0 0.0
        %3971 = vmatpush2.msra.mxu0 0.0
        %3972 = vmatprep.subr.mxu0 0.0
        %3973 = vmatpush2.msra.mxu0 0.0
        %3974 = vmatprep.subr.mxu0 0.0
        %3975 = vmatpush2.msra.mxu0 0.0
        %3976 = vmatprep.subr.mxu0 0.0
        %3977 = vmatpush2.msra.mxu0 0.0
        %3978 = vmatprep.mubr.f32.mxu0 0.0
        %3979 = vmatmul.mubr.f32.gmra.mxu0 %v2066
        %v3980 = vpop.f32.mrf.mxu0
        %v3981 = vadd.f32 %v1795, %v3980
        %v3982 = vpop.f32.mrf.mxu0
        %v3983 = vadd.f32 %v1799, %v3982
        %3984 = vdwg.mxu0
        %3985 = vmatprep.subr.mxu0 0.0
        %3986 = vmatpush1.msra.mxu0 0.0
        %3987 = vmatprep.subr.mxu0 0.0
        %3988 = vmatpush1.msra.mxu0 0.0
        %3989 = vmatprep.subr.mxu0 0.0
        %3990 = vmatpush1.msra.mxu0 0.0
        %3991 = vmatprep.subr.mxu0 0.0
        %3992 = vmatpush1.msra.mxu0 0.0
        %3993 = vmatprep.subr.mxu0 0.0
        %3994 = vmatpush1.msra.mxu0 0.0
        %3995 = vmatprep.subr.mxu0 0.0
        %3996 = vmatpush1.msra.mxu0 0.0
        %3997 = vmatprep.subr.mxu0 0.0
        %3998 = vmatpush1.msra.mxu0 0.0
        %3999 = vmatprep.subr.mxu0 0.0
        %4000 = vmatpush1.msra.mxu0 0.0
        %4001 = vmatprep.subr.mxu0 %v1519
        %4002 = vmatpush1.msra.mxu0 %v1518
        %4003 = vmatprep.subr.mxu0 %v1423
        %4004 = vmatpush1.msra.mxu0 %v1422
        %4005 = vmatprep.subr.mxu0 %v1327
        %4006 = vmatpush1.msra.mxu0 %v1326
        %4007 = vmatprep.subr.mxu0 %v1231
        %4008 = vmatpush1.msra.mxu0 %v1230
        %4009 = vmatprep.subr.mxu0 %v1135
        %4010 = vmatpush1.msra.mxu0 %v1134
        %4011 = vmatprep.subr.mxu0 %v1039
        %4012 = vmatpush1.msra.mxu0 %v1038
        %4013 = vmatprep.subr.mxu0 %v943
        %4014 = vmatpush1.msra.mxu0 %v942
        %4015 = vmatprep.subr.mxu0 %v847
        %4016 = vmatpush1.msra.mxu0 %v846
        %4017 = vmatprep.subr.mxu0 0.0
        %4018 = vmatpush2.msra.mxu0 0.0
        %4019 = vmatprep.subr.mxu0 0.0
        %4020 = vmatpush2.msra.mxu0 0.0
        %4021 = vmatprep.subr.mxu0 0.0
        %4022 = vmatpush2.msra.mxu0 0.0
        %4023 = vmatprep.subr.mxu0 0.0
        %4024 = vmatpush2.msra.mxu0 0.0
        %4025 = vmatprep.subr.mxu0 0.0
        %4026 = vmatpush2.msra.mxu0 0.0
        %4027 = vmatprep.subr.mxu0 0.0
        %4028 = vmatpush2.msra.mxu0 0.0
        %4029 = vmatprep.subr.mxu0 0.0
        %4030 = vmatpush2.msra.mxu0 0.0
        %4031 = vmatprep.subr.mxu0 0.0
        %4032 = vmatpush2.msra.mxu0 0.0
        %4033 = vmatprep.subr.mxu0 0.0
        %4034 = vmatpush2.msra.mxu0 0.0
        %4035 = vmatprep.subr.mxu0 0.0
        %4036 = vmatpush2.msra.mxu0 0.0
        %4037 = vmatprep.subr.mxu0 0.0
        %4038 = vmatpush2.msra.mxu0 0.0
        %4039 = vmatprep.subr.mxu0 0.0
        %4040 = vmatpush2.msra.mxu0 0.0
        %4041 = vmatprep.subr.mxu0 0.0
        %4042 = vmatpush2.msra.mxu0 0.0
        %4043 = vmatprep.subr.mxu0 0.0
        %4044 = vmatpush2.msra.mxu0 0.0
        %4045 = vmatprep.subr.mxu0 0.0
        %4046 = vmatpush2.msra.mxu0 0.0
        %4047 = vmatprep.subr.mxu0 0.0
        %4048 = vmatpush2.msra.mxu0 0.0
        %4049 = vmatprep.mubr.f32.mxu0 0.0
        %4050 = vmatmul.mubr.f32.gmra.mxu0 %v2066
        %v4051 = vpop.f32.mrf.mxu0
        %v4052 = vadd.f32 %v1803, %v4051
        %v4053 = vpop.f32.mrf.mxu0
        %v4054 = vadd.f32 %v1807, %v4053
        %4055 = vdwg.mxu0
        %4056 = vmatprep.subr.mxu0 0.0
        %4057 = vmatpush1.msra.mxu0 0.0
        %4058 = vmatprep.subr.mxu0 0.0
        %4059 = vmatpush1.msra.mxu0 0.0
        %4060 = vmatprep.subr.mxu0 0.0
        %4061 = vmatpush1.msra.mxu0 0.0
        %4062 = vmatprep.subr.mxu0 0.0
        %4063 = vmatpush1.msra.mxu0 0.0
        %4064 = vmatprep.subr.mxu0 0.0
        %4065 = vmatpush1.msra.mxu0 0.0
        %4066 = vmatprep.subr.mxu0 0.0
        %4067 = vmatpush1.msra.mxu0 0.0
        %4068 = vmatprep.subr.mxu0 0.0
        %4069 = vmatpush1.msra.mxu0 0.0
        %4070 = vmatprep.subr.mxu0 0.0
        %4071 = vmatpush1.msra.mxu0 0.0
        %4072 = vmatprep.subr.mxu0 %v1521
        %4073 = vmatpush1.msra.mxu0 %v1520
        %4074 = vmatprep.subr.mxu0 %v1425
        %4075 = vmatpush1.msra.mxu0 %v1424
        %4076 = vmatprep.subr.mxu0 %v1329
        %4077 = vmatpush1.msra.mxu0 %v1328
        %4078 = vmatprep.subr.mxu0 %v1233
        %4079 = vmatpush1.msra.mxu0 %v1232
        %4080 = vmatprep.subr.mxu0 %v1137
        %4081 = vmatpush1.msra.mxu0 %v1136
        %4082 = vmatprep.subr.mxu0 %v1041
        %4083 = vmatpush1.msra.mxu0 %v1040
        %4084 = vmatprep.subr.mxu0 %v945
        %4085 = vmatpush1.msra.mxu0 %v944
        %4086 = vmatprep.subr.mxu0 %v849
        %4087 = vmatpush1.msra.mxu0 %v848
        %4088 = vmatprep.subr.mxu0 0.0
        %4089 = vmatpush2.msra.mxu0 0.0
        %4090 = vmatprep.subr.mxu0 0.0
        %4091 = vmatpush2.msra.mxu0 0.0
        %4092 = vmatprep.subr.mxu0 0.0
        %4093 = vmatpush2.msra.mxu0 0.0
        %4094 = vmatprep.subr.mxu0 0.0
        %4095 = vmatpush2.msra.mxu0 0.0
        %4096 = vmatprep.subr.mxu0 0.0
        %4097 = vmatpush2.msra.mxu0 0.0
        %4098 = vmatprep.subr.mxu0 0.0
        %4099 = vmatpush2.msra.mxu0 0.0
        %4100 = vmatprep.subr.mxu0 0.0
        %4101 = vmatpush2.msra.mxu0 0.0
        %4102 = vmatprep.subr.mxu0 0.0
        %4103 = vmatpush2.msra.mxu0 0.0
        %4104 = vmatprep.subr.mxu0 0.0
        %4105 = vmatpush2.msra.mxu0 0.0
        %4106 = vmatprep.subr.mxu0 0.0
        %4107 = vmatpush2.msra.mxu0 0.0
        %4108 = vmatprep.subr.mxu0 0.0
        %4109 = vmatpush2.msra.mxu0 0.0
        %4110 = vmatprep.subr.mxu0 0.0
        %4111 = vmatpush2.msra.mxu0 0.0
        %4112 = vmatprep.subr.mxu0 0.0
        %4113 = vmatpush2.msra.mxu0 0.0
        %4114 = vmatprep.subr.mxu0 0.0
        %4115 = vmatpush2.msra.mxu0 0.0
        %4116 = vmatprep.subr.mxu0 0.0
        %4117 = vmatpush2.msra.mxu0 0.0
        %4118 = vmatprep.subr.mxu0 0.0
        %4119 = vmatpush2.msra.mxu0 0.0
        %4120 = vmatprep.mubr.f32.mxu0 0.0
        %4121 = vmatmul.mubr.f32.gmra.mxu0 %v2066
        %v4122 = vpop.f32.mrf.mxu0
        %v4123 = vadd.f32 %v1811, %v4122
        %v4124 = vpop.f32.mrf.mxu0
        %v4125 = vadd.f32 %v1815, %v4124
        %4126 = vdwg.mxu0
        %4127 = vmatprep.subr.mxu0 0.0
        %4128 = vmatpush1.msra.mxu0 0.0
        %4129 = vmatprep.subr.mxu0 0.0
        %4130 = vmatpush1.msra.mxu0 0.0
        %4131 = vmatprep.subr.mxu0 0.0
        %4132 = vmatpush1.msra.mxu0 0.0
        %4133 = vmatprep.subr.mxu0 0.0
        %4134 = vmatpush1.msra.mxu0 0.0
        %4135 = vmatprep.subr.mxu0 0.0
        %4136 = vmatpush1.msra.mxu0 0.0
        %4137 = vmatprep.subr.mxu0 0.0
        %4138 = vmatpush1.msra.mxu0 0.0
        %4139 = vmatprep.subr.mxu0 0.0
        %4140 = vmatpush1.msra.mxu0 0.0
        %4141 = vmatprep.subr.mxu0 0.0
        %4142 = vmatpush1.msra.mxu0 0.0
        %4143 = vmatprep.subr.mxu0 %v1523
        %4144 = vmatpush1.msra.mxu0 %v1522
        %4145 = vmatprep.subr.mxu0 %v1427
        %4146 = vmatpush1.msra.mxu0 %v1426
        %4147 = vmatprep.subr.mxu0 %v1331
        %4148 = vmatpush1.msra.mxu0 %v1330
        %4149 = vmatprep.subr.mxu0 %v1235
        %4150 = vmatpush1.msra.mxu0 %v1234
        %4151 = vmatprep.subr.mxu0 %v1139
        %4152 = vmatpush1.msra.mxu0 %v1138
        %4153 = vmatprep.subr.mxu0 %v1043
        %4154 = vmatpush1.msra.mxu0 %v1042
        %4155 = vmatprep.subr.mxu0 %v947
        %4156 = vmatpush1.msra.mxu0 %v946
        %4157 = vmatprep.subr.mxu0 %v851
        %4158 = vmatpush1.msra.mxu0 %v850
        %4159 = vmatprep.subr.mxu0 0.0
        %4160 = vmatpush2.msra.mxu0 0.0
        %4161 = vmatprep.subr.mxu0 0.0
        %4162 = vmatpush2.msra.mxu0 0.0
        %4163 = vmatprep.subr.mxu0 0.0
        %4164 = vmatpush2.msra.mxu0 0.0
        %4165 = vmatprep.subr.mxu0 0.0
        %4166 = vmatpush2.msra.mxu0 0.0
        %4167 = vmatprep.subr.mxu0 0.0
        %4168 = vmatpush2.msra.mxu0 0.0
        %4169 = vmatprep.subr.mxu0 0.0
        %4170 = vmatpush2.msra.mxu0 0.0
        %4171 = vmatprep.subr.mxu0 0.0
        %4172 = vmatpush2.msra.mxu0 0.0
        %4173 = vmatprep.subr.mxu0 0.0
        %4174 = vmatpush2.msra.mxu0 0.0
        %4175 = vmatprep.subr.mxu0 0.0
        %4176 = vmatpush2.msra.mxu0 0.0
        %4177 = vmatprep.subr.mxu0 0.0
        %4178 = vmatpush2.msra.mxu0 0.0
        %4179 = vmatprep.subr.mxu0 0.0
        %4180 = vmatpush2.msra.mxu0 0.0
        %4181 = vmatprep.subr.mxu0 0.0
        %4182 = vmatpush2.msra.mxu0 0.0
        %4183 = vmatprep.subr.mxu0 0.0
        %4184 = vmatpush2.msra.mxu0 0.0
        %4185 = vmatprep.subr.mxu0 0.0
        %4186 = vmatpush2.msra.mxu0 0.0
        %4187 = vmatprep.subr.mxu0 0.0
        %4188 = vmatpush2.msra.mxu0 0.0
        %4189 = vmatprep.subr.mxu0 0.0
        %4190 = vmatpush2.msra.mxu0 0.0
        %4191 = vmatprep.mubr.f32.mxu0 0.0
        %4192 = vmatmul.mubr.f32.gmra.mxu0 %v2066
        %v4193 = vpop.f32.mrf.mxu0
        %v4194 = vadd.f32 %v1819, %v4193
        %v4195 = vpop.f32.mrf.mxu0
        %v4196 = vadd.f32 %v1823, %v4195
        %4197 = vdwg.mxu0
        %4198 = vmatprep.subr.mxu0 0.0
        %4199 = vmatpush1.msra.mxu0 0.0
        %4200 = vmatprep.subr.mxu0 0.0
        %4201 = vmatpush1.msra.mxu0 0.0
        %4202 = vmatprep.subr.mxu0 0.0
        %4203 = vmatpush1.msra.mxu0 0.0
        %4204 = vmatprep.subr.mxu0 0.0
        %4205 = vmatpush1.msra.mxu0 0.0
        %4206 = vmatprep.subr.mxu0 0.0
        %4207 = vmatpush1.msra.mxu0 0.0
        %4208 = vmatprep.subr.mxu0 0.0
        %4209 = vmatpush1.msra.mxu0 0.0
        %4210 = vmatprep.subr.mxu0 0.0
        %4211 = vmatpush1.msra.mxu0 0.0
        %4212 = vmatprep.subr.mxu0 0.0
        %4213 = vmatpush1.msra.mxu0 0.0
        %4214 = vmatprep.subr.mxu0 %v1525
        %4215 = vmatpush1.msra.mxu0 %v1524
        %4216 = vmatprep.subr.mxu0 %v1429
        %4217 = vmatpush1.msra.mxu0 %v1428
        %4218 = vmatprep.subr.mxu0 %v1333
        %4219 = vmatpush1.msra.mxu0 %v1332
        %4220 = vmatprep.subr.mxu0 %v1237
        %4221 = vmatpush1.msra.mxu0 %v1236
        %4222 = vmatprep.subr.mxu0 %v1141
        %4223 = vmatpush1.msra.mxu0 %v1140
        %4224 = vmatprep.subr.mxu0 %v1045
        %4225 = vmatpush1.msra.mxu0 %v1044
        %4226 = vmatprep.subr.mxu0 %v949
        %4227 = vmatpush1.msra.mxu0 %v948
        %4228 = vmatprep.subr.mxu0 %v853
        %4229 = vmatpush1.msra.mxu0 %v852
        %4230 = vmatprep.subr.mxu0 0.0
        %4231 = vmatpush2.msra.mxu0 0.0
        %4232 = vmatprep.subr.mxu0 0.0
        %4233 = vmatpush2.msra.mxu0 0.0
        %4234 = vmatprep.subr.mxu0 0.0
        %4235 = vmatpush2.msra.mxu0 0.0
        %4236 = vmatprep.subr.mxu0 0.0
        %4237 = vmatpush2.msra.mxu0 0.0
        %4238 = vmatprep.subr.mxu0 0.0
        %4239 = vmatpush2.msra.mxu0 0.0
        %4240 = vmatprep.subr.mxu0 0.0
        %4241 = vmatpush2.msra.mxu0 0.0
        %4242 = vmatprep.subr.mxu0 0.0
        %4243 = vmatpush2.msra.mxu0 0.0
        %4244 = vmatprep.subr.mxu0 0.0
        %4245 = vmatpush2.msra.mxu0 0.0
        %4246 = vmatprep.subr.mxu0 0.0
        %4247 = vmatpush2.msra.mxu0 0.0
        %4248 = vmatprep.subr.mxu0 0.0
        %4249 = vmatpush2.msra.mxu0 0.0
        %4250 = vmatprep.subr.mxu0 0.0
        %4251 = vmatpush2.msra.mxu0 0.0
        %4252 = vmatprep.subr.mxu0 0.0
        %4253 = vmatpush2.msra.mxu0 0.0
        %4254 = vmatprep.subr.mxu0 0.0
        %4255 = vmatpush2.msra.mxu0 0.0
        %4256 = vmatprep.subr.mxu0 0.0
        %4257 = vmatpush2.msra.mxu0 0.0
        %4258 = vmatprep.subr.mxu0 0.0
        %4259 = vmatpush2.msra.mxu0 0.0
        %4260 = vmatprep.subr.mxu0 0.0
        %4261 = vmatpush2.msra.mxu0 0.0
        %4262 = vmatprep.mubr.f32.mxu0 0.0
        %4263 = vmatmul.mubr.f32.gmra.mxu0 %v2066
        %v4264 = vpop.f32.mrf.mxu0
        %v4265 = vadd.f32 %v1827, %v4264
        %v4266 = vpop.f32.mrf.mxu0
        %v4267 = vadd.f32 %v1831, %v4266
        %4268 = vdwg.mxu0
        %4269 = vmatprep.subr.mxu0 0.0
        %4270 = vmatpush1.msra.mxu0 0.0
        %4271 = vmatprep.subr.mxu0 0.0
        %4272 = vmatpush1.msra.mxu0 0.0
        %4273 = vmatprep.subr.mxu0 0.0
        %4274 = vmatpush1.msra.mxu0 0.0
        %4275 = vmatprep.subr.mxu0 0.0
        %4276 = vmatpush1.msra.mxu0 0.0
        %4277 = vmatprep.subr.mxu0 0.0
        %4278 = vmatpush1.msra.mxu0 0.0
        %4279 = vmatprep.subr.mxu0 0.0
        %4280 = vmatpush1.msra.mxu0 0.0
        %4281 = vmatprep.subr.mxu0 0.0
        %4282 = vmatpush1.msra.mxu0 0.0
        %4283 = vmatprep.subr.mxu0 0.0
        %4284 = vmatpush1.msra.mxu0 0.0
        %4285 = vmatprep.subr.mxu0 %v1527
        %4286 = vmatpush1.msra.mxu0 %v1526
        %4287 = vmatprep.subr.mxu0 %v1431
        %4288 = vmatpush1.msra.mxu0 %v1430
        %4289 = vmatprep.subr.mxu0 %v1335
        %4290 = vmatpush1.msra.mxu0 %v1334
        %4291 = vmatprep.subr.mxu0 %v1239
        %4292 = vmatpush1.msra.mxu0 %v1238
        %4293 = vmatprep.subr.mxu0 %v1143
        %4294 = vmatpush1.msra.mxu0 %v1142
        %4295 = vmatprep.subr.mxu0 %v1047
        %4296 = vmatpush1.msra.mxu0 %v1046
        %4297 = vmatprep.subr.mxu0 %v951
        %4298 = vmatpush1.msra.mxu0 %v950
        %4299 = vmatprep.subr.mxu0 %v855
        %4300 = vmatpush1.msra.mxu0 %v854
        %4301 = vmatprep.subr.mxu0 0.0
        %4302 = vmatpush2.msra.mxu0 0.0
        %4303 = vmatprep.subr.mxu0 0.0
        %4304 = vmatpush2.msra.mxu0 0.0
        %4305 = vmatprep.subr.mxu0 0.0
        %4306 = vmatpush2.msra.mxu0 0.0
        %4307 = vmatprep.subr.mxu0 0.0
        %4308 = vmatpush2.msra.mxu0 0.0
        %4309 = vmatprep.subr.mxu0 0.0
        %4310 = vmatpush2.msra.mxu0 0.0
        %4311 = vmatprep.subr.mxu0 0.0
        %4312 = vmatpush2.msra.mxu0 0.0
        %4313 = vmatprep.subr.mxu0 0.0
        %4314 = vmatpush2.msra.mxu0 0.0
        %4315 = vmatprep.subr.mxu0 0.0
        %4316 = vmatpush2.msra.mxu0 0.0
        %4317 = vmatprep.subr.mxu0 0.0
        %4318 = vmatpush2.msra.mxu0 0.0
        %4319 = vmatprep.subr.mxu0 0.0
        %4320 = vmatpush2.msra.mxu0 0.0
        %4321 = vmatprep.subr.mxu0 0.0
        %4322 = vmatpush2.msra.mxu0 0.0
        %4323 = vmatprep.subr.mxu0 0.0
        %4324 = vmatpush2.msra.mxu0 0.0
        %4325 = vmatprep.subr.mxu0 0.0
        %4326 = vmatpush2.msra.mxu0 0.0
        %4327 = vmatprep.subr.mxu0 0.0
        %4328 = vmatpush2.msra.mxu0 0.0
        %4329 = vmatprep.subr.mxu0 0.0
        %4330 = vmatpush2.msra.mxu0 0.0
        %4331 = vmatprep.subr.mxu0 0.0
        %4332 = vmatpush2.msra.mxu0 0.0
        %4333 = vmatprep.mubr.f32.mxu0 0.0
        %4334 = vmatmul.mubr.f32.gmra.mxu0 %v2066
        %v4335 = vpop.f32.mrf.mxu0
        %v4336 = vadd.f32 %v1835, %v4335
        %v4337 = vpop.f32.mrf.mxu0
        %v4338 = vadd.f32 %v1839, %v4337
        %4339 = vdwg.mxu0
        %4340 = vmatprep.subr.mxu0 0.0
        %4341 = vmatpush1.msra.mxu0 0.0
        %4342 = vmatprep.subr.mxu0 0.0
        %4343 = vmatpush1.msra.mxu0 0.0
        %4344 = vmatprep.subr.mxu0 0.0
        %4345 = vmatpush1.msra.mxu0 0.0
        %4346 = vmatprep.subr.mxu0 0.0
        %4347 = vmatpush1.msra.mxu0 0.0
        %4348 = vmatprep.subr.mxu0 0.0
        %4349 = vmatpush1.msra.mxu0 0.0
        %4350 = vmatprep.subr.mxu0 0.0
        %4351 = vmatpush1.msra.mxu0 0.0
        %4352 = vmatprep.subr.mxu0 0.0
        %4353 = vmatpush1.msra.mxu0 0.0
        %4354 = vmatprep.subr.mxu0 0.0
        %4355 = vmatpush1.msra.mxu0 0.0
        %4356 = vmatprep.subr.mxu0 %v1529
        %4357 = vmatpush1.msra.mxu0 %v1528
        %4358 = vmatprep.subr.mxu0 %v1433
        %4359 = vmatpush1.msra.mxu0 %v1432
        %4360 = vmatprep.subr.mxu0 %v1337
        %4361 = vmatpush1.msra.mxu0 %v1336
        %4362 = vmatprep.subr.mxu0 %v1241
        %4363 = vmatpush1.msra.mxu0 %v1240
        %4364 = vmatprep.subr.mxu0 %v1145
        %4365 = vmatpush1.msra.mxu0 %v1144
        %4366 = vmatprep.subr.mxu0 %v1049
        %4367 = vmatpush1.msra.mxu0 %v1048
        %4368 = vmatprep.subr.mxu0 %v953
        %4369 = vmatpush1.msra.mxu0 %v952
        %4370 = vmatprep.subr.mxu0 %v857
        %4371 = vmatpush1.msra.mxu0 %v856
        %4372 = vmatprep.subr.mxu0 0.0
        %4373 = vmatpush2.msra.mxu0 0.0
        %4374 = vmatprep.subr.mxu0 0.0
        %4375 = vmatpush2.msra.mxu0 0.0
        %4376 = vmatprep.subr.mxu0 0.0
        %4377 = vmatpush2.msra.mxu0 0.0
        %4378 = vmatprep.subr.mxu0 0.0
        %4379 = vmatpush2.msra.mxu0 0.0
        %4380 = vmatprep.subr.mxu0 0.0
        %4381 = vmatpush2.msra.mxu0 0.0
        %4382 = vmatprep.subr.mxu0 0.0
        %4383 = vmatpush2.msra.mxu0 0.0
        %4384 = vmatprep.subr.mxu0 0.0
        %4385 = vmatpush2.msra.mxu0 0.0
        %4386 = vmatprep.subr.mxu0 0.0
        %4387 = vmatpush2.msra.mxu0 0.0
        %4388 = vmatprep.subr.mxu0 0.0
        %4389 = vmatpush2.msra.mxu0 0.0
        %4390 = vmatprep.subr.mxu0 0.0
        %4391 = vmatpush2.msra.mxu0 0.0
        %4392 = vmatprep.subr.mxu0 0.0
        %4393 = vmatpush2.msra.mxu0 0.0
        %4394 = vmatprep.subr.mxu0 0.0
        %4395 = vmatpush2.msra.mxu0 0.0
        %4396 = vmatprep.subr.mxu0 0.0
        %4397 = vmatpush2.msra.mxu0 0.0
        %4398 = vmatprep.subr.mxu0 0.0
        %4399 = vmatpush2.msra.mxu0 0.0
        %4400 = vmatprep.subr.mxu0 0.0
        %4401 = vmatpush2.msra.mxu0 0.0
        %4402 = vmatprep.subr.mxu0 0.0
        %4403 = vmatpush2.msra.mxu0 0.0
        %4404 = vmatprep.mubr.f32.mxu0 0.0
        %4405 = vmatmul.mubr.f32.gmra.mxu0 %v2066
        %v4406 = vpop.f32.mrf.mxu0
        %v4407 = vadd.f32 %v1843, %v4406
        %v4408 = vpop.f32.mrf.mxu0
        %v4409 = vadd.f32 %v1847, %v4408
        %4410 = vdwg.mxu0
        %4411 = vmatprep.subr.mxu0 0.0
        %4412 = vmatpush1.msra.mxu0 0.0
        %4413 = vmatprep.subr.mxu0 0.0
        %4414 = vmatpush1.msra.mxu0 0.0
        %4415 = vmatprep.subr.mxu0 0.0
        %4416 = vmatpush1.msra.mxu0 0.0
        %4417 = vmatprep.subr.mxu0 0.0
        %4418 = vmatpush1.msra.mxu0 0.0
        %4419 = vmatprep.subr.mxu0 0.0
        %4420 = vmatpush1.msra.mxu0 0.0
        %4421 = vmatprep.subr.mxu0 0.0
        %4422 = vmatpush1.msra.mxu0 0.0
        %4423 = vmatprep.subr.mxu0 0.0
        %4424 = vmatpush1.msra.mxu0 0.0
        %4425 = vmatprep.subr.mxu0 0.0
        %4426 = vmatpush1.msra.mxu0 0.0
        %4427 = vmatprep.subr.mxu0 %v1531
        %4428 = vmatpush1.msra.mxu0 %v1530
        %4429 = vmatprep.subr.mxu0 %v1435
        %4430 = vmatpush1.msra.mxu0 %v1434
        %4431 = vmatprep.subr.mxu0 %v1339
        %4432 = vmatpush1.msra.mxu0 %v1338
        %4433 = vmatprep.subr.mxu0 %v1243
        %4434 = vmatpush1.msra.mxu0 %v1242
        %4435 = vmatprep.subr.mxu0 %v1147
        %4436 = vmatpush1.msra.mxu0 %v1146
        %4437 = vmatprep.subr.mxu0 %v1051
        %4438 = vmatpush1.msra.mxu0 %v1050
        %4439 = vmatprep.subr.mxu0 %v955
        %4440 = vmatpush1.msra.mxu0 %v954
        %4441 = vmatprep.subr.mxu0 %v859
        %4442 = vmatpush1.msra.mxu0 %v858
        %4443 = vmatprep.subr.mxu0 0.0
        %4444 = vmatpush2.msra.mxu0 0.0
        %4445 = vmatprep.subr.mxu0 0.0
        %4446 = vmatpush2.msra.mxu0 0.0
        %4447 = vmatprep.subr.mxu0 0.0
        %4448 = vmatpush2.msra.mxu0 0.0
        %4449 = vmatprep.subr.mxu0 0.0
        %4450 = vmatpush2.msra.mxu0 0.0
        %4451 = vmatprep.subr.mxu0 0.0
        %4452 = vmatpush2.msra.mxu0 0.0
        %4453 = vmatprep.subr.mxu0 0.0
        %4454 = vmatpush2.msra.mxu0 0.0
        %4455 = vmatprep.subr.mxu0 0.0
        %4456 = vmatpush2.msra.mxu0 0.0
        %4457 = vmatprep.subr.mxu0 0.0
        %4458 = vmatpush2.msra.mxu0 0.0
        %4459 = vmatprep.subr.mxu0 0.0
        %4460 = vmatpush2.msra.mxu0 0.0
        %4461 = vmatprep.subr.mxu0 0.0
        %4462 = vmatpush2.msra.mxu0 0.0
        %4463 = vmatprep.subr.mxu0 0.0
        %4464 = vmatpush2.msra.mxu0 0.0
        %4465 = vmatprep.subr.mxu0 0.0
        %4466 = vmatpush2.msra.mxu0 0.0
        %4467 = vmatprep.subr.mxu0 0.0
        %4468 = vmatpush2.msra.mxu0 0.0
        %4469 = vmatprep.subr.mxu0 0.0
        %4470 = vmatpush2.msra.mxu0 0.0
        %4471 = vmatprep.subr.mxu0 0.0
        %4472 = vmatpush2.msra.mxu0 0.0
        %4473 = vmatprep.subr.mxu0 0.0
        %4474 = vmatpush2.msra.mxu0 0.0
        %4475 = vmatprep.mubr.f32.mxu0 0.0
        %4476 = vmatmul.mubr.f32.gmra.mxu0 %v2066
        %v4477 = vpop.f32.mrf.mxu0
        %v4478 = vadd.f32 %v1851, %v4477
        %v4479 = vpop.f32.mrf.mxu0
        %v4480 = vadd.f32 %v1855, %v4479
        %4481 = vdwg.mxu0
        %4482 = vmatprep.subr.mxu0 0.0
        %4483 = vmatpush1.msra.mxu0 0.0
        %4484 = vmatprep.subr.mxu0 0.0
        %4485 = vmatpush1.msra.mxu0 0.0
        %4486 = vmatprep.subr.mxu0 0.0
        %4487 = vmatpush1.msra.mxu0 0.0
        %4488 = vmatprep.subr.mxu0 0.0
        %4489 = vmatpush1.msra.mxu0 0.0
        %4490 = vmatprep.subr.mxu0 0.0
        %4491 = vmatpush1.msra.mxu0 0.0
        %4492 = vmatprep.subr.mxu0 0.0
        %4493 = vmatpush1.msra.mxu0 0.0
        %4494 = vmatprep.subr.mxu0 0.0
        %4495 = vmatpush1.msra.mxu0 0.0
        %4496 = vmatprep.subr.mxu0 0.0
        %4497 = vmatpush1.msra.mxu0 0.0
        %4498 = vmatprep.subr.mxu0 %v1533
        %4499 = vmatpush1.msra.mxu0 %v1532
        %4500 = vmatprep.subr.mxu0 %v1437
        %4501 = vmatpush1.msra.mxu0 %v1436
        %4502 = vmatprep.subr.mxu0 %v1341
        %4503 = vmatpush1.msra.mxu0 %v1340
        %4504 = vmatprep.subr.mxu0 %v1245
        %4505 = vmatpush1.msra.mxu0 %v1244
        %4506 = vmatprep.subr.mxu0 %v1149
        %4507 = vmatpush1.msra.mxu0 %v1148
        %4508 = vmatprep.subr.mxu0 %v1053
        %4509 = vmatpush1.msra.mxu0 %v1052
        %4510 = vmatprep.subr.mxu0 %v957
        %4511 = vmatpush1.msra.mxu0 %v956
        %4512 = vmatprep.subr.mxu0 %v861
        %4513 = vmatpush1.msra.mxu0 %v860
        %4514 = vmatprep.subr.mxu0 0.0
        %4515 = vmatpush2.msra.mxu0 0.0
        %4516 = vmatprep.subr.mxu0 0.0
        %4517 = vmatpush2.msra.mxu0 0.0
        %4518 = vmatprep.subr.mxu0 0.0
        %4519 = vmatpush2.msra.mxu0 0.0
        %4520 = vmatprep.subr.mxu0 0.0
        %4521 = vmatpush2.msra.mxu0 0.0
        %4522 = vmatprep.subr.mxu0 0.0
        %4523 = vmatpush2.msra.mxu0 0.0
        %4524 = vmatprep.subr.mxu0 0.0
        %4525 = vmatpush2.msra.mxu0 0.0
        %4526 = vmatprep.subr.mxu0 0.0
        %4527 = vmatpush2.msra.mxu0 0.0
        %4528 = vmatprep.subr.mxu0 0.0
        %4529 = vmatpush2.msra.mxu0 0.0
        %4530 = vmatprep.subr.mxu0 0.0
        %4531 = vmatpush2.msra.mxu0 0.0
        %4532 = vmatprep.subr.mxu0 0.0
        %4533 = vmatpush2.msra.mxu0 0.0
        %4534 = vmatprep.subr.mxu0 0.0
        %4535 = vmatpush2.msra.mxu0 0.0
        %4536 = vmatprep.subr.mxu0 0.0
        %4537 = vmatpush2.msra.mxu0 0.0
        %4538 = vmatprep.subr.mxu0 0.0
        %4539 = vmatpush2.msra.mxu0 0.0
        %4540 = vmatprep.subr.mxu0 0.0
        %4541 = vmatpush2.msra.mxu0 0.0
        %4542 = vmatprep.subr.mxu0 0.0
        %4543 = vmatpush2.msra.mxu0 0.0
        %4544 = vmatprep.subr.mxu0 0.0
        %4545 = vmatpush2.msra.mxu0 0.0
        %4546 = vmatprep.mubr.f32.mxu0 0.0
        %4547 = vmatmul.mubr.f32.gmra.mxu0 %v2066
        %v4548 = vpop.f32.mrf.mxu0
        %v4549 = vadd.f32 %v1859, %v4548
        %v4550 = vpop.f32.mrf.mxu0
        %v4551 = vadd.f32 %v1863, %v4550
        %4552 = vdwg.mxu0
        %4553 = vmatprep.subr.mxu0 0.0
        %4554 = vmatpush1.msra.mxu0 0.0
        %4555 = vmatprep.subr.mxu0 0.0
        %4556 = vmatpush1.msra.mxu0 0.0
        %4557 = vmatprep.subr.mxu0 0.0
        %4558 = vmatpush1.msra.mxu0 0.0
        %4559 = vmatprep.subr.mxu0 0.0
        %4560 = vmatpush1.msra.mxu0 0.0
        %4561 = vmatprep.subr.mxu0 0.0
        %4562 = vmatpush1.msra.mxu0 0.0
        %4563 = vmatprep.subr.mxu0 0.0
        %4564 = vmatpush1.msra.mxu0 0.0
        %4565 = vmatprep.subr.mxu0 0.0
        %4566 = vmatpush1.msra.mxu0 0.0
        %4567 = vmatprep.subr.mxu0 0.0
        %4568 = vmatpush1.msra.mxu0 0.0
        %4569 = vmatprep.subr.mxu0 %v1535
        %4570 = vmatpush1.msra.mxu0 %v1534
        %4571 = vmatprep.subr.mxu0 %v1439
        %4572 = vmatpush1.msra.mxu0 %v1438
        %4573 = vmatprep.subr.mxu0 %v1343
        %4574 = vmatpush1.msra.mxu0 %v1342
        %4575 = vmatprep.subr.mxu0 %v1247
        %4576 = vmatpush1.msra.mxu0 %v1246
        %4577 = vmatprep.subr.mxu0 %v1151
        %4578 = vmatpush1.msra.mxu0 %v1150
        %4579 = vmatprep.subr.mxu0 %v1055
        %4580 = vmatpush1.msra.mxu0 %v1054
        %4581 = vmatprep.subr.mxu0 %v959
        %4582 = vmatpush1.msra.mxu0 %v958
        %4583 = vmatprep.subr.mxu0 %v863
        %4584 = vmatpush1.msra.mxu0 %v862
        %4585 = vmatprep.subr.mxu0 0.0
        %4586 = vmatpush2.msra.mxu0 0.0
        %4587 = vmatprep.subr.mxu0 0.0
        %4588 = vmatpush2.msra.mxu0 0.0
        %4589 = vmatprep.subr.mxu0 0.0
        %4590 = vmatpush2.msra.mxu0 0.0
        %4591 = vmatprep.subr.mxu0 0.0
        %4592 = vmatpush2.msra.mxu0 0.0
        %4593 = vmatprep.subr.mxu0 0.0
        %4594 = vmatpush2.msra.mxu0 0.0
        %4595 = vmatprep.subr.mxu0 0.0
        %4596 = vmatpush2.msra.mxu0 0.0
        %4597 = vmatprep.subr.mxu0 0.0
        %4598 = vmatpush2.msra.mxu0 0.0
        %4599 = vmatprep.subr.mxu0 0.0
        %4600 = vmatpush2.msra.mxu0 0.0
        %4601 = vmatprep.subr.mxu0 0.0
        %4602 = vmatpush2.msra.mxu0 0.0
        %4603 = vmatprep.subr.mxu0 0.0
        %4604 = vmatpush2.msra.mxu0 0.0
        %4605 = vmatprep.subr.mxu0 0.0
        %4606 = vmatpush2.msra.mxu0 0.0
        %4607 = vmatprep.subr.mxu0 0.0
        %4608 = vmatpush2.msra.mxu0 0.0
        %4609 = vmatprep.subr.mxu0 0.0
        %4610 = vmatpush2.msra.mxu0 0.0
        %4611 = vmatprep.subr.mxu0 0.0
        %4612 = vmatpush2.msra.mxu0 0.0
        %4613 = vmatprep.subr.mxu0 0.0
        %4614 = vmatpush2.msra.mxu0 0.0
        %4615 = vmatprep.subr.mxu0 0.0
        %4616 = vmatpush2.msra.mxu0 0.0
        %4617 = vmatprep.mubr.f32.mxu0 0.0
        %4618 = vmatmul.mubr.f32.gmra.mxu0 %v2066
        %v4619 = vpop.f32.mrf.mxu0
        %v4620 = vadd.f32 %v1867, %v4619
        %v4621 = vpop.f32.mrf.mxu0
        %v4622 = vadd.f32 %v1871, %v4621
        %4623 = vdwg.mxu0
        %4624 = vmatprep.subr.mxu0 0.0
        %4625 = vmatpush1.msra.mxu0 0.0
        %4626 = vmatprep.subr.mxu0 0.0
        %4627 = vmatpush1.msra.mxu0 0.0
        %4628 = vmatprep.subr.mxu0 0.0
        %4629 = vmatpush1.msra.mxu0 0.0
        %4630 = vmatprep.subr.mxu0 0.0
        %4631 = vmatpush1.msra.mxu0 0.0
        %4632 = vmatprep.subr.mxu0 0.0
        %4633 = vmatpush1.msra.mxu0 0.0
        %4634 = vmatprep.subr.mxu0 0.0
        %4635 = vmatpush1.msra.mxu0 0.0
        %4636 = vmatprep.subr.mxu0 0.0
        %4637 = vmatpush1.msra.mxu0 0.0
        %4638 = vmatprep.subr.mxu0 0.0
        %4639 = vmatpush1.msra.mxu0 0.0
        %4640 = vmatprep.subr.mxu0 %v1537
        %4641 = vmatpush1.msra.mxu0 %v1536
        %4642 = vmatprep.subr.mxu0 %v1441
        %4643 = vmatpush1.msra.mxu0 %v1440
        %4644 = vmatprep.subr.mxu0 %v1345
        %4645 = vmatpush1.msra.mxu0 %v1344
        %4646 = vmatprep.subr.mxu0 %v1249
        %4647 = vmatpush1.msra.mxu0 %v1248
        %4648 = vmatprep.subr.mxu0 %v1153
        %4649 = vmatpush1.msra.mxu0 %v1152
        %4650 = vmatprep.subr.mxu0 %v1057
        %4651 = vmatpush1.msra.mxu0 %v1056
        %4652 = vmatprep.subr.mxu0 %v961
        %4653 = vmatpush1.msra.mxu0 %v960
        %4654 = vmatprep.subr.mxu0 %v865
        %4655 = vmatpush1.msra.mxu0 %v864
        %4656 = vmatprep.subr.mxu0 0.0
        %4657 = vmatpush2.msra.mxu0 0.0
        %4658 = vmatprep.subr.mxu0 0.0
        %4659 = vmatpush2.msra.mxu0 0.0
        %4660 = vmatprep.subr.mxu0 0.0
        %4661 = vmatpush2.msra.mxu0 0.0
        %4662 = vmatprep.subr.mxu0 0.0
        %4663 = vmatpush2.msra.mxu0 0.0
        %4664 = vmatprep.subr.mxu0 0.0
        %4665 = vmatpush2.msra.mxu0 0.0
        %4666 = vmatprep.subr.mxu0 0.0
        %4667 = vmatpush2.msra.mxu0 0.0
        %4668 = vmatprep.subr.mxu0 0.0
        %4669 = vmatpush2.msra.mxu0 0.0
        %4670 = vmatprep.subr.mxu0 0.0
        %4671 = vmatpush2.msra.mxu0 0.0
        %4672 = vmatprep.subr.mxu0 0.0
        %4673 = vmatpush2.msra.mxu0 0.0
        %4674 = vmatprep.subr.mxu0 0.0
        %4675 = vmatpush2.msra.mxu0 0.0
        %4676 = vmatprep.subr.mxu0 0.0
        %4677 = vmatpush2.msra.mxu0 0.0
        %4678 = vmatprep.subr.mxu0 0.0
        %4679 = vmatpush2.msra.mxu0 0.0
        %4680 = vmatprep.subr.mxu0 0.0
        %4681 = vmatpush2.msra.mxu0 0.0
        %4682 = vmatprep.subr.mxu0 0.0
        %4683 = vmatpush2.msra.mxu0 0.0
        %4684 = vmatprep.subr.mxu0 0.0
        %4685 = vmatpush2.msra.mxu0 0.0
        %4686 = vmatprep.subr.mxu0 0.0
        %4687 = vmatpush2.msra.mxu0 0.0
        %4688 = vmatprep.mubr.f32.mxu0 0.0
        %4689 = vmatmul.mubr.f32.gmra.mxu0 %v2066
        %v4690 = vpop.f32.mrf.mxu0
        %v4691 = vadd.f32 %v1875, %v4690
        %v4692 = vpop.f32.mrf.mxu0
        %v4693 = vadd.f32 %v1879, %v4692
        %4694 = vdwg.mxu0
        %4695 = vmatprep.subr.mxu0 0.0
        %4696 = vmatpush1.msra.mxu0 0.0
        %4697 = vmatprep.subr.mxu0 0.0
        %4698 = vmatpush1.msra.mxu0 0.0
        %4699 = vmatprep.subr.mxu0 0.0
        %4700 = vmatpush1.msra.mxu0 0.0
        %4701 = vmatprep.subr.mxu0 0.0
        %4702 = vmatpush1.msra.mxu0 0.0
        %4703 = vmatprep.subr.mxu0 0.0
        %4704 = vmatpush1.msra.mxu0 0.0
        %4705 = vmatprep.subr.mxu0 0.0
        %4706 = vmatpush1.msra.mxu0 0.0
        %4707 = vmatprep.subr.mxu0 0.0
        %4708 = vmatpush1.msra.mxu0 0.0
        %4709 = vmatprep.subr.mxu0 0.0
        %4710 = vmatpush1.msra.mxu0 0.0
        %4711 = vmatprep.subr.mxu0 %v1539
        %4712 = vmatpush1.msra.mxu0 %v1538
        %4713 = vmatprep.subr.mxu0 %v1443
        %4714 = vmatpush1.msra.mxu0 %v1442
        %4715 = vmatprep.subr.mxu0 %v1347
        %4716 = vmatpush1.msra.mxu0 %v1346
        %4717 = vmatprep.subr.mxu0 %v1251
        %4718 = vmatpush1.msra.mxu0 %v1250
        %4719 = vmatprep.subr.mxu0 %v1155
        %4720 = vmatpush1.msra.mxu0 %v1154
        %4721 = vmatprep.subr.mxu0 %v1059
        %4722 = vmatpush1.msra.mxu0 %v1058
        %4723 = vmatprep.subr.mxu0 %v963
        %4724 = vmatpush1.msra.mxu0 %v962
        %4725 = vmatprep.subr.mxu0 %v867
        %4726 = vmatpush1.msra.mxu0 %v866
        %4727 = vmatprep.subr.mxu0 0.0
        %4728 = vmatpush2.msra.mxu0 0.0
        %4729 = vmatprep.subr.mxu0 0.0
        %4730 = vmatpush2.msra.mxu0 0.0
        %4731 = vmatprep.subr.mxu0 0.0
        %4732 = vmatpush2.msra.mxu0 0.0
        %4733 = vmatprep.subr.mxu0 0.0
        %4734 = vmatpush2.msra.mxu0 0.0
        %4735 = vmatprep.subr.mxu0 0.0
        %4736 = vmatpush2.msra.mxu0 0.0
        %4737 = vmatprep.subr.mxu0 0.0
        %4738 = vmatpush2.msra.mxu0 0.0
        %4739 = vmatprep.subr.mxu0 0.0
        %4740 = vmatpush2.msra.mxu0 0.0
        %4741 = vmatprep.subr.mxu0 0.0
        %4742 = vmatpush2.msra.mxu0 0.0
        %4743 = vmatprep.subr.mxu0 0.0
        %4744 = vmatpush2.msra.mxu0 0.0
        %4745 = vmatprep.subr.mxu0 0.0
        %4746 = vmatpush2.msra.mxu0 0.0
        %4747 = vmatprep.subr.mxu0 0.0
        %4748 = vmatpush2.msra.mxu0 0.0
        %4749 = vmatprep.subr.mxu0 0.0
        %4750 = vmatpush2.msra.mxu0 0.0
        %4751 = vmatprep.subr.mxu0 0.0
        %4752 = vmatpush2.msra.mxu0 0.0
        %4753 = vmatprep.subr.mxu0 0.0
        %4754 = vmatpush2.msra.mxu0 0.0
        %4755 = vmatprep.subr.mxu0 0.0
        %4756 = vmatpush2.msra.mxu0 0.0
        %4757 = vmatprep.subr.mxu0 0.0
        %4758 = vmatpush2.msra.mxu0 0.0
        %4759 = vmatprep.mubr.f32.mxu0 0.0
        %4760 = vmatmul.mubr.f32.gmra.mxu0 %v2066
        %v4761 = vpop.f32.mrf.mxu0
        %v4762 = vadd.f32 %v1883, %v4761
        %v4763 = vpop.f32.mrf.mxu0
        %v4764 = vadd.f32 %v1887, %v4763
        %4765 = vdwg.mxu0
        %4766 = vmatprep.subr.mxu0 0.0
        %4767 = vmatpush1.msra.mxu0 0.0
        %4768 = vmatprep.subr.mxu0 0.0
        %4769 = vmatpush1.msra.mxu0 0.0
        %4770 = vmatprep.subr.mxu0 0.0
        %4771 = vmatpush1.msra.mxu0 0.0
        %4772 = vmatprep.subr.mxu0 0.0
        %4773 = vmatpush1.msra.mxu0 0.0
        %4774 = vmatprep.subr.mxu0 0.0
        %4775 = vmatpush1.msra.mxu0 0.0
        %4776 = vmatprep.subr.mxu0 0.0
        %4777 = vmatpush1.msra.mxu0 0.0
        %4778 = vmatprep.subr.mxu0 0.0
        %4779 = vmatpush1.msra.mxu0 0.0
        %4780 = vmatprep.subr.mxu0 0.0
        %4781 = vmatpush1.msra.mxu0 0.0
        %4782 = vmatprep.subr.mxu0 %v1541
        %4783 = vmatpush1.msra.mxu0 %v1540
        %4784 = vmatprep.subr.mxu0 %v1445
        %4785 = vmatpush1.msra.mxu0 %v1444
        %4786 = vmatprep.subr.mxu0 %v1349
        %4787 = vmatpush1.msra.mxu0 %v1348
        %4788 = vmatprep.subr.mxu0 %v1253
        %4789 = vmatpush1.msra.mxu0 %v1252
        %4790 = vmatprep.subr.mxu0 %v1157
        %4791 = vmatpush1.msra.mxu0 %v1156
        %4792 = vmatprep.subr.mxu0 %v1061
        %4793 = vmatpush1.msra.mxu0 %v1060
        %4794 = vmatprep.subr.mxu0 %v965
        %4795 = vmatpush1.msra.mxu0 %v964
        %4796 = vmatprep.subr.mxu0 %v869
        %4797 = vmatpush1.msra.mxu0 %v868
        %4798 = vmatprep.subr.mxu0 0.0
        %4799 = vmatpush2.msra.mxu0 0.0
        %4800 = vmatprep.subr.mxu0 0.0
        %4801 = vmatpush2.msra.mxu0 0.0
        %4802 = vmatprep.subr.mxu0 0.0
        %4803 = vmatpush2.msra.mxu0 0.0
        %4804 = vmatprep.subr.mxu0 0.0
        %4805 = vmatpush2.msra.mxu0 0.0
        %4806 = vmatprep.subr.mxu0 0.0
        %4807 = vmatpush2.msra.mxu0 0.0
        %4808 = vmatprep.subr.mxu0 0.0
        %4809 = vmatpush2.msra.mxu0 0.0
        %4810 = vmatprep.subr.mxu0 0.0
        %4811 = vmatpush2.msra.mxu0 0.0
        %4812 = vmatprep.subr.mxu0 0.0
        %4813 = vmatpush2.msra.mxu0 0.0
        %4814 = vmatprep.subr.mxu0 0.0
        %4815 = vmatpush2.msra.mxu0 0.0
        %4816 = vmatprep.subr.mxu0 0.0
        %4817 = vmatpush2.msra.mxu0 0.0
        %4818 = vmatprep.subr.mxu0 0.0
        %4819 = vmatpush2.msra.mxu0 0.0
        %4820 = vmatprep.subr.mxu0 0.0
        %4821 = vmatpush2.msra.mxu0 0.0
        %4822 = vmatprep.subr.mxu0 0.0
        %4823 = vmatpush2.msra.mxu0 0.0
        %4824 = vmatprep.subr.mxu0 0.0
        %4825 = vmatpush2.msra.mxu0 0.0
        %4826 = vmatprep.subr.mxu0 0.0
        %4827 = vmatpush2.msra.mxu0 0.0
        %4828 = vmatprep.subr.mxu0 0.0
        %4829 = vmatpush2.msra.mxu0 0.0
        %4830 = vmatprep.mubr.f32.mxu0 0.0
        %4831 = vmatmul.mubr.f32.gmra.mxu0 %v2066
        %v4832 = vpop.f32.mrf.mxu0
        %v4833 = vadd.f32 %v1891, %v4832
        %v4834 = vpop.f32.mrf.mxu0
        %v4835 = vadd.f32 %v1895, %v4834
        %4836 = vdwg.mxu0
        %4837 = vmatprep.subr.mxu0 0.0
        %4838 = vmatpush1.msra.mxu0 0.0
        %4839 = vmatprep.subr.mxu0 0.0
        %4840 = vmatpush1.msra.mxu0 0.0
        %4841 = vmatprep.subr.mxu0 0.0
        %4842 = vmatpush1.msra.mxu0 0.0
        %4843 = vmatprep.subr.mxu0 0.0
        %4844 = vmatpush1.msra.mxu0 0.0
        %4845 = vmatprep.subr.mxu0 0.0
        %4846 = vmatpush1.msra.mxu0 0.0
        %4847 = vmatprep.subr.mxu0 0.0
        %4848 = vmatpush1.msra.mxu0 0.0
        %4849 = vmatprep.subr.mxu0 0.0
        %4850 = vmatpush1.msra.mxu0 0.0
        %4851 = vmatprep.subr.mxu0 0.0
        %4852 = vmatpush1.msra.mxu0 0.0
        %4853 = vmatprep.subr.mxu0 %v1543
        %4854 = vmatpush1.msra.mxu0 %v1542
        %4855 = vmatprep.subr.mxu0 %v1447
        %4856 = vmatpush1.msra.mxu0 %v1446
        %4857 = vmatprep.subr.mxu0 %v1351
        %4858 = vmatpush1.msra.mxu0 %v1350
        %4859 = vmatprep.subr.mxu0 %v1255
        %4860 = vmatpush1.msra.mxu0 %v1254
        %4861 = vmatprep.subr.mxu0 %v1159
        %4862 = vmatpush1.msra.mxu0 %v1158
        %4863 = vmatprep.subr.mxu0 %v1063
        %4864 = vmatpush1.msra.mxu0 %v1062
        %4865 = vmatprep.subr.mxu0 %v967
        %4866 = vmatpush1.msra.mxu0 %v966
        %4867 = vmatprep.subr.mxu0 %v871
        %4868 = vmatpush1.msra.mxu0 %v870
        %4869 = vmatprep.subr.mxu0 0.0
        %4870 = vmatpush2.msra.mxu0 0.0
        %4871 = vmatprep.subr.mxu0 0.0
        %4872 = vmatpush2.msra.mxu0 0.0
        %4873 = vmatprep.subr.mxu0 0.0
        %4874 = vmatpush2.msra.mxu0 0.0
        %4875 = vmatprep.subr.mxu0 0.0
        %4876 = vmatpush2.msra.mxu0 0.0
        %4877 = vmatprep.subr.mxu0 0.0
        %4878 = vmatpush2.msra.mxu0 0.0
        %4879 = vmatprep.subr.mxu0 0.0
        %4880 = vmatpush2.msra.mxu0 0.0
        %4881 = vmatprep.subr.mxu0 0.0
        %4882 = vmatpush2.msra.mxu0 0.0
        %4883 = vmatprep.subr.mxu0 0.0
        %4884 = vmatpush2.msra.mxu0 0.0
        %4885 = vmatprep.subr.mxu0 0.0
        %4886 = vmatpush2.msra.mxu0 0.0
        %4887 = vmatprep.subr.mxu0 0.0
        %4888 = vmatpush2.msra.mxu0 0.0
        %4889 = vmatprep.subr.mxu0 0.0
        %4890 = vmatpush2.msra.mxu0 0.0
        %4891 = vmatprep.subr.mxu0 0.0
        %4892 = vmatpush2.msra.mxu0 0.0
        %4893 = vmatprep.subr.mxu0 0.0
        %4894 = vmatpush2.msra.mxu0 0.0
        %4895 = vmatprep.subr.mxu0 0.0
        %4896 = vmatpush2.msra.mxu0 0.0
        %4897 = vmatprep.subr.mxu0 0.0
        %4898 = vmatpush2.msra.mxu0 0.0
        %4899 = vmatprep.subr.mxu0 0.0
        %4900 = vmatpush2.msra.mxu0 0.0
        %4901 = vmatprep.mubr.f32.mxu0 0.0
        %4902 = vmatmul.mubr.f32.gmra.mxu0 %v2066
        %v4903 = vpop.f32.mrf.mxu0
        %v4904 = vadd.f32 %v1899, %v4903
        %v4905 = vpop.f32.mrf.mxu0
        %v4906 = vadd.f32 %v1903, %v4905
        %4907 = vdwg.mxu0
        %4908 = vmatprep.subr.mxu0 0.0
        %4909 = vmatpush1.msra.mxu0 0.0
        %4910 = vmatprep.subr.mxu0 0.0
        %4911 = vmatpush1.msra.mxu0 0.0
        %4912 = vmatprep.subr.mxu0 0.0
        %4913 = vmatpush1.msra.mxu0 0.0
        %4914 = vmatprep.subr.mxu0 0.0
        %4915 = vmatpush1.msra.mxu0 0.0
        %4916 = vmatprep.subr.mxu0 0.0
        %4917 = vmatpush1.msra.mxu0 0.0
        %4918 = vmatprep.subr.mxu0 0.0
        %4919 = vmatpush1.msra.mxu0 0.0
        %4920 = vmatprep.subr.mxu0 0.0
        %4921 = vmatpush1.msra.mxu0 0.0
        %4922 = vmatprep.subr.mxu0 0.0
        %4923 = vmatpush1.msra.mxu0 0.0
        %4924 = vmatprep.subr.mxu0 %v1545
        %4925 = vmatpush1.msra.mxu0 %v1544
        %4926 = vmatprep.subr.mxu0 %v1449
        %4927 = vmatpush1.msra.mxu0 %v1448
        %4928 = vmatprep.subr.mxu0 %v1353
        %4929 = vmatpush1.msra.mxu0 %v1352
        %4930 = vmatprep.subr.mxu0 %v1257
        %4931 = vmatpush1.msra.mxu0 %v1256
        %4932 = vmatprep.subr.mxu0 %v1161
        %4933 = vmatpush1.msra.mxu0 %v1160
        %4934 = vmatprep.subr.mxu0 %v1065
        %4935 = vmatpush1.msra.mxu0 %v1064
        %4936 = vmatprep.subr.mxu0 %v969
        %4937 = vmatpush1.msra.mxu0 %v968
        %4938 = vmatprep.subr.mxu0 %v873
        %4939 = vmatpush1.msra.mxu0 %v872
        %4940 = vmatprep.subr.mxu0 0.0
        %4941 = vmatpush2.msra.mxu0 0.0
        %4942 = vmatprep.subr.mxu0 0.0
        %4943 = vmatpush2.msra.mxu0 0.0
        %4944 = vmatprep.subr.mxu0 0.0
        %4945 = vmatpush2.msra.mxu0 0.0
        %4946 = vmatprep.subr.mxu0 0.0
        %4947 = vmatpush2.msra.mxu0 0.0
        %4948 = vmatprep.subr.mxu0 0.0
        %4949 = vmatpush2.msra.mxu0 0.0
        %4950 = vmatprep.subr.mxu0 0.0
        %4951 = vmatpush2.msra.mxu0 0.0
        %4952 = vmatprep.subr.mxu0 0.0
        %4953 = vmatpush2.msra.mxu0 0.0
        %4954 = vmatprep.subr.mxu0 0.0
        %4955 = vmatpush2.msra.mxu0 0.0
        %4956 = vmatprep.subr.mxu0 0.0
        %4957 = vmatpush2.msra.mxu0 0.0
        %4958 = vmatprep.subr.mxu0 0.0
        %4959 = vmatpush2.msra.mxu0 0.0
        %4960 = vmatprep.subr.mxu0 0.0
        %4961 = vmatpush2.msra.mxu0 0.0
        %4962 = vmatprep.subr.mxu0 0.0
        %4963 = vmatpush2.msra.mxu0 0.0
        %4964 = vmatprep.subr.mxu0 0.0
        %4965 = vmatpush2.msra.mxu0 0.0
        %4966 = vmatprep.subr.mxu0 0.0
        %4967 = vmatpush2.msra.mxu0 0.0
        %4968 = vmatprep.subr.mxu0 0.0
        %4969 = vmatpush2.msra.mxu0 0.0
        %4970 = vmatprep.subr.mxu0 0.0
        %4971 = vmatpush2.msra.mxu0 0.0
        %4972 = vmatprep.mubr.f32.mxu0 0.0
        %4973 = vmatmul.mubr.f32.gmra.mxu0 %v2066
        %v4974 = vpop.f32.mrf.mxu0
        %v4975 = vadd.f32 %v1907, %v4974
        %v4976 = vpop.f32.mrf.mxu0
        %v4977 = vadd.f32 %v1911, %v4976
        %4978 = vdwg.mxu0
        %4979 = vmatprep.subr.mxu0 0.0
        %4980 = vmatpush1.msra.mxu0 0.0
        %4981 = vmatprep.subr.mxu0 0.0
        %4982 = vmatpush1.msra.mxu0 0.0
        %4983 = vmatprep.subr.mxu0 0.0
        %4984 = vmatpush1.msra.mxu0 0.0
        %4985 = vmatprep.subr.mxu0 0.0
        %4986 = vmatpush1.msra.mxu0 0.0
        %4987 = vmatprep.subr.mxu0 0.0
        %4988 = vmatpush1.msra.mxu0 0.0
        %4989 = vmatprep.subr.mxu0 0.0
        %4990 = vmatpush1.msra.mxu0 0.0
        %4991 = vmatprep.subr.mxu0 0.0
        %4992 = vmatpush1.msra.mxu0 0.0
        %4993 = vmatprep.subr.mxu0 0.0
        %4994 = vmatpush1.msra.mxu0 0.0
        %4995 = vmatprep.subr.mxu0 %v1547
        %4996 = vmatpush1.msra.mxu0 %v1546
        %4997 = vmatprep.subr.mxu0 %v1451
        %4998 = vmatpush1.msra.mxu0 %v1450
        %4999 = vmatprep.subr.mxu0 %v1355
        %5000 = vmatpush1.msra.mxu0 %v1354
        %5001 = vmatprep.subr.mxu0 %v1259
        %5002 = vmatpush1.msra.mxu0 %v1258
        %5003 = vmatprep.subr.mxu0 %v1163
        %5004 = vmatpush1.msra.mxu0 %v1162
        %5005 = vmatprep.subr.mxu0 %v1067
        %5006 = vmatpush1.msra.mxu0 %v1066
        %5007 = vmatprep.subr.mxu0 %v971
        %5008 = vmatpush1.msra.mxu0 %v970
        %5009 = vmatprep.subr.mxu0 %v875
        %5010 = vmatpush1.msra.mxu0 %v874
        %5011 = vmatprep.subr.mxu0 0.0
        %5012 = vmatpush2.msra.mxu0 0.0
        %5013 = vmatprep.subr.mxu0 0.0
        %5014 = vmatpush2.msra.mxu0 0.0
        %5015 = vmatprep.subr.mxu0 0.0
        %5016 = vmatpush2.msra.mxu0 0.0
        %5017 = vmatprep.subr.mxu0 0.0
        %5018 = vmatpush2.msra.mxu0 0.0
        %5019 = vmatprep.subr.mxu0 0.0
        %5020 = vmatpush2.msra.mxu0 0.0
        %5021 = vmatprep.subr.mxu0 0.0
        %5022 = vmatpush2.msra.mxu0 0.0
        %5023 = vmatprep.subr.mxu0 0.0
        %5024 = vmatpush2.msra.mxu0 0.0
        %5025 = vmatprep.subr.mxu0 0.0
        %5026 = vmatpush2.msra.mxu0 0.0
        %5027 = vmatprep.subr.mxu0 0.0
        %5028 = vmatpush2.msra.mxu0 0.0
        %5029 = vmatprep.subr.mxu0 0.0
        %5030 = vmatpush2.msra.mxu0 0.0
        %5031 = vmatprep.subr.mxu0 0.0
        %5032 = vmatpush2.msra.mxu0 0.0
        %5033 = vmatprep.subr.mxu0 0.0
        %5034 = vmatpush2.msra.mxu0 0.0
        %5035 = vmatprep.subr.mxu0 0.0
        %5036 = vmatpush2.msra.mxu0 0.0
        %5037 = vmatprep.subr.mxu0 0.0
        %5038 = vmatpush2.msra.mxu0 0.0
        %5039 = vmatprep.subr.mxu0 0.0
        %5040 = vmatpush2.msra.mxu0 0.0
        %5041 = vmatprep.subr.mxu0 0.0
        %5042 = vmatpush2.msra.mxu0 0.0
        %5043 = vmatprep.mubr.f32.mxu0 0.0
        %5044 = vmatmul.mubr.f32.gmra.mxu0 %v2066
        %v5045 = vpop.f32.mrf.mxu0
        %v5046 = vadd.f32 %v1915, %v5045
        %v5047 = vpop.f32.mrf.mxu0
        %v5048 = vadd.f32 %v1919, %v5047
        %5049 = vdwg.mxu0
        %5050 = vmatprep.subr.mxu0 0.0
        %5051 = vmatpush1.msra.mxu0 0.0
        %5052 = vmatprep.subr.mxu0 0.0
        %5053 = vmatpush1.msra.mxu0 0.0
        %5054 = vmatprep.subr.mxu0 0.0
        %5055 = vmatpush1.msra.mxu0 0.0
        %5056 = vmatprep.subr.mxu0 0.0
        %5057 = vmatpush1.msra.mxu0 0.0
        %5058 = vmatprep.subr.mxu0 0.0
        %5059 = vmatpush1.msra.mxu0 0.0
        %5060 = vmatprep.subr.mxu0 0.0
        %5061 = vmatpush1.msra.mxu0 0.0
        %5062 = vmatprep.subr.mxu0 0.0
        %5063 = vmatpush1.msra.mxu0 0.0
        %5064 = vmatprep.subr.mxu0 0.0
        %5065 = vmatpush1.msra.mxu0 0.0
        %5066 = vmatprep.subr.mxu0 %v1549
        %5067 = vmatpush1.msra.mxu0 %v1548
        %5068 = vmatprep.subr.mxu0 %v1453
        %5069 = vmatpush1.msra.mxu0 %v1452
        %5070 = vmatprep.subr.mxu0 %v1357
        %5071 = vmatpush1.msra.mxu0 %v1356
        %5072 = vmatprep.subr.mxu0 %v1261
        %5073 = vmatpush1.msra.mxu0 %v1260
        %5074 = vmatprep.subr.mxu0 %v1165
        %5075 = vmatpush1.msra.mxu0 %v1164
        %5076 = vmatprep.subr.mxu0 %v1069
        %5077 = vmatpush1.msra.mxu0 %v1068
        %5078 = vmatprep.subr.mxu0 %v973
        %5079 = vmatpush1.msra.mxu0 %v972
        %5080 = vmatprep.subr.mxu0 %v877
        %5081 = vmatpush1.msra.mxu0 %v876
        %5082 = vmatprep.subr.mxu0 0.0
        %5083 = vmatpush2.msra.mxu0 0.0
        %5084 = vmatprep.subr.mxu0 0.0
        %5085 = vmatpush2.msra.mxu0 0.0
        %5086 = vmatprep.subr.mxu0 0.0
        %5087 = vmatpush2.msra.mxu0 0.0
        %5088 = vmatprep.subr.mxu0 0.0
        %5089 = vmatpush2.msra.mxu0 0.0
        %5090 = vmatprep.subr.mxu0 0.0
        %5091 = vmatpush2.msra.mxu0 0.0
        %5092 = vmatprep.subr.mxu0 0.0
        %5093 = vmatpush2.msra.mxu0 0.0
        %5094 = vmatprep.subr.mxu0 0.0
        %5095 = vmatpush2.msra.mxu0 0.0
        %5096 = vmatprep.subr.mxu0 0.0
        %5097 = vmatpush2.msra.mxu0 0.0
        %5098 = vmatprep.subr.mxu0 0.0
        %5099 = vmatpush2.msra.mxu0 0.0
        %5100 = vmatprep.subr.mxu0 0.0
        %5101 = vmatpush2.msra.mxu0 0.0
        %5102 = vmatprep.subr.mxu0 0.0
        %5103 = vmatpush2.msra.mxu0 0.0
        %5104 = vmatprep.subr.mxu0 0.0
        %5105 = vmatpush2.msra.mxu0 0.0
        %5106 = vmatprep.subr.mxu0 0.0
        %5107 = vmatpush2.msra.mxu0 0.0
        %5108 = vmatprep.subr.mxu0 0.0
        %5109 = vmatpush2.msra.mxu0 0.0
        %5110 = vmatprep.subr.mxu0 0.0
        %5111 = vmatpush2.msra.mxu0 0.0
        %5112 = vmatprep.subr.mxu0 0.0
        %5113 = vmatpush2.msra.mxu0 0.0
        %5114 = vmatprep.mubr.f32.mxu0 0.0
        %5115 = vmatmul.mubr.f32.gmra.mxu0 %v2066
        %v5116 = vpop.f32.mrf.mxu0
        %v5117 = vadd.f32 %v1923, %v5116
        %v5118 = vpop.f32.mrf.mxu0
        %v5119 = vadd.f32 %v1927, %v5118
        %5120 = vdwg.mxu0
        %5121 = vmatprep.subr.mxu0 0.0
        %5122 = vmatpush1.msra.mxu0 0.0
        %5123 = vmatprep.subr.mxu0 0.0
        %5124 = vmatpush1.msra.mxu0 0.0
        %5125 = vmatprep.subr.mxu0 0.0
        %5126 = vmatpush1.msra.mxu0 0.0
        %5127 = vmatprep.subr.mxu0 0.0
        %5128 = vmatpush1.msra.mxu0 0.0
        %5129 = vmatprep.subr.mxu0 0.0
        %5130 = vmatpush1.msra.mxu0 0.0
        %5131 = vmatprep.subr.mxu0 0.0
        %5132 = vmatpush1.msra.mxu0 0.0
        %5133 = vmatprep.subr.mxu0 0.0
        %5134 = vmatpush1.msra.mxu0 0.0
        %5135 = vmatprep.subr.mxu0 0.0
        %5136 = vmatpush1.msra.mxu0 0.0
        %5137 = vmatprep.subr.mxu0 %v1551
        %5138 = vmatpush1.msra.mxu0 %v1550
        %5139 = vmatprep.subr.mxu0 %v1455
        %5140 = vmatpush1.msra.mxu0 %v1454
        %5141 = vmatprep.subr.mxu0 %v1359
        %5142 = vmatpush1.msra.mxu0 %v1358
        %5143 = vmatprep.subr.mxu0 %v1263
        %5144 = vmatpush1.msra.mxu0 %v1262
        %5145 = vmatprep.subr.mxu0 %v1167
        %5146 = vmatpush1.msra.mxu0 %v1166
        %5147 = vmatprep.subr.mxu0 %v1071
        %5148 = vmatpush1.msra.mxu0 %v1070
        %5149 = vmatprep.subr.mxu0 %v975
        %5150 = vmatpush1.msra.mxu0 %v974
        %5151 = vmatprep.subr.mxu0 %v879
        %5152 = vmatpush1.msra.mxu0 %v878
        %5153 = vmatprep.subr.mxu0 0.0
        %5154 = vmatpush2.msra.mxu0 0.0
        %5155 = vmatprep.subr.mxu0 0.0
        %5156 = vmatpush2.msra.mxu0 0.0
        %5157 = vmatprep.subr.mxu0 0.0
        %5158 = vmatpush2.msra.mxu0 0.0
        %5159 = vmatprep.subr.mxu0 0.0
        %5160 = vmatpush2.msra.mxu0 0.0
        %5161 = vmatprep.subr.mxu0 0.0
        %5162 = vmatpush2.msra.mxu0 0.0
        %5163 = vmatprep.subr.mxu0 0.0
        %5164 = vmatpush2.msra.mxu0 0.0
        %5165 = vmatprep.subr.mxu0 0.0
        %5166 = vmatpush2.msra.mxu0 0.0
        %5167 = vmatprep.subr.mxu0 0.0
        %5168 = vmatpush2.msra.mxu0 0.0
        %5169 = vmatprep.subr.mxu0 0.0
        %5170 = vmatpush2.msra.mxu0 0.0
        %5171 = vmatprep.subr.mxu0 0.0
        %5172 = vmatpush2.msra.mxu0 0.0
        %5173 = vmatprep.subr.mxu0 0.0
        %5174 = vmatpush2.msra.mxu0 0.0
        %5175 = vmatprep.subr.mxu0 0.0
        %5176 = vmatpush2.msra.mxu0 0.0
        %5177 = vmatprep.subr.mxu0 0.0
        %5178 = vmatpush2.msra.mxu0 0.0
        %5179 = vmatprep.subr.mxu0 0.0
        %5180 = vmatpush2.msra.mxu0 0.0
        %5181 = vmatprep.subr.mxu0 0.0
        %5182 = vmatpush2.msra.mxu0 0.0
        %5183 = vmatprep.subr.mxu0 0.0
        %5184 = vmatpush2.msra.mxu0 0.0
        %5185 = vmatprep.mubr.f32.mxu0 0.0
        %5186 = vmatmul.mubr.f32.gmra.mxu0 %v2066
        %v5187 = vpop.f32.mrf.mxu0
        %v5188 = vadd.f32 %v1931, %v5187
        %v5189 = vpop.f32.mrf.mxu0
        %v5190 = vadd.f32 %v1935, %v5189
        %5191 = vdwg.mxu0
        %5192 = vmatprep.subr.mxu0 0.0
        %5193 = vmatpush1.msra.mxu0 0.0
        %5194 = vmatprep.subr.mxu0 0.0
        %5195 = vmatpush1.msra.mxu0 0.0
        %5196 = vmatprep.subr.mxu0 0.0
        %5197 = vmatpush1.msra.mxu0 0.0
        %5198 = vmatprep.subr.mxu0 0.0
        %5199 = vmatpush1.msra.mxu0 0.0
        %5200 = vmatprep.subr.mxu0 0.0
        %5201 = vmatpush1.msra.mxu0 0.0
        %5202 = vmatprep.subr.mxu0 0.0
        %5203 = vmatpush1.msra.mxu0 0.0
        %5204 = vmatprep.subr.mxu0 0.0
        %5205 = vmatpush1.msra.mxu0 0.0
        %5206 = vmatprep.subr.mxu0 0.0
        %5207 = vmatpush1.msra.mxu0 0.0
        %5208 = vmatprep.subr.mxu0 %v1553
        %5209 = vmatpush1.msra.mxu0 %v1552
        %5210 = vmatprep.subr.mxu0 %v1457
        %5211 = vmatpush1.msra.mxu0 %v1456
        %5212 = vmatprep.subr.mxu0 %v1361
        %5213 = vmatpush1.msra.mxu0 %v1360
        %5214 = vmatprep.subr.mxu0 %v1265
        %5215 = vmatpush1.msra.mxu0 %v1264
        %5216 = vmatprep.subr.mxu0 %v1169
        %5217 = vmatpush1.msra.mxu0 %v1168
        %5218 = vmatprep.subr.mxu0 %v1073
        %5219 = vmatpush1.msra.mxu0 %v1072
        %5220 = vmatprep.subr.mxu0 %v977
        %5221 = vmatpush1.msra.mxu0 %v976
        %5222 = vmatprep.subr.mxu0 %v881
        %5223 = vmatpush1.msra.mxu0 %v880
        %5224 = vmatprep.subr.mxu0 0.0
        %5225 = vmatpush2.msra.mxu0 0.0
        %5226 = vmatprep.subr.mxu0 0.0
        %5227 = vmatpush2.msra.mxu0 0.0
        %5228 = vmatprep.subr.mxu0 0.0
        %5229 = vmatpush2.msra.mxu0 0.0
        %5230 = vmatprep.subr.mxu0 0.0
        %5231 = vmatpush2.msra.mxu0 0.0
        %5232 = vmatprep.subr.mxu0 0.0
        %5233 = vmatpush2.msra.mxu0 0.0
        %5234 = vmatprep.subr.mxu0 0.0
        %5235 = vmatpush2.msra.mxu0 0.0
        %5236 = vmatprep.subr.mxu0 0.0
        %5237 = vmatpush2.msra.mxu0 0.0
        %5238 = vmatprep.subr.mxu0 0.0
        %5239 = vmatpush2.msra.mxu0 0.0
        %5240 = vmatprep.subr.mxu0 0.0
        %5241 = vmatpush2.msra.mxu0 0.0
        %5242 = vmatprep.subr.mxu0 0.0
        %5243 = vmatpush2.msra.mxu0 0.0
        %5244 = vmatprep.subr.mxu0 0.0
        %5245 = vmatpush2.msra.mxu0 0.0
        %5246 = vmatprep.subr.mxu0 0.0
        %5247 = vmatpush2.msra.mxu0 0.0
        %5248 = vmatprep.subr.mxu0 0.0
        %5249 = vmatpush2.msra.mxu0 0.0
        %5250 = vmatprep.subr.mxu0 0.0
        %5251 = vmatpush2.msra.mxu0 0.0
        %5252 = vmatprep.subr.mxu0 0.0
        %5253 = vmatpush2.msra.mxu0 0.0
        %5254 = vmatprep.subr.mxu0 0.0
        %5255 = vmatpush2.msra.mxu0 0.0
        %5256 = vmatprep.mubr.f32.mxu0 0.0
        %5257 = vmatmul.mubr.f32.gmra.mxu0 %v2066
        %v5258 = vpop.f32.mrf.mxu0
        %v5259 = vadd.f32 %v1939, %v5258
        %v5260 = vpop.f32.mrf.mxu0
        %v5261 = vadd.f32 %v1943, %v5260
        %5262 = vdwg.mxu0
        %5263 = vmatprep.subr.mxu0 0.0
        %5264 = vmatpush1.msra.mxu0 0.0
        %5265 = vmatprep.subr.mxu0 0.0
        %5266 = vmatpush1.msra.mxu0 0.0
        %5267 = vmatprep.subr.mxu0 0.0
        %5268 = vmatpush1.msra.mxu0 0.0
        %5269 = vmatprep.subr.mxu0 0.0
        %5270 = vmatpush1.msra.mxu0 0.0
        %5271 = vmatprep.subr.mxu0 0.0
        %5272 = vmatpush1.msra.mxu0 0.0
        %5273 = vmatprep.subr.mxu0 0.0
        %5274 = vmatpush1.msra.mxu0 0.0
        %5275 = vmatprep.subr.mxu0 0.0
        %5276 = vmatpush1.msra.mxu0 0.0
        %5277 = vmatprep.subr.mxu0 0.0
        %5278 = vmatpush1.msra.mxu0 0.0
        %5279 = vmatprep.subr.mxu0 %v1555
        %5280 = vmatpush1.msra.mxu0 %v1554
        %5281 = vmatprep.subr.mxu0 %v1459
        %5282 = vmatpush1.msra.mxu0 %v1458
        %5283 = vmatprep.subr.mxu0 %v1363
        %5284 = vmatpush1.msra.mxu0 %v1362
        %5285 = vmatprep.subr.mxu0 %v1267
        %5286 = vmatpush1.msra.mxu0 %v1266
        %5287 = vmatprep.subr.mxu0 %v1171
        %5288 = vmatpush1.msra.mxu0 %v1170
        %5289 = vmatprep.subr.mxu0 %v1075
        %5290 = vmatpush1.msra.mxu0 %v1074
        %5291 = vmatprep.subr.mxu0 %v979
        %5292 = vmatpush1.msra.mxu0 %v978
        %5293 = vmatprep.subr.mxu0 %v883
        %5294 = vmatpush1.msra.mxu0 %v882
        %5295 = vmatprep.subr.mxu0 0.0
        %5296 = vmatpush2.msra.mxu0 0.0
        %5297 = vmatprep.subr.mxu0 0.0
        %5298 = vmatpush2.msra.mxu0 0.0
        %5299 = vmatprep.subr.mxu0 0.0
        %5300 = vmatpush2.msra.mxu0 0.0
        %5301 = vmatprep.subr.mxu0 0.0
        %5302 = vmatpush2.msra.mxu0 0.0
        %5303 = vmatprep.subr.mxu0 0.0
        %5304 = vmatpush2.msra.mxu0 0.0
        %5305 = vmatprep.subr.mxu0 0.0
        %5306 = vmatpush2.msra.mxu0 0.0
        %5307 = vmatprep.subr.mxu0 0.0
        %5308 = vmatpush2.msra.mxu0 0.0
        %5309 = vmatprep.subr.mxu0 0.0
        %5310 = vmatpush2.msra.mxu0 0.0
        %5311 = vmatprep.subr.mxu0 0.0
        %5312 = vmatpush2.msra.mxu0 0.0
        %5313 = vmatprep.subr.mxu0 0.0
        %5314 = vmatpush2.msra.mxu0 0.0
        %5315 = vmatprep.subr.mxu0 0.0
        %5316 = vmatpush2.msra.mxu0 0.0
        %5317 = vmatprep.subr.mxu0 0.0
        %5318 = vmatpush2.msra.mxu0 0.0
        %5319 = vmatprep.subr.mxu0 0.0
        %5320 = vmatpush2.msra.mxu0 0.0
        %5321 = vmatprep.subr.mxu0 0.0
        %5322 = vmatpush2.msra.mxu0 0.0
        %5323 = vmatprep.subr.mxu0 0.0
        %5324 = vmatpush2.msra.mxu0 0.0
        %5325 = vmatprep.subr.mxu0 0.0
        %5326 = vmatpush2.msra.mxu0 0.0
        %5327 = vmatprep.mubr.f32.mxu0 0.0
        %5328 = vmatmul.mubr.f32.gmra.mxu0 %v2066
        %v5329 = vpop.f32.mrf.mxu0
        %v5330 = vadd.f32 %v1947, %v5329
        %v5331 = vpop.f32.mrf.mxu0
        %v5332 = vadd.f32 %v1951, %v5331
        %5333 = vdwg.mxu0
        %5334 = vmatprep.subr.mxu0 0.0
        %5335 = vmatpush1.msra.mxu0 0.0
        %5336 = vmatprep.subr.mxu0 0.0
        %5337 = vmatpush1.msra.mxu0 0.0
        %5338 = vmatprep.subr.mxu0 0.0
        %5339 = vmatpush1.msra.mxu0 0.0
        %5340 = vmatprep.subr.mxu0 0.0
        %5341 = vmatpush1.msra.mxu0 0.0
        %5342 = vmatprep.subr.mxu0 0.0
        %5343 = vmatpush1.msra.mxu0 0.0
        %5344 = vmatprep.subr.mxu0 0.0
        %5345 = vmatpush1.msra.mxu0 0.0
        %5346 = vmatprep.subr.mxu0 0.0
        %5347 = vmatpush1.msra.mxu0 0.0
        %5348 = vmatprep.subr.mxu0 0.0
        %5349 = vmatpush1.msra.mxu0 0.0
        %5350 = vmatprep.subr.mxu0 %v1557
        %5351 = vmatpush1.msra.mxu0 %v1556
        %5352 = vmatprep.subr.mxu0 %v1461
        %5353 = vmatpush1.msra.mxu0 %v1460
        %5354 = vmatprep.subr.mxu0 %v1365
        %5355 = vmatpush1.msra.mxu0 %v1364
        %5356 = vmatprep.subr.mxu0 %v1269
        %5357 = vmatpush1.msra.mxu0 %v1268
        %5358 = vmatprep.subr.mxu0 %v1173
        %5359 = vmatpush1.msra.mxu0 %v1172
        %5360 = vmatprep.subr.mxu0 %v1077
        %5361 = vmatpush1.msra.mxu0 %v1076
        %5362 = vmatprep.subr.mxu0 %v981
        %5363 = vmatpush1.msra.mxu0 %v980
        %5364 = vmatprep.subr.mxu0 %v885
        %5365 = vmatpush1.msra.mxu0 %v884
        %5366 = vmatprep.subr.mxu0 0.0
        %5367 = vmatpush2.msra.mxu0 0.0
        %5368 = vmatprep.subr.mxu0 0.0
        %5369 = vmatpush2.msra.mxu0 0.0
        %5370 = vmatprep.subr.mxu0 0.0
        %5371 = vmatpush2.msra.mxu0 0.0
        %5372 = vmatprep.subr.mxu0 0.0
        %5373 = vmatpush2.msra.mxu0 0.0
        %5374 = vmatprep.subr.mxu0 0.0
        %5375 = vmatpush2.msra.mxu0 0.0
        %5376 = vmatprep.subr.mxu0 0.0
        %5377 = vmatpush2.msra.mxu0 0.0
        %5378 = vmatprep.subr.mxu0 0.0
        %5379 = vmatpush2.msra.mxu0 0.0
        %5380 = vmatprep.subr.mxu0 0.0
        %5381 = vmatpush2.msra.mxu0 0.0
        %5382 = vmatprep.subr.mxu0 0.0
        %5383 = vmatpush2.msra.mxu0 0.0
        %5384 = vmatprep.subr.mxu0 0.0
        %5385 = vmatpush2.msra.mxu0 0.0
        %5386 = vmatprep.subr.mxu0 0.0
        %5387 = vmatpush2.msra.mxu0 0.0
        %5388 = vmatprep.subr.mxu0 0.0
        %5389 = vmatpush2.msra.mxu0 0.0
        %5390 = vmatprep.subr.mxu0 0.0
        %5391 = vmatpush2.msra.mxu0 0.0
        %5392 = vmatprep.subr.mxu0 0.0
        %5393 = vmatpush2.msra.mxu0 0.0
        %5394 = vmatprep.subr.mxu0 0.0
        %5395 = vmatpush2.msra.mxu0 0.0
        %5396 = vmatprep.subr.mxu0 0.0
        %5397 = vmatpush2.msra.mxu0 0.0
        %5398 = vmatprep.mubr.f32.mxu0 0.0
        %5399 = vmatmul.mubr.f32.gmra.mxu0 %v2066
        %v5400 = vpop.f32.mrf.mxu0
        %v5401 = vadd.f32 %v1955, %v5400
        %v5402 = vpop.f32.mrf.mxu0
        %v5403 = vadd.f32 %v1959, %v5402
        %5404 = vdwg.mxu0
        %5405 = vmatprep.subr.mxu0 0.0
        %5406 = vmatpush1.msra.mxu0 0.0
        %5407 = vmatprep.subr.mxu0 0.0
        %5408 = vmatpush1.msra.mxu0 0.0
        %5409 = vmatprep.subr.mxu0 0.0
        %5410 = vmatpush1.msra.mxu0 0.0
        %5411 = vmatprep.subr.mxu0 0.0
        %5412 = vmatpush1.msra.mxu0 0.0
        %5413 = vmatprep.subr.mxu0 0.0
        %5414 = vmatpush1.msra.mxu0 0.0
        %5415 = vmatprep.subr.mxu0 0.0
        %5416 = vmatpush1.msra.mxu0 0.0
        %5417 = vmatprep.subr.mxu0 0.0
        %5418 = vmatpush1.msra.mxu0 0.0
        %5419 = vmatprep.subr.mxu0 0.0
        %5420 = vmatpush1.msra.mxu0 0.0
        %5421 = vmatprep.subr.mxu0 %v1559
        %5422 = vmatpush1.msra.mxu0 %v1558
        %5423 = vmatprep.subr.mxu0 %v1463
        %5424 = vmatpush1.msra.mxu0 %v1462
        %5425 = vmatprep.subr.mxu0 %v1367
        %5426 = vmatpush1.msra.mxu0 %v1366
        %5427 = vmatprep.subr.mxu0 %v1271
        %5428 = vmatpush1.msra.mxu0 %v1270
        %5429 = vmatprep.subr.mxu0 %v1175
        %5430 = vmatpush1.msra.mxu0 %v1174
        %5431 = vmatprep.subr.mxu0 %v1079
        %5432 = vmatpush1.msra.mxu0 %v1078
        %5433 = vmatprep.subr.mxu0 %v983
        %5434 = vmatpush1.msra.mxu0 %v982
        %5435 = vmatprep.subr.mxu0 %v887
        %5436 = vmatpush1.msra.mxu0 %v886
        %5437 = vmatprep.subr.mxu0 0.0
        %5438 = vmatpush2.msra.mxu0 0.0
        %5439 = vmatprep.subr.mxu0 0.0
        %5440 = vmatpush2.msra.mxu0 0.0
        %5441 = vmatprep.subr.mxu0 0.0
        %5442 = vmatpush2.msra.mxu0 0.0
        %5443 = vmatprep.subr.mxu0 0.0
        %5444 = vmatpush2.msra.mxu0 0.0
        %5445 = vmatprep.subr.mxu0 0.0
        %5446 = vmatpush2.msra.mxu0 0.0
        %5447 = vmatprep.subr.mxu0 0.0
        %5448 = vmatpush2.msra.mxu0 0.0
        %5449 = vmatprep.subr.mxu0 0.0
        %5450 = vmatpush2.msra.mxu0 0.0
        %5451 = vmatprep.subr.mxu0 0.0
        %5452 = vmatpush2.msra.mxu0 0.0
        %5453 = vmatprep.subr.mxu0 0.0
        %5454 = vmatpush2.msra.mxu0 0.0
        %5455 = vmatprep.subr.mxu0 0.0
        %5456 = vmatpush2.msra.mxu0 0.0
        %5457 = vmatprep.subr.mxu0 0.0
        %5458 = vmatpush2.msra.mxu0 0.0
        %5459 = vmatprep.subr.mxu0 0.0
        %5460 = vmatpush2.msra.mxu0 0.0
        %5461 = vmatprep.subr.mxu0 0.0
        %5462 = vmatpush2.msra.mxu0 0.0
        %5463 = vmatprep.subr.mxu0 0.0
        %5464 = vmatpush2.msra.mxu0 0.0
        %5465 = vmatprep.subr.mxu0 0.0
        %5466 = vmatpush2.msra.mxu0 0.0
        %5467 = vmatprep.subr.mxu0 0.0
        %5468 = vmatpush2.msra.mxu0 0.0
        %5469 = vmatprep.mubr.f32.mxu0 0.0
        %5470 = vmatmul.mubr.f32.gmra.mxu0 %v2066
        %v5471 = vpop.f32.mrf.mxu0
        %v5472 = vadd.f32 %v1963, %v5471
        %v5473 = vpop.f32.mrf.mxu0
        %v5474 = vadd.f32 %v1967, %v5473
        %5475 = vdwg.mxu0
        %v5572 = vcombine.low %v2135, %v2137
        %v5573 = vcombine.low %v2206, %v2208
        %v5575 = vunpack.c.l.s4 1983009808
        %v5576 = vunpack.c.0.s8 %v5575
        %v5577 = vlaneseq
        %v5578 = vshrl.u32 %v5577, 7
        %v5579 = vsub.s32 %v5576, %v5578
        %v5580 = vrot.slane %v5572, %v5579
        %v5582 = vunpack.c.l.s4 1983009808
        %v5583 = vunpack.c.0.s8 %v5582
        %v5584 = vlaneseq
        %v5585 = vshrl.u32 %v5584, 7
        %v5586 = vsub.s32 %v5583, %v5585
        %v5587 = vrot.slane %v5573, %v5586
        %v5588 = vcombine.low %v5580, %v5587
        %v5589 = vcombine.low %v2277, %v2279
        %v5590 = vcombine.low %v2348, %v2350
        %v5592 = vunpack.c.l.s4 1983009808
        %v5593 = vunpack.c.0.s8 %v5592
        %v5594 = vlaneseq
        %v5595 = vshrl.u32 %v5594, 7
        %v5596 = vsub.s32 %v5593, %v5595
        %v5597 = vrot.slane %v5589, %v5596
        %v5599 = vunpack.c.l.s4 1983009808
        %v5600 = vunpack.c.0.s8 %v5599
        %v5601 = vlaneseq
        %v5602 = vshrl.u32 %v5601, 7
        %v5603 = vsub.s32 %v5600, %v5602
        %v5604 = vrot.slane %v5590, %v5603
        %v5605 = vcombine.low %v5597, %v5604
        %v5606 = vcombine.low %v2419, %v2421
        %v5607 = vcombine.low %v2490, %v2492
        %v5609 = vunpack.c.l.s4 1983009808
        %v5610 = vunpack.c.0.s8 %v5609
        %v5611 = vlaneseq
        %v5612 = vshrl.u32 %v5611, 7
        %v5613 = vsub.s32 %v5610, %v5612
        %v5614 = vrot.slane %v5606, %v5613
        %v5616 = vunpack.c.l.s4 1983009808
        %v5617 = vunpack.c.0.s8 %v5616
        %v5618 = vlaneseq
        %v5619 = vshrl.u32 %v5618, 7
        %v5620 = vsub.s32 %v5617, %v5619
        %v5621 = vrot.slane %v5607, %v5620
        %v5622 = vcombine.low %v5614, %v5621
        %v5623 = vcombine.low %v2561, %v2563
        %v5624 = vcombine.low %v2632, %v2634
        %v5626 = vunpack.c.l.s4 1983009808
        %v5627 = vunpack.c.0.s8 %v5626
        %v5628 = vlaneseq
        %v5629 = vshrl.u32 %v5628, 7
        %v5630 = vsub.s32 %v5627, %v5629
        %v5631 = vrot.slane %v5623, %v5630
        %v5633 = vunpack.c.l.s4 1983009808
        %v5634 = vunpack.c.0.s8 %v5633
        %v5635 = vlaneseq
        %v5636 = vshrl.u32 %v5635, 7
        %v5637 = vsub.s32 %v5634, %v5636
        %v5638 = vrot.slane %v5624, %v5637
        %v5639 = vcombine.low %v5631, %v5638
        %v5640 = vcombine.low %v2703, %v2705
        %v5641 = vcombine.low %v2774, %v2776
        %v5643 = vunpack.c.l.s4 1983009808
        %v5644 = vunpack.c.0.s8 %v5643
        %v5645 = vlaneseq
        %v5646 = vshrl.u32 %v5645, 7
        %v5647 = vsub.s32 %v5644, %v5646
        %v5648 = vrot.slane %v5640, %v5647
        %v5650 = vunpack.c.l.s4 1983009808
        %v5651 = vunpack.c.0.s8 %v5650
        %v5652 = vlaneseq
        %v5653 = vshrl.u32 %v5652, 7
        %v5654 = vsub.s32 %v5651, %v5653
        %v5655 = vrot.slane %v5641, %v5654
        %v5656 = vcombine.low %v5648, %v5655
        %v5657 = vcombine.low %v2845, %v2847
        %v5658 = vcombine.low %v2916, %v2918
        %v5660 = vunpack.c.l.s4 1983009808
        %v5661 = vunpack.c.0.s8 %v5660
        %v5662 = vlaneseq
        %v5663 = vshrl.u32 %v5662, 7
        %v5664 = vsub.s32 %v5661, %v5663
        %v5665 = vrot.slane %v5657, %v5664
        %v5667 = vunpack.c.l.s4 1983009808
        %v5668 = vunpack.c.0.s8 %v5667
        %v5669 = vlaneseq
        %v5670 = vshrl.u32 %v5669, 7
        %v5671 = vsub.s32 %v5668, %v5670
        %v5672 = vrot.slane %v5658, %v5671
        %v5673 = vcombine.low %v5665, %v5672
        %v5674 = vcombine.low %v2987, %v2989
        %v5675 = vcombine.low %v3058, %v3060
        %v5677 = vunpack.c.l.s4 1983009808
        %v5678 = vunpack.c.0.s8 %v5677
        %v5679 = vlaneseq
        %v5680 = vshrl.u32 %v5679, 7
        %v5681 = vsub.s32 %v5678, %v5680
        %v5682 = vrot.slane %v5674, %v5681
        %v5684 = vunpack.c.l.s4 1983009808
        %v5685 = vunpack.c.0.s8 %v5684
        %v5686 = vlaneseq
        %v5687 = vshrl.u32 %v5686, 7
        %v5688 = vsub.s32 %v5685, %v5687
        %v5689 = vrot.slane %v5675, %v5688
        %v5690 = vcombine.low %v5682, %v5689
        %v5691 = vcombine.low %v3129, %v3131
        %v5692 = vcombine.low %v3200, %v3202
        %v5694 = vunpack.c.l.s4 1983009808
        %v5695 = vunpack.c.0.s8 %v5694
        %v5696 = vlaneseq
        %v5697 = vshrl.u32 %v5696, 7
        %v5698 = vsub.s32 %v5695, %v5697
        %v5699 = vrot.slane %v5691, %v5698
        %v5701 = vunpack.c.l.s4 1983009808
        %v5702 = vunpack.c.0.s8 %v5701
        %v5703 = vlaneseq
        %v5704 = vshrl.u32 %v5703, 7
        %v5705 = vsub.s32 %v5702, %v5704
        %v5706 = vrot.slane %v5692, %v5705
        %v5707 = vcombine.low %v5699, %v5706
        %v5708 = vcombine.low %v3271, %v3273
        %v5709 = vcombine.low %v3342, %v3344
        %v5711 = vunpack.c.l.s4 1983009808
        %v5712 = vunpack.c.0.s8 %v5711
        %v5713 = vlaneseq
        %v5714 = vshrl.u32 %v5713, 7
        %v5715 = vsub.s32 %v5712, %v5714
        %v5716 = vrot.slane %v5708, %v5715
        %v5718 = vunpack.c.l.s4 1983009808
        %v5719 = vunpack.c.0.s8 %v5718
        %v5720 = vlaneseq
        %v5721 = vshrl.u32 %v5720, 7
        %v5722 = vsub.s32 %v5719, %v5721
        %v5723 = vrot.slane %v5709, %v5722
        %v5724 = vcombine.low %v5716, %v5723
        %v5725 = vcombine.low %v3413, %v3415
        %v5726 = vcombine.low %v3484, %v3486
        %v5728 = vunpack.c.l.s4 1983009808
        %v5729 = vunpack.c.0.s8 %v5728
        %v5730 = vlaneseq
        %v5731 = vshrl.u32 %v5730, 7
        %v5732 = vsub.s32 %v5729, %v5731
        %v5733 = vrot.slane %v5725, %v5732
        %v5735 = vunpack.c.l.s4 1983009808
        %v5736 = vunpack.c.0.s8 %v5735
        %v5737 = vlaneseq
        %v5738 = vshrl.u32 %v5737, 7
        %v5739 = vsub.s32 %v5736, %v5738
        %v5740 = vrot.slane %v5726, %v5739
        %v5741 = vcombine.low %v5733, %v5740
        %v5742 = vcombine.low %v3555, %v3557
        %v5743 = vcombine.low %v3626, %v3628
        %v5745 = vunpack.c.l.s4 1983009808
        %v5746 = vunpack.c.0.s8 %v5745
        %v5747 = vlaneseq
        %v5748 = vshrl.u32 %v5747, 7
        %v5749 = vsub.s32 %v5746, %v5748
        %v5750 = vrot.slane %v5742, %v5749
        %v5752 = vunpack.c.l.s4 1983009808
        %v5753 = vunpack.c.0.s8 %v5752
        %v5754 = vlaneseq
        %v5755 = vshrl.u32 %v5754, 7
        %v5756 = vsub.s32 %v5753, %v5755
        %v5757 = vrot.slane %v5743, %v5756
        %v5758 = vcombine.low %v5750, %v5757
        %v5759 = vcombine.low %v3697, %v3699
        %v5760 = vcombine.low %v3768, %v3770
        %v5762 = vunpack.c.l.s4 1983009808
        %v5763 = vunpack.c.0.s8 %v5762
        %v5764 = vlaneseq
        %v5765 = vshrl.u32 %v5764, 7
        %v5766 = vsub.s32 %v5763, %v5765
        %v5767 = vrot.slane %v5759, %v5766
        %v5769 = vunpack.c.l.s4 1983009808
        %v5770 = vunpack.c.0.s8 %v5769
        %v5771 = vlaneseq
        %v5772 = vshrl.u32 %v5771, 7
        %v5773 = vsub.s32 %v5770, %v5772
        %v5774 = vrot.slane %v5760, %v5773
        %v5775 = vcombine.low %v5767, %v5774
        %v5776 = vcombine.low %v3839, %v3841
        %v5777 = vcombine.low %v3910, %v3912
        %v5779 = vunpack.c.l.s4 1983009808
        %v5780 = vunpack.c.0.s8 %v5779
        %v5781 = vlaneseq
        %v5782 = vshrl.u32 %v5781, 7
        %v5783 = vsub.s32 %v5780, %v5782
        %v5784 = vrot.slane %v5776, %v5783
        %v5786 = vunpack.c.l.s4 1983009808
        %v5787 = vunpack.c.0.s8 %v5786
        %v5788 = vlaneseq
        %v5789 = vshrl.u32 %v5788, 7
        %v5790 = vsub.s32 %v5787, %v5789
        %v5791 = vrot.slane %v5777, %v5790
        %v5792 = vcombine.low %v5784, %v5791
        %v5793 = vcombine.low %v3981, %v3983
        %v5794 = vcombine.low %v4052, %v4054
        %v5796 = vunpack.c.l.s4 1983009808
        %v5797 = vunpack.c.0.s8 %v5796
        %v5798 = vlaneseq
        %v5799 = vshrl.u32 %v5798, 7
        %v5800 = vsub.s32 %v5797, %v5799
        %v5801 = vrot.slane %v5793, %v5800
        %v5803 = vunpack.c.l.s4 1983009808
        %v5804 = vunpack.c.0.s8 %v5803
        %v5805 = vlaneseq
        %v5806 = vshrl.u32 %v5805, 7
        %v5807 = vsub.s32 %v5804, %v5806
        %v5808 = vrot.slane %v5794, %v5807
        %v5809 = vcombine.low %v5801, %v5808
        %v5810 = vcombine.low %v4123, %v4125
        %v5811 = vcombine.low %v4194, %v4196
        %v5813 = vunpack.c.l.s4 1983009808
        %v5814 = vunpack.c.0.s8 %v5813
        %v5815 = vlaneseq
        %v5816 = vshrl.u32 %v5815, 7
        %v5817 = vsub.s32 %v5814, %v5816
        %v5818 = vrot.slane %v5810, %v5817
        %v5820 = vunpack.c.l.s4 1983009808
        %v5821 = vunpack.c.0.s8 %v5820
        %v5822 = vlaneseq
        %v5823 = vshrl.u32 %v5822, 7
        %v5824 = vsub.s32 %v5821, %v5823
        %v5825 = vrot.slane %v5811, %v5824
        %v5826 = vcombine.low %v5818, %v5825
        %v5827 = vcombine.low %v4265, %v4267
        %v5828 = vcombine.low %v4336, %v4338
        %v5830 = vunpack.c.l.s4 1983009808
        %v5831 = vunpack.c.0.s8 %v5830
        %v5832 = vlaneseq
        %v5833 = vshrl.u32 %v5832, 7
        %v5834 = vsub.s32 %v5831, %v5833
        %v5835 = vrot.slane %v5827, %v5834
        %v5837 = vunpack.c.l.s4 1983009808
        %v5838 = vunpack.c.0.s8 %v5837
        %v5839 = vlaneseq
        %v5840 = vshrl.u32 %v5839, 7
        %v5841 = vsub.s32 %v5838, %v5840
        %v5842 = vrot.slane %v5828, %v5841
        %v5843 = vcombine.low %v5835, %v5842
        %v5844 = vcombine.low %v4407, %v4409
        %v5845 = vcombine.low %v4478, %v4480
        %v5847 = vunpack.c.l.s4 1983009808
        %v5848 = vunpack.c.0.s8 %v5847
        %v5849 = vlaneseq
        %v5850 = vshrl.u32 %v5849, 7
        %v5851 = vsub.s32 %v5848, %v5850
        %v5852 = vrot.slane %v5844, %v5851
        %v5854 = vunpack.c.l.s4 1983009808
        %v5855 = vunpack.c.0.s8 %v5854
        %v5856 = vlaneseq
        %v5857 = vshrl.u32 %v5856, 7
        %v5858 = vsub.s32 %v5855, %v5857
        %v5859 = vrot.slane %v5845, %v5858
        %v5860 = vcombine.low %v5852, %v5859
        %v5861 = vcombine.low %v4549, %v4551
        %v5862 = vcombine.low %v4620, %v4622
        %v5864 = vunpack.c.l.s4 1983009808
        %v5865 = vunpack.c.0.s8 %v5864
        %v5866 = vlaneseq
        %v5867 = vshrl.u32 %v5866, 7
        %v5868 = vsub.s32 %v5865, %v5867
        %v5869 = vrot.slane %v5861, %v5868
        %v5871 = vunpack.c.l.s4 1983009808
        %v5872 = vunpack.c.0.s8 %v5871
        %v5873 = vlaneseq
        %v5874 = vshrl.u32 %v5873, 7
        %v5875 = vsub.s32 %v5872, %v5874
        %v5876 = vrot.slane %v5862, %v5875
        %v5877 = vcombine.low %v5869, %v5876
        %v5878 = vcombine.low %v4691, %v4693
        %v5879 = vcombine.low %v4762, %v4764
        %v5881 = vunpack.c.l.s4 1983009808
        %v5882 = vunpack.c.0.s8 %v5881
        %v5883 = vlaneseq
        %v5884 = vshrl.u32 %v5883, 7
        %v5885 = vsub.s32 %v5882, %v5884
        %v5886 = vrot.slane %v5878, %v5885
        %v5888 = vunpack.c.l.s4 1983009808
        %v5889 = vunpack.c.0.s8 %v5888
        %v5890 = vlaneseq
        %v5891 = vshrl.u32 %v5890, 7
        %v5892 = vsub.s32 %v5889, %v5891
        %v5893 = vrot.slane %v5879, %v5892
        %v5894 = vcombine.low %v5886, %v5893
        %v5895 = vcombine.low %v4833, %v4835
        %v5896 = vcombine.low %v4904, %v4906
        %v5898 = vunpack.c.l.s4 1983009808
        %v5899 = vunpack.c.0.s8 %v5898
        %v5900 = vlaneseq
        %v5901 = vshrl.u32 %v5900, 7
        %v5902 = vsub.s32 %v5899, %v5901
        %v5903 = vrot.slane %v5895, %v5902
        %v5905 = vunpack.c.l.s4 1983009808
        %v5906 = vunpack.c.0.s8 %v5905
        %v5907 = vlaneseq
        %v5908 = vshrl.u32 %v5907, 7
        %v5909 = vsub.s32 %v5906, %v5908
        %v5910 = vrot.slane %v5896, %v5909
        %v5911 = vcombine.low %v5903, %v5910
        %v5912 = vcombine.low %v4975, %v4977
        %v5913 = vcombine.low %v5046, %v5048
        %v5915 = vunpack.c.l.s4 1983009808
        %v5916 = vunpack.c.0.s8 %v5915
        %v5917 = vlaneseq
        %v5918 = vshrl.u32 %v5917, 7
        %v5919 = vsub.s32 %v5916, %v5918
        %v5920 = vrot.slane %v5912, %v5919
        %v5922 = vunpack.c.l.s4 1983009808
        %v5923 = vunpack.c.0.s8 %v5922
        %v5924 = vlaneseq
        %v5925 = vshrl.u32 %v5924, 7
        %v5926 = vsub.s32 %v5923, %v5925
        %v5927 = vrot.slane %v5913, %v5926
        %v5928 = vcombine.low %v5920, %v5927
        %v5929 = vcombine.low %v5117, %v5119
        %v5930 = vcombine.low %v5188, %v5190
        %v5932 = vunpack.c.l.s4 1983009808
        %v5933 = vunpack.c.0.s8 %v5932
        %v5934 = vlaneseq
        %v5935 = vshrl.u32 %v5934, 7
        %v5936 = vsub.s32 %v5933, %v5935
        %v5937 = vrot.slane %v5929, %v5936
        %v5939 = vunpack.c.l.s4 1983009808
        %v5940 = vunpack.c.0.s8 %v5939
        %v5941 = vlaneseq
        %v5942 = vshrl.u32 %v5941, 7
        %v5943 = vsub.s32 %v5940, %v5942
        %v5944 = vrot.slane %v5930, %v5943
        %v5945 = vcombine.low %v5937, %v5944
        %v5946 = vcombine.low %v5259, %v5261
        %v5947 = vcombine.low %v5330, %v5332
        %v5949 = vunpack.c.l.s4 1983009808
        %v5950 = vunpack.c.0.s8 %v5949
        %v5951 = vlaneseq
        %v5952 = vshrl.u32 %v5951, 7
        %v5953 = vsub.s32 %v5950, %v5952
        %v5954 = vrot.slane %v5946, %v5953
        %v5956 = vunpack.c.l.s4 1983009808
        %v5957 = vunpack.c.0.s8 %v5956
        %v5958 = vlaneseq
        %v5959 = vshrl.u32 %v5958, 7
        %v5960 = vsub.s32 %v5957, %v5959
        %v5961 = vrot.slane %v5947, %v5960
        %v5962 = vcombine.low %v5954, %v5961
        %v5963 = vcombine.low %v5401, %v5403
        %v5964 = vcombine.low %v5472, %v5474
        %v5966 = vunpack.c.l.s4 1983009808
        %v5967 = vunpack.c.0.s8 %v5966
        %v5968 = vlaneseq
        %v5969 = vshrl.u32 %v5968, 7
        %v5970 = vsub.s32 %v5967, %v5969
        %v5971 = vrot.slane %v5963, %v5970
        %v5973 = vunpack.c.l.s4 1983009808
        %v5974 = vunpack.c.0.s8 %v5973
        %v5975 = vlaneseq
        %v5976 = vshrl.u32 %v5975, 7
        %v5977 = vsub.s32 %v5974, %v5976
        %v5978 = vrot.slane %v5964, %v5977
        %v5979 = vcombine.low %v5971, %v5978
        %6004 = vst [vmem:[%s317] sm:$0xff] %v5588
        %6005 = vst [vmem:[%s317 + $0x8] sm:$0xff] %v5605
        %6006 = vst [vmem:[%s317 + $0x10] sm:$0xff] %v5622
        %6007 = vst [vmem:[%s317 + $0x18] sm:$0xff] %v5639
        %6008 = vst [vmem:[%s317 + $0x20] sm:$0xff] %v5656
        %6009 = vst [vmem:[%s317 + $0x28] sm:$0xff] %v5673
        %6010 = vst [vmem:[%s317 + $0x30] sm:$0xff] %v5690
        %6011 = vst [vmem:[%s317 + $0x38] sm:$0xff] %v5707
        %6012 = vst [vmem:[%s317 + $0x40] sm:$0xff] %v5724
        %6013 = vst [vmem:[%s317 + $0x48] sm:$0xff] %v5741
        %6014 = vst [vmem:[%s317 + $0x50] sm:$0xff] %v5758
        %6015 = vst [vmem:[%s317 + $0x58] sm:$0xff] %v5775
        %6016 = vst [vmem:[%s317 + $0x60] sm:$0xff] %v5792
        %6017 = vst [vmem:[%s317 + $0x68] sm:$0xff] %v5809
        %6018 = vst [vmem:[%s317 + $0x70] sm:$0xff] %v5826
        %6019 = vst [vmem:[%s317 + $0x78] sm:$0xff] %v5843
        %6020 = vst [vmem:[%s317 + $0x80] sm:$0xff] %v5860
        %6021 = vst [vmem:[%s317 + $0x88] sm:$0xff] %v5877
        %6022 = vst [vmem:[%s317 + $0x90] sm:$0xff] %v5894
        %6023 = vst [vmem:[%s317 + $0x98] sm:$0xff] %v5911
        %6024 = vst [vmem:[%s317 + $0xa0] sm:$0xff] %v5928
        %6025 = vst [vmem:[%s317 + $0xa8] sm:$0xff] %v5945
        %6026 = vst [vmem:[%s317 + $0xb0] sm:$0xff] %v5962
        %6027 = vst [vmem:[%s317 + $0xb8] sm:$0xff] %v5979
        %s6028 = sand.u32 %s147, 1
        %s6029 = scalar_lea.sflag [#allocation4], %s6028
        %s6030 = sand.u32 %s147, 1
        %s6031 = smul.addr %s6030, 192
        %s6032 = scalar_lea.vmem [#allocation11], %s6031
        // Predicated region
        $region61: #{tpu_custom_call.1} parent=39 // pred_check
          %p6033 = pneg %p157
        $region62: #{tpu_custom_call.1} parent=39 // pred_check_branch
          %6035 = sbr.rel (%p6033) target = $region64
        $region63: #{tpu_custom_call.1} parent=39 // pred_region
          %s6036 = smul.u32 96, %s24
          %s6038 = ssub.s32 3072, 3072
          %6039 = vsyncadd %s6029, %s6038
          %s6040 = smul.addr %s6036, 32
          %s6041 = scalar_lea.hbm %s5, %s6040
          %s6043 = sshll.u32 %s6032, 4
          %s6044 = int_to_ptr.vmem [resolvable:$true] %s6043
          %6046 = dma.vmem_to_hbm [thread:$0]  %s6044, 3072, %s6041, %s6029
        $region64: #{tpu_custom_call.1} parent=39 // pred_fallthru
          _
      $region40: #{tpu_custom_call.1} parent=5 // pred_fallthru
        _
      %p6047 = scmp.le.s32.totalorder 2, %s19
      // Predicated region
      $region65: #{tpu_custom_call.1} parent=5 // pred_check
        %p6048 = pneg %p6047
      $region66: #{tpu_custom_call.1} parent=5 // pred_check_branch
        %6050 = sbr.rel (%p6048) target = $region68
      $region67: #{tpu_custom_call.1} parent=5 // pred_region
        %s6051 = ssub.s32 %s19, 2
        // Predicated region
        $region69: #{tpu_custom_call.1} parent=67 // pred_check
          %p6052 = pneg %p163
        $region70: #{tpu_custom_call.1} parent=67 // pred_check_branch
          %6054 = sbr.rel (%p6052) target = $region72
        $region71: #{tpu_custom_call.1} parent=67 // pred_region
          %s6055 = sand.u32 %s148, 1
          %s6056 = scalar_lea.sflag [#allocation4], %s6055
          %s6057 = sand.u32 %s148, 1
          %s6058 = smul.addr %s6057, 192
          %s6059 = scalar_lea.vmem [#allocation11], %s6058
          %6060 = dma.done %s6056, 3072
        $region72: #{tpu_custom_call.1} parent=67 // pred_fallthru
          _
      $region68: #{tpu_custom_call.1} parent=5 // pred_fallthru
        _
    $region6: #{tpu_custom_call.1} parent=1 // loop_footer
      %s23 = sadd.s32 1, %s19
    $region7: #{tpu_custom_call.1} parent=1 // loop_footer_branch
      %18 = sbr.rel target = $region3
    $region8: #{tpu_custom_call.1} parent=1 // loop_exit
      _
    %6061 = vsyncpa [#allocation3], 1
    %s6062 = scalar_lea.sflag [#allocation3], 1
    %6063 = vsyncpa %s6062, 1
    %6064 = vsyncpa [#allocation6], 1
    %6065 = vsyncpa [#allocation9], 1
    %s6066 = scalar_lea.sflag [#allocation9], 1
    %6067 = vsyncpa %s6066, 1
    %6068 = vsyncpa [#allocation4], 1
    %s6069 = scalar_lea.sflag [#allocation4], 1
    %6070 = vsyncpa %s6069, 1

</llo_original>
